<compile_context>
chip_gen: v6e
topology: v6e:2x2x1
jax: 0.10.0
libtpu: 0.0.40
codegen_flags: <defaults>
</compile_context>

<pallas_src>
import functools

import jax
import jax.numpy as jnp
from jax import lax
from jax.experimental import pallas as pl
from jax.experimental.pallas import tpu as pltpu

EPS = 1e-6  # GroupNorm eps from DEFAULT_NORMALIZER


# --------------------------------------------------------------------------
# Fused ResidualBlock kernel (one image per grid step; everything in VMEM)
# --------------------------------------------------------------------------
def _residual_block_kernel(x_ref, t_ref, g1_ref, b1_ref, w1_ref, c1b_ref,
                           fcw_ref, fcb_ref, g2_ref, b2_ref, w2_ref, c2b_ref,
                           o_ref, pad_ref, col_ref, *, H, W, C, G):
    HW = H * W
    cg = C // G
    cnt = float(HW * cg)

    def group_reduce_bcast(vec_c):
        # per-channel sums (C,) -> per-group mean -> broadcast back to (C,)
        g = vec_c.reshape(G, cg).sum(axis=1) / cnt               # (G,)
        return jnp.broadcast_to(g[:, None], (G, cg)).reshape(C)  # (C,)

    def gn_film_silu(h, gamma, beta, film_scale=None, film_shift=None):
        # Two-pass GroupNorm; affine + FiLM folded into one per-channel FMA,
        # followed by SiLU.  h: (HW, C) f32; gamma/beta/film_*: (1, C).
        mean_c = group_reduce_bcast(jnp.sum(h, axis=0))
        d = h - mean_c[None, :]
        var_c = group_reduce_bcast(jnp.sum(d * d, axis=0))
        inv_c = lax.rsqrt(var_c + EPS)
        a = gamma * inv_c[None, :]
        b = beta
        if film_scale is not None:            # static (trace-time) branch
            a = a * film_scale
            b = b * film_scale + film_shift
        y = d * a + b
        return y * jax.nn.sigmoid(y)

    def conv3x3(h, w_ref, bias_ref):
        # 3x3 "same" conv as a single im2col matmul.
        # pad_ref halo is already zero; only the interior is (re)written.
        pad_ref[1:H + 1, 1:W + 1, :] = h.reshape(H, W, C)
        for k in range(9):                      # build im2col buffer once
            dy, dx = k // 3, k % 3
            col_ref[:, k * C:(k + 1) * C] = (
                pad_ref[dy:dy + H, dx:dx + W, :].reshape(HW, C))
        out = jnp.dot(col_ref[...].astype(jnp.bfloat16), w_ref[...],
                      preferred_element_type=jnp.float32)        # (HW, Cout)
        return out + bias_ref[...]

    # zero the halo scratch once per image (interior is overwritten per conv)
    pad_ref[...] = jnp.zeros(pad_ref.shape, pad_ref.dtype)

    x = x_ref[...].reshape(HW, C)                                # (HW, C) f32

    # FiLM params: emb = fc(SiLU(t_emb)); shift, scale = chunk(2, dim=1)
    t = t_ref[...].reshape(1, -1)                                # (1, E)
    emb = jnp.dot((t * jax.nn.sigmoid(t)).astype(jnp.bfloat16), fcw_ref[...],
                  preferred_element_type=jnp.float32) + fcb_ref[...]
    shift = emb[:, :C]                                           # (1, C)
    scale = emb[:, C:]                                           # (1, C)

    h = gn_film_silu(x, g1_ref[...], b1_ref[...])                # norm1 + act1
    h = conv3x3(h, w1_ref, c1b_ref)                              # conv1
    h = gn_film_silu(h, g2_ref[...], b2_ref[...],                # norm2 + FiLM
                     film_scale=1.0 + scale, film_shift=shift)   # + act2
    h = conv3x3(h, w2_ref, c2b_ref)                              # conv2 (drop=id)

    o_ref[...] = h.reshape(1, H, W, C) + x_ref[...]              # + identity skip


# --------------------------------------------------------------------------
# ResidualBlock.forward wrapper (NCHW in / NCHW out)
# --------------------------------------------------------------------------
@functools.partial(jax.jit, static_argnames=("num_groups",))
def residual_block_forward(params, x_nchw, t_emb, num_groups=32):
    x = jnp.transpose(x_nchw, (0, 2, 3, 1))          # NCHW -> NHWC (C on lanes)
    N, H, W, C = x.shape
    E = t_emb.shape[-1]
    Cout = params["conv1_w"].shape[-1]
    assert C % num_groups == 0, "GroupNorm requires C % num_groups == 0"
    assert Cout == C, "identity-skip config requires in_channels == out_channels"
    # TODO(synk): resampling (Upsample/AvgPool2d) and the 1x1-conv skip for
    # in_channels != out_channels are not implemented (this config uses
    # Identity for both, as does drop_rate=0.0 dropout).

    # im2col weight layout [(dy, dx, cin) -> row]; bf16 halves weight DMA and
    # doubles MXU rate (f32 accumulation is requested at the dot).
    w1 = params["conv1_w"].reshape(9 * C, Cout).astype(jnp.bfloat16)
    w2 = params["conv2_w"].reshape(9 * Cout, Cout).astype(jnp.bfloat16)
    fcw = params["fc_w"].astype(jnp.bfloat16)

    kern = functools.partial(_residual_block_kernel, H=H, W=W, C=C, G=num_groups)
    out = pl.pallas_call(
        kern,
        out_shape=jax.ShapeDtypeStruct((N, H, W, C), x.dtype),
        grid=(N,),
        in_specs=[
            pl.BlockSpec((1, H, W, C), lambda n: (n, 0, 0, 0)),   # x (also skip)
            pl.BlockSpec((1, 1, E), lambda n: (n, 0, 0)),         # t_emb row
            pl.BlockSpec((1, C), lambda n: (0, 0)),               # norm1 gamma
            pl.BlockSpec((1, C), lambda n: (0, 0)),               # norm1 beta
            pl.BlockSpec((9 * C, C), lambda n: (0, 0)),           # conv1 w (im2col)
            pl.BlockSpec((1, C), lambda n: (0, 0)),               # conv1 b
            pl.BlockSpec((E, 2 * C), lambda n: (0, 0)),           # fc w
            pl.BlockSpec((1, 2 * C), lambda n: (0, 0)),           # fc b
            pl.BlockSpec((1, C), lambda n: (0, 0)),               # norm2 gamma
            pl.BlockSpec((1, C), lambda n: (0, 0)),               # norm2 beta
            pl.BlockSpec((9 * C, C), lambda n: (0, 0)),           # conv2 w (im2col)
            pl.BlockSpec((1, C), lambda n: (0, 0)),               # conv2 b
        ],
        out_specs=pl.BlockSpec((1, H, W, C), lambda n: (n, 0, 0, 0)),
        scratch_shapes=[
            pltpu.VMEM((H + 2, W + 2, C), jnp.float32),   # zero-halo image
            pltpu.VMEM((H * W, 9 * C), jnp.float32),      # im2col buffer
        ],
        compiler_params=pltpu.CompilerParams(
            dimension_semantics=("parallel",)),           # batch across TCs (v7x)
    )(x, t_emb.reshape(N, 1, E),
      params["norm1_g"].reshape(1, C), params["norm1_b"].reshape(1, C),
      w1, params["conv1_b"].reshape(1, C),
      fcw, params["fc_b"].reshape(1, 2 * C),
      params["norm2_g"].reshape(1, C), params["norm2_b"].reshape(1, C),
      w2, params["conv2_b"].reshape(1, C))
    return jnp.transpose(out, (0, 3, 1, 2))               # NHWC -> NCHW


# --------------------------------------------------------------------------
# Pure-JAX reference (correctness check; matmul/conv inputs cast to bf16 with
# f32 accumulation to mirror the kernel's MXU precision choice)
# --------------------------------------------------------------------------
def reference_forward(params, x_nchw, t_emb, num_groups=32):
    def silu(v):
        return v * jax.nn.sigmoid(v)

    def gn(x, g, b):
        N, C, H, W = x.shape
        xg = x.reshape(N, num_groups, C // num_groups, H, W)
        mean = xg.mean(axis=(2, 3, 4), keepdims=True)
        var = xg.var(axis=(2, 3, 4), keepdims=True)
        xn = ((xg - mean) * lax.rsqrt(var + EPS)).reshape(N, C, H, W)
        return xn * g[None, :, None, None] + b[None, :, None, None]

    def conv3(x, w_hwio, b):
        y = lax.conv_general_dilated(
            x.astype(jnp.bfloat16), w_hwio.astype(jnp.bfloat16),
            window_strides=(1, 1), padding="SAME",
            dimension_numbers=("NCHW", "HWIO", "NCHW"),
            preferred_element_type=jnp.float32)
        return y + b[None, :, None, None]

    Cout = params["conv1_w"].shape[-1]
    skip = x_nchw
    h = conv3(silu(gn(x_nchw, params["norm1_g"], params["norm1_b"])),
              params["conv1_w"], params["conv1_b"])
    emb = jnp.dot(silu(t_emb).astype(jnp.bfloat16),
                  params["fc_w"].astype(jnp.bfloat16),
                  preferred_element_type=jnp.float32) + params["fc_b"]
    shift = emb[:, :Cout][:, :, None, None]
    scale = emb[:, Cout:][:, :, None, None]
    h = (1.0 + scale) * gn(h, params["norm2_g"], params["norm2_b"]) + shift
    h = conv3(silu(h), params["conv2_w"], params["conv2_b"])
    return h + skip


if __name__ == "__main__":
    # in_channels = out_channels = 32 (GroupNorm default num_groups=32 requires
    # channels % 32 == 0), embed_dim = 64, batch = 2, spatial = 16.
    N, C, H, W, E = 2, 32, 16, 16, 64
    key = jax.random.PRNGKey(0)
    ks = jax.random.split(key, 12)

    params = {
        "norm1_g": jnp.ones((C,), jnp.float32) + 0.1 * jax.random.normal(ks[0], (C,)),
        "norm1_b": 0.1 * jax.random.normal(ks[1], (C,)),
        "conv1_w": 0.1 * jax.random.normal(ks[2], (3, 3, C, C)),   # HWIO
        "conv1_b": 0.1 * jax.random.normal(ks[3], (C,)),
        "fc_w": 0.1 * jax.random.normal(ks[4], (E, 2 * C)),
        "fc_b": 0.1 * jax.random.normal(ks[5], (2 * C,)),
        "norm2_g": jnp.ones((C,), jnp.float32) + 0.1 * jax.random.normal(ks[6], (C,)),
        "norm2_b": 0.1 * jax.random.normal(ks[7], (C,)),
        # NOTE: the module zero-inits conv2 (init_scale=0.0); small random
        # weights are used instead so the second conv path is exercised.
        "conv2_w": 0.1 * jax.random.normal(ks[8], (3, 3, C, C)),
        "conv2_b": 0.1 * jax.random.normal(ks[9], (C,)),
    }
    x = jax.random.normal(ks[10], (N, C, H, W), jnp.float32)
    t_emb = jax.random.normal(ks[11], (N, E), jnp.float32)

    out = jax.block_until_ready(residual_block_forward(params, x, t_emb))
    ref = jax.block_until_ready(reference_forward(params, x, t_emb))

    assert out.shape == (N, C, H, W), out.shape
    err = float(jnp.max(jnp.abs(out - ref)))
    if not (err < 3e-3):
        raise AssertionError(f"Pallas/reference mismatch: max abs err = {err}")
    print("KERNEL_OK")
</pallas_src>

<mosaic_0001>
module attributes {stable_mosaic.version = 11 : i64} {
  func.func @_residual_block_kernel(%arg0: i32, %arg1: memref<1x16x16x32xf32, #tpu.memory_space<vmem>>, %arg2: memref<1x1x64xf32, #tpu.memory_space<vmem>>, %arg3: memref<1x32xf32, #tpu.memory_space<vmem>>, %arg4: memref<1x32xf32, #tpu.memory_space<vmem>>, %arg5: memref<288x32xbf16, #tpu.memory_space<vmem>>, %arg6: memref<1x32xf32, #tpu.memory_space<vmem>>, %arg7: memref<64x64xbf16, #tpu.memory_space<vmem>>, %arg8: memref<1x64xf32, #tpu.memory_space<vmem>>, %arg9: memref<1x32xf32, #tpu.memory_space<vmem>>, %arg10: memref<1x32xf32, #tpu.memory_space<vmem>>, %arg11: memref<288x32xbf16, #tpu.memory_space<vmem>>, %arg12: memref<1x32xf32, #tpu.memory_space<vmem>>, %arg13: memref<1x16x16x32xf32, #tpu.memory_space<vmem>>, %arg14: memref<18x18x32xf32, #tpu.memory_space<vmem>>, %arg15: memref<256x288xf32, #tpu.memory_space<vmem>>) attributes {dimension_semantics = [#tpu.dimension_semantics<parallel>], iteration_bounds = array<i64: 2>, scalar_prefetch = 0 : i64, scratch_operands = 2 : i64, tpu.core_type = #tpu.core_type<tc>, window_params = [{transform_indices = @transform_0, window_bounds = array<i64: 1, 16, 16, 32>}, {transform_indices = @transform_1, window_bounds = array<i64: 1, 1, 64>}, {pipeline_mode = #tpu.pipeline_mode<synchronous>, transform_indices = @transform_2, window_bounds = array<i64: 1, 32>}, {pipeline_mode = #tpu.pipeline_mode<synchronous>, transform_indices = @transform_3, window_bounds = array<i64: 1, 32>}, {pipeline_mode = #tpu.pipeline_mode<synchronous>, transform_indices = @transform_4, window_bounds = array<i64: 288, 32>}, {pipeline_mode = #tpu.pipeline_mode<synchronous>, transform_indices = @transform_5, window_bounds = array<i64: 1, 32>}, {pipeline_mode = #tpu.pipeline_mode<synchronous>, transform_indices = @transform_6, window_bounds = array<i64: 64, 64>}, {pipeline_mode = #tpu.pipeline_mode<synchronous>, transform_indices = @transform_7, window_bounds = array<i64: 1, 64>}, {pipeline_mode = #tpu.pipeline_mode<synchronous>, transform_indices = @transform_8, window_bounds = array<i64: 1, 32>}, {pipeline_mode = #tpu.pipeline_mode<synchronous>, transform_indices = @transform_9, window_bounds = array<i64: 1, 32>}, {pipeline_mode = #tpu.pipeline_mode<synchronous>, transform_indices = @transform_10, window_bounds = array<i64: 288, 32>}, {pipeline_mode = #tpu.pipeline_mode<synchronous>, transform_indices = @transform_11, window_bounds = array<i64: 1, 32>}, {transform_indices = @transform_12, window_bounds = array<i64: 1, 16, 16, 32>}]} {
    %cst = arith.constant 0.000000e+00 : f32
    %0 = vector.broadcast %cst : f32 to vector<18x18x32xf32>
    %c0 = arith.constant 0 : index
    %c0_0 = arith.constant 0 : index
    %c0_1 = arith.constant 0 : index
    %1 = vector.load %arg14[%c0, %c0_0, %c0_1] : memref<18x18x32xf32, #tpu.memory_space<vmem>>, vector<18x18x32xf32>
    tpu.vector_store %arg14[%c0, %c0_0, %c0_1], %0 {strides = array<i32>} : memref<18x18x32xf32, #tpu.memory_space<vmem>>, vector<18x18x32xf32>,
    %c0_2 = arith.constant 0 : index
    %c0_3 = arith.constant 0 : index
    %c0_4 = arith.constant 0 : index
    %c0_5 = arith.constant 0 : index
    %2 = vector.load %arg1[%c0_2, %c0_3, %c0_4, %c0_5] : memref<1x16x16x32xf32, #tpu.memory_space<vmem>>, vector<1x16x16x32xf32>
    %3 = vector.shape_cast %2 : vector<1x16x16x32xf32> to vector<256x32xf32>
    %c0_6 = arith.constant 0 : index
    %c0_7 = arith.constant 0 : index
    %c0_8 = arith.constant 0 : index
    %4 = vector.load %arg2[%c0_6, %c0_7, %c0_8] : memref<1x1x64xf32, #tpu.memory_space<vmem>>, vector<1x1x64xf32>
    %5 = vector.shape_cast %4 : vector<1x1x64xf32> to vector<1x64xf32>
    %6 = arith.negf %5 : vector<1x64xf32>
    %7 = math.exp %6 : vector<1x64xf32>
    %cst_9 = arith.constant 1.000000e+00 : f32
    %8 = vector.broadcast %cst_9 : f32 to vector<1x64xf32>
    %9 = arith.addf %8, %7 : vector<1x64xf32>
    %10 = arith.divf %8, %9 : vector<1x64xf32>
    %11 = arith.mulf %5, %10 : vector<1x64xf32>
    %12 = arith.truncf %11 : vector<1x64xf32> to vector<1x64xbf16>
    %c0_10 = arith.constant 0 : index
    %c0_11 = arith.constant 0 : index
    %13 = vector.load %arg7[%c0_10, %c0_11] : memref<64x64xbf16, #tpu.memory_space<vmem>>, vector<64x64xbf16>
    %cst_12 = arith.constant dense<0.000000e+00> : vector<1x64xf32>
    %14 = tpu.matmul %12, %13, %cst_12 {dimension_numbers = #tpu.dot_dimension_numbers<[1], [0], [0], [1], [0, 0, 1, 1], [], []>} : vector<1x64xbf16>, vector<64x64xbf16>, vector<1x64xf32> -> vector<1x64xf32>
    %c0_13 = arith.constant 0 : index
    %c0_14 = arith.constant 0 : index
    %15 = vector.load %arg8[%c0_13, %c0_14] : memref<1x64xf32, #tpu.memory_space<vmem>>, vector<1x64xf32>
    %16 = arith.addf %14, %15 : vector<1x64xf32>
    %17 = vector.extract_strided_slice %16 {offsets = [0, 0], sizes = [1, 32], strides = [1, 1]} : vector<1x64xf32> to vector<1x32xf32>
    %18 = vector.extract_strided_slice %16 {offsets = [0, 32], sizes = [1, 32], strides = [1, 1]} : vector<1x64xf32> to vector<1x32xf32>
    %c0_15 = arith.constant 0 : index
    %c0_16 = arith.constant 0 : index
    %19 = vector.load %arg3[%c0_15, %c0_16] : memref<1x32xf32, #tpu.memory_space<vmem>>, vector<1x32xf32>
    %c0_17 = arith.constant 0 : index
    %c0_18 = arith.constant 0 : index
    %20 = vector.load %arg4[%c0_17, %c0_18] : memref<1x32xf32, #tpu.memory_space<vmem>>, vector<1x32xf32>
    %cst_19 = arith.constant dense<0.000000e+00> : vector<32xf32>
    %21 = vector.multi_reduction <add>, %3, %cst_19 [0] : vector<256x32xf32> to vector<32xf32>
    %22 = vector.shape_cast %21 : vector<32xf32> to vector<32x1xf32>
    %cst_20 = arith.constant dense<0.000000e+00> : vector<32xf32>
    %23 = vector.multi_reduction <add>, %22, %cst_20 [1] : vector<32x1xf32> to vector<32xf32>
    %cst_21 = arith.constant 2.560000e+02 : f32
    %24 = vector.broadcast %cst_21 : f32 to vector<32xf32>
    %25 = arith.divf %23, %24 : vector<32xf32>
    %26 = vector.shape_cast %25 : vector<32xf32> to vector<32x1xf32>
    %27 = vector.shape_cast %26 : vector<32x1xf32> to vector<32xf32>
    %28 = vector.shape_cast %27 : vector<32xf32> to vector<1x32xf32>
    %29 = vector.broadcast %28 : vector<1x32xf32> to vector<256x32xf32>
    %30 = arith.subf %3, %29 : vector<256x32xf32>
    %31 = arith.mulf %30, %30 : vector<256x32xf32>
    %cst_22 = arith.constant dense<0.000000e+00> : vector<32xf32>
    %32 = vector.multi_reduction <add>, %31, %cst_22 [0] : vector<256x32xf32> to vector<32xf32>
    %33 = vector.shape_cast %32 : vector<32xf32> to vector<32x1xf32>
    %cst_23 = arith.constant dense<0.000000e+00> : vector<32xf32>
    %34 = vector.multi_reduction <add>, %33, %cst_23 [1] : vector<32x1xf32> to vector<32xf32>
    %cst_24 = arith.constant 2.560000e+02 : f32
    %35 = vector.broadcast %cst_24 : f32 to vector<32xf32>
    %36 = arith.divf %34, %35 : vector<32xf32>
    %37 = vector.shape_cast %36 : vector<32xf32> to vector<32x1xf32>
    %38 = vector.shape_cast %37 : vector<32x1xf32> to vector<32xf32>
    %cst_25 = arith.constant 9.99999997E-7 : f32
    %39 = vector.broadcast %cst_25 : f32 to vector<32xf32>
    %40 = arith.addf %38, %39 : vector<32xf32>
    %41 = math.rsqrt %40 : vector<32xf32>
    %42 = vector.shape_cast %41 : vector<32xf32> to vector<1x32xf32>
    %43 = arith.mulf %19, %42 : vector<1x32xf32>
    %44 = vector.broadcast %43 : vector<1x32xf32> to vector<256x32xf32>
    %45 = arith.mulf %30, %44 : vector<256x32xf32>
    %46 = vector.broadcast %20 : vector<1x32xf32> to vector<256x32xf32>
    %47 = arith.addf %45, %46 : vector<256x32xf32>
    %48 = arith.negf %47 : vector<256x32xf32>
    %49 = math.exp %48 : vector<256x32xf32>
    %cst_26 = arith.constant 1.000000e+00 : f32
    %50 = vector.broadcast %cst_26 : f32 to vector<256x32xf32>
    %51 = arith.addf %50, %49 : vector<256x32xf32>
    %52 = arith.divf %50, %51 : vector<256x32xf32>
    %53 = arith.mulf %47, %52 : vector<256x32xf32>
    %54 = vector.shape_cast %53 : vector<256x32xf32> to vector<16x16x32xf32>
    %c1 = arith.constant 1 : index
    %c1_27 = arith.constant 1 : index
    %c0_28 = arith.constant 0 : index
    %55 = vector.load %arg14[%c1, %c1_27, %c0_28] : memref<18x18x32xf32, #tpu.memory_space<vmem>>, vector<16x16x32xf32>
    tpu.vector_store %arg14[%c1, %c1_27, %c0_28], %54 {strides = array<i32>} : memref<18x18x32xf32, #tpu.memory_space<vmem>>, vector<16x16x32xf32>,
    %c0_29 = arith.constant 0 : index
    %c0_30 = arith.constant 0 : index
    %c0_31 = arith.constant 0 : index
    %56 = vector.load %arg14[%c0_29, %c0_30, %c0_31] : memref<18x18x32xf32, #tpu.memory_space<vmem>>, vector<16x16x32xf32>
    %57 = vector.shape_cast %56 : vector<16x16x32xf32> to vector<256x32xf32>
    %c0_32 = arith.constant 0 : index
    %c0_33 = arith.constant 0 : index
    %58 = vector.load %arg15[%c0_32, %c0_33] : memref<256x288xf32, #tpu.memory_space<vmem>>, vector<256x32xf32>
    tpu.vector_store %arg15[%c0_32, %c0_33], %57 {strides = array<i32>} : memref<256x288xf32, #tpu.memory_space<vmem>>, vector<256x32xf32>,
    %c0_34 = arith.constant 0 : index
    %c1_35 = arith.constant 1 : index
    %c0_36 = arith.constant 0 : index
    %59 = vector.load %arg14[%c0_34, %c1_35, %c0_36] : memref<18x18x32xf32, #tpu.memory_space<vmem>>, vector<16x16x32xf32>
    %60 = vector.shape_cast %59 : vector<16x16x32xf32> to vector<256x32xf32>
    %c0_37 = arith.constant 0 : index
    %c32 = arith.constant 32 : index
    %61 = vector.load %arg15[%c0_37, %c32] : memref<256x288xf32, #tpu.memory_space<vmem>>, vector<256x32xf32>
    tpu.vector_store %arg15[%c0_37, %c32], %60 {strides = array<i32>} : memref<256x288xf32, #tpu.memory_space<vmem>>, vector<256x32xf32>,
    %c0_38 = arith.constant 0 : index
    %c2 = arith.constant 2 : index
    %c0_39 = arith.constant 0 : index
    %62 = vector.load %arg14[%c0_38, %c2, %c0_39] : memref<18x18x32xf32, #tpu.memory_space<vmem>>, vector<16x16x32xf32>
    %63 = vector.shape_cast %62 : vector<16x16x32xf32> to vector<256x32xf32>
    %c0_40 = arith.constant 0 : index
    %c64 = arith.constant 64 : index
    %64 = vector.load %arg15[%c0_40, %c64] : memref<256x288xf32, #tpu.memory_space<vmem>>, vector<256x32xf32>
    tpu.vector_store %arg15[%c0_40, %c64], %63 {strides = array<i32>} : memref<256x288xf32, #tpu.memory_space<vmem>>, vector<256x32xf32>,
    %c1_41 = arith.constant 1 : index
    %c0_42 = arith.constant 0 : index
    %c0_43 = arith.constant 0 : index
    %65 = vector.load %arg14[%c1_41, %c0_42, %c0_43] : memref<18x18x32xf32, #tpu.memory_space<vmem>>, vector<16x16x32xf32>
    %66 = vector.shape_cast %65 : vector<16x16x32xf32> to vector<256x32xf32>
    %c0_44 = arith.constant 0 : index
    %c96 = arith.constant 96 : index
    %67 = vector.load %arg15[%c0_44, %c96] : memref<256x288xf32, #tpu.memory_space<vmem>>, vector<256x32xf32>
    tpu.vector_store %arg15[%c0_44, %c96], %66 {strides = array<i32>} : memref<256x288xf32, #tpu.memory_space<vmem>>, vector<256x32xf32>,
    %c1_45 = arith.constant 1 : index
    %c1_46 = arith.constant 1 : index
    %c0_47 = arith.constant 0 : index
    %68 = vector.load %arg14[%c1_45, %c1_46, %c0_47] : memref<18x18x32xf32, #tpu.memory_space<vmem>>, vector<16x16x32xf32>
    %69 = vector.shape_cast %68 : vector<16x16x32xf32> to vector<256x32xf32>
    %c0_48 = arith.constant 0 : index
    %c128 = arith.constant 128 : index
    %70 = vector.load %arg15[%c0_48, %c128] : memref<256x288xf32, #tpu.memory_space<vmem>>, vector<256x32xf32>
    tpu.vector_store %arg15[%c0_48, %c128], %69 {strides = array<i32>} : memref<256x288xf32, #tpu.memory_space<vmem>>, vector<256x32xf32>,
    %c1_49 = arith.constant 1 : index
    %c2_50 = arith.constant 2 : index
    %c0_51 = arith.constant 0 : index
    %71 = vector.load %arg14[%c1_49, %c2_50, %c0_51] : memref<18x18x32xf32, #tpu.memory_space<vmem>>, vector<16x16x32xf32>
    %72 = vector.shape_cast %71 : vector<16x16x32xf32> to vector<256x32xf32>
    %c0_52 = arith.constant 0 : index
    %c160 = arith.constant 160 : index
    %73 = vector.load %arg15[%c0_52, %c160] : memref<256x288xf32, #tpu.memory_space<vmem>>, vector<256x32xf32>
    tpu.vector_store %arg15[%c0_52, %c160], %72 {strides = array<i32>} : memref<256x288xf32, #tpu.memory_space<vmem>>, vector<256x32xf32>,
    %c2_53 = arith.constant 2 : index
    %c0_54 = arith.constant 0 : index
    %c0_55 = arith.constant 0 : index
    %74 = vector.load %arg14[%c2_53, %c0_54, %c0_55] : memref<18x18x32xf32, #tpu.memory_space<vmem>>, vector<16x16x32xf32>
    %75 = vector.shape_cast %74 : vector<16x16x32xf32> to vector<256x32xf32>
    %c0_56 = arith.constant 0 : index
    %c192 = arith.constant 192 : index
    %76 = vector.load %arg15[%c0_56, %c192] : memref<256x288xf32, #tpu.memory_space<vmem>>, vector<256x32xf32>
    tpu.vector_store %arg15[%c0_56, %c192], %75 {strides = array<i32>} : memref<256x288xf32, #tpu.memory_space<vmem>>, vector<256x32xf32>,
    %c2_57 = arith.constant 2 : index
    %c1_58 = arith.constant 1 : index
    %c0_59 = arith.constant 0 : index
    %77 = vector.load %arg14[%c2_57, %c1_58, %c0_59] : memref<18x18x32xf32, #tpu.memory_space<vmem>>, vector<16x16x32xf32>
    %78 = vector.shape_cast %77 : vector<16x16x32xf32> to vector<256x32xf32>
    %c0_60 = arith.constant 0 : index
    %c224 = arith.constant 224 : index
    %79 = vector.load %arg15[%c0_60, %c224] : memref<256x288xf32, #tpu.memory_space<vmem>>, vector<256x32xf32>
    tpu.vector_store %arg15[%c0_60, %c224], %78 {strides = array<i32>} : memref<256x288xf32, #tpu.memory_space<vmem>>, vector<256x32xf32>,
    %c2_61 = arith.constant 2 : index
    %c2_62 = arith.constant 2 : index
    %c0_63 = arith.constant 0 : index
    %80 = vector.load %arg14[%c2_61, %c2_62, %c0_63] : memref<18x18x32xf32, #tpu.memory_space<vmem>>, vector<16x16x32xf32>
    %81 = vector.shape_cast %80 : vector<16x16x32xf32> to vector<256x32xf32>
    %c0_64 = arith.constant 0 : index
    %c256 = arith.constant 256 : index
    %82 = vector.load %arg15[%c0_64, %c256] : memref<256x288xf32, #tpu.memory_space<vmem>>, vector<256x32xf32>
    tpu.vector_store %arg15[%c0_64, %c256], %81 {strides = array<i32>} : memref<256x288xf32, #tpu.memory_space<vmem>>, vector<256x32xf32>,
    %c0_65 = arith.constant 0 : index
    %c0_66 = arith.constant 0 : index
    %83 = vector.load %arg15[%c0_65, %c0_66] : memref<256x288xf32, #tpu.memory_space<vmem>>, vector<256x288xf32>
    %84 = arith.truncf %83 : vector<256x288xf32> to vector<256x288xbf16>
    %c0_67 = arith.constant 0 : index
    %c0_68 = arith.constant 0 : index
    %85 = vector.load %arg5[%c0_67, %c0_68] : memref<288x32xbf16, #tpu.memory_space<vmem>>, vector<288x32xbf16>
    %cst_69 = arith.constant dense<0.000000e+00> : vector<256x32xf32>
    %86 = tpu.matmul %84, %85, %cst_69 {dimension_numbers = #tpu.dot_dimension_numbers<[1], [0], [0], [1], [0, 0, 1, 1], [], []>} : vector<256x288xbf16>, vector<288x32xbf16>, vector<256x32xf32> -> vector<256x32xf32>
    %c0_70 = arith.constant 0 : index
    %c0_71 = arith.constant 0 : index
    %87 = vector.load %arg6[%c0_70, %c0_71] : memref<1x32xf32, #tpu.memory_space<vmem>>, vector<1x32xf32>
    %88 = vector.broadcast %87 : vector<1x32xf32> to vector<256x32xf32>
    %89 = arith.addf %86, %88 : vector<256x32xf32>
    %c0_72 = arith.constant 0 : index
    %c0_73 = arith.constant 0 : index
    %90 = vector.load %arg9[%c0_72, %c0_73] : memref<1x32xf32, #tpu.memory_space<vmem>>, vector<1x32xf32>
    %c0_74 = arith.constant 0 : index
    %c0_75 = arith.constant 0 : index
    %91 = vector.load %arg10[%c0_74, %c0_75] : memref<1x32xf32, #tpu.memory_space<vmem>>, vector<1x32xf32>
    %cst_76 = arith.constant 1.000000e+00 : f32
    %92 = vector.broadcast %cst_76 : f32 to vector<1x32xf32>
    %93 = arith.addf %92, %18 : vector<1x32xf32>
    %cst_77 = arith.constant dense<0.000000e+00> : vector<32xf32>
    %94 = vector.multi_reduction <add>, %89, %cst_77 [0] : vector<256x32xf32> to vector<32xf32>
    %95 = vector.shape_cast %94 : vector<32xf32> to vector<32x1xf32>
    %cst_78 = arith.constant dense<0.000000e+00> : vector<32xf32>
    %96 = vector.multi_reduction <add>, %95, %cst_78 [1] : vector<32x1xf32> to vector<32xf32>
    %cst_79 = arith.constant 2.560000e+02 : f32
    %97 = vector.broadcast %cst_79 : f32 to vector<32xf32>
    %98 = arith.divf %96, %97 : vector<32xf32>
    %99 = vector.shape_cast %98 : vector<32xf32> to vector<32x1xf32>
    %100 = vector.shape_cast %99 : vector<32x1xf32> to vector<32xf32>
    %101 = vector.shape_cast %100 : vector<32xf32> to vector<1x32xf32>
    %102 = vector.broadcast %101 : vector<1x32xf32> to vector<256x32xf32>
    %103 = arith.subf %89, %102 : vector<256x32xf32>
    %104 = arith.mulf %103, %103 : vector<256x32xf32>
    %cst_80 = arith.constant dense<0.000000e+00> : vector<32xf32>
    %105 = vector.multi_reduction <add>, %104, %cst_80 [0] : vector<256x32xf32> to vector<32xf32>
    %106 = vector.shape_cast %105 : vector<32xf32> to vector<32x1xf32>
    %cst_81 = arith.constant dense<0.000000e+00> : vector<32xf32>
    %107 = vector.multi_reduction <add>, %106, %cst_81 [1] : vector<32x1xf32> to vector<32xf32>
    %cst_82 = arith.constant 2.560000e+02 : f32
    %108 = vector.broadcast %cst_82 : f32 to vector<32xf32>
    %109 = arith.divf %107, %108 : vector<32xf32>
    %110 = vector.shape_cast %109 : vector<32xf32> to vector<32x1xf32>
    %111 = vector.shape_cast %110 : vector<32x1xf32> to vector<32xf32>
    %cst_83 = arith.constant 9.99999997E-7 : f32
    %112 = vector.broadcast %cst_83 : f32 to vector<32xf32>
    %113 = arith.addf %111, %112 : vector<32xf32>
    %114 = math.rsqrt %113 : vector<32xf32>
    %115 = vector.shape_cast %114 : vector<32xf32> to vector<1x32xf32>
    %116 = arith.mulf %90, %115 : vector<1x32xf32>
    %117 = arith.mulf %116, %93 : vector<1x32xf32>
    %118 = arith.mulf %91, %93 : vector<1x32xf32>
    %119 = arith.addf %118, %17 : vector<1x32xf32>
    %120 = vector.broadcast %117 : vector<1x32xf32> to vector<256x32xf32>
    %121 = arith.mulf %103, %120 : vector<256x32xf32>
    %122 = vector.broadcast %119 : vector<1x32xf32> to vector<256x32xf32>
    %123 = arith.addf %121, %122 : vector<256x32xf32>
    %124 = arith.negf %123 : vector<256x32xf32>
    %125 = math.exp %124 : vector<256x32xf32>
    %cst_84 = arith.constant 1.000000e+00 : f32
    %126 = vector.broadcast %cst_84 : f32 to vector<256x32xf32>
    %127 = arith.addf %126, %125 : vector<256x32xf32>
    %128 = arith.divf %126, %127 : vector<256x32xf32>
    %129 = arith.mulf %123, %128 : vector<256x32xf32>
    %130 = vector.shape_cast %129 : vector<256x32xf32> to vector<16x16x32xf32>
    %c1_85 = arith.constant 1 : index
    %c1_86 = arith.constant 1 : index
    %c0_87 = arith.constant 0 : index
    %131 = vector.load %arg14[%c1_85, %c1_86, %c0_87] : memref<18x18x32xf32, #tpu.memory_space<vmem>>, vector<16x16x32xf32>
    tpu.vector_store %arg14[%c1_85, %c1_86, %c0_87], %130 {strides = array<i32>} : memref<18x18x32xf32, #tpu.memory_space<vmem>>, vector<16x16x32xf32>,
    %c0_88 = arith.constant 0 : index
    %c0_89 = arith.constant 0 : index
    %c0_90 = arith.constant 0 : index
    %132 = vector.load %arg14[%c0_88, %c0_89, %c0_90] : memref<18x18x32xf32, #tpu.memory_space<vmem>>, vector<16x16x32xf32>
    %133 = vector.shape_cast %132 : vector<16x16x32xf32> to vector<256x32xf32>
    %c0_91 = arith.constant 0 : index
    %c0_92 = arith.constant 0 : index
    %134 = vector.load %arg15[%c0_91, %c0_92] : memref<256x288xf32, #tpu.memory_space<vmem>>, vector<256x32xf32>
    tpu.vector_store %arg15[%c0_91, %c0_92], %133 {strides = array<i32>} : memref<256x288xf32, #tpu.memory_space<vmem>>, vector<256x32xf32>,
    %c0_93 = arith.constant 0 : index
    %c1_94 = arith.constant 1 : index
    %c0_95 = arith.constant 0 : index
    %135 = vector.load %arg14[%c0_93, %c1_94, %c0_95] : memref<18x18x32xf32, #tpu.memory_space<vmem>>, vector<16x16x32xf32>
    %136 = vector.shape_cast %135 : vector<16x16x32xf32> to vector<256x32xf32>
    %c0_96 = arith.constant 0 : index
    %c32_97 = arith.constant 32 : index
    %137 = vector.load %arg15[%c0_96, %c32_97] : memref<256x288xf32, #tpu.memory_space<vmem>>, vector<256x32xf32>
    tpu.vector_store %arg15[%c0_96, %c32_97], %136 {strides = array<i32>} : memref<256x288xf32, #tpu.memory_space<vmem>>, vector<256x32xf32>,
    %c0_98 = arith.constant 0 : index
    %c2_99 = arith.constant 2 : index
    %c0_100 = arith.constant 0 : index
    %138 = vector.load %arg14[%c0_98, %c2_99, %c0_100] : memref<18x18x32xf32, #tpu.memory_space<vmem>>, vector<16x16x32xf32>
    %139 = vector.shape_cast %138 : vector<16x16x32xf32> to vector<256x32xf32>
    %c0_101 = arith.constant 0 : index
    %c64_102 = arith.constant 64 : index
    %140 = vector.load %arg15[%c0_101, %c64_102] : memref<256x288xf32, #tpu.memory_space<vmem>>, vector<256x32xf32>
    tpu.vector_store %arg15[%c0_101, %c64_102], %139 {strides = array<i32>} : memref<256x288xf32, #tpu.memory_space<vmem>>, vector<256x32xf32>,
    %c1_103 = arith.constant 1 : index
    %c0_104 = arith.constant 0 : index
    %c0_105 = arith.constant 0 : index
    %141 = vector.load %arg14[%c1_103, %c0_104, %c0_105] : memref<18x18x32xf32, #tpu.memory_space<vmem>>, vector<16x16x32xf32>
    %142 = vector.shape_cast %141 : vector<16x16x32xf32> to vector<256x32xf32>
    %c0_106 = arith.constant 0 : index
    %c96_107 = arith.constant 96 : index
    %143 = vector.load %arg15[%c0_106, %c96_107] : memref<256x288xf32, #tpu.memory_space<vmem>>, vector<256x32xf32>
    tpu.vector_store %arg15[%c0_106, %c96_107], %142 {strides = array<i32>} : memref<256x288xf32, #tpu.memory_space<vmem>>, vector<256x32xf32>,
    %c1_108 = arith.constant 1 : index
    %c1_109 = arith.constant 1 : index
    %c0_110 = arith.constant 0 : index
    %144 = vector.load %arg14[%c1_108, %c1_109, %c0_110] : memref<18x18x32xf32, #tpu.memory_space<vmem>>, vector<16x16x32xf32>
    %145 = vector.shape_cast %144 : vector<16x16x32xf32> to vector<256x32xf32>
    %c0_111 = arith.constant 0 : index
    %c128_112 = arith.constant 128 : index
    %146 = vector.load %arg15[%c0_111, %c128_112] : memref<256x288xf32, #tpu.memory_space<vmem>>, vector<256x32xf32>
    tpu.vector_store %arg15[%c0_111, %c128_112], %145 {strides = array<i32>} : memref<256x288xf32, #tpu.memory_space<vmem>>, vector<256x32xf32>,
    %c1_113 = arith.constant 1 : index
    %c2_114 = arith.constant 2 : index
    %c0_115 = arith.constant 0 : index
    %147 = vector.load %arg14[%c1_113, %c2_114, %c0_115] : memref<18x18x32xf32, #tpu.memory_space<vmem>>, vector<16x16x32xf32>
    %148 = vector.shape_cast %147 : vector<16x16x32xf32> to vector<256x32xf32>
    %c0_116 = arith.constant 0 : index
    %c160_117 = arith.constant 160 : index
    %149 = vector.load %arg15[%c0_116, %c160_117] : memref<256x288xf32, #tpu.memory_space<vmem>>, vector<256x32xf32>
    tpu.vector_store %arg15[%c0_116, %c160_117], %148 {strides = array<i32>} : memref<256x288xf32, #tpu.memory_space<vmem>>, vector<256x32xf32>,
    %c2_118 = arith.constant 2 : index
    %c0_119 = arith.constant 0 : index
    %c0_120 = arith.constant 0 : index
    %150 = vector.load %arg14[%c2_118, %c0_119, %c0_120] : memref<18x18x32xf32, #tpu.memory_space<vmem>>, vector<16x16x32xf32>
    %151 = vector.shape_cast %150 : vector<16x16x32xf32> to vector<256x32xf32>
    %c0_121 = arith.constant 0 : index
    %c192_122 = arith.constant 192 : index
    %152 = vector.load %arg15[%c0_121, %c192_122] : memref<256x288xf32, #tpu.memory_space<vmem>>, vector<256x32xf32>
    tpu.vector_store %arg15[%c0_121, %c192_122], %151 {strides = array<i32>} : memref<256x288xf32, #tpu.memory_space<vmem>>, vector<256x32xf32>,
    %c2_123 = arith.constant 2 : index
    %c1_124 = arith.constant 1 : index
    %c0_125 = arith.constant 0 : index
    %153 = vector.load %arg14[%c2_123, %c1_124, %c0_125] : memref<18x18x32xf32, #tpu.memory_space<vmem>>, vector<16x16x32xf32>
    %154 = vector.shape_cast %153 : vector<16x16x32xf32> to vector<256x32xf32>
    %c0_126 = arith.constant 0 : index
    %c224_127 = arith.constant 224 : index
    %155 = vector.load %arg15[%c0_126, %c224_127] : memref<256x288xf32, #tpu.memory_space<vmem>>, vector<256x32xf32>
    tpu.vector_store %arg15[%c0_126, %c224_127], %154 {strides = array<i32>} : memref<256x288xf32, #tpu.memory_space<vmem>>, vector<256x32xf32>,
    %c2_128 = arith.constant 2 : index
    %c2_129 = arith.constant 2 : index
    %c0_130 = arith.constant 0 : index
    %156 = vector.load %arg14[%c2_128, %c2_129, %c0_130] : memref<18x18x32xf32, #tpu.memory_space<vmem>>, vector<16x16x32xf32>
    %157 = vector.shape_cast %156 : vector<16x16x32xf32> to vector<256x32xf32>
    %c0_131 = arith.constant 0 : index
    %c256_132 = arith.constant 256 : index
    %158 = vector.load %arg15[%c0_131, %c256_132] : memref<256x288xf32, #tpu.memory_space<vmem>>, vector<256x32xf32>
    tpu.vector_store %arg15[%c0_131, %c256_132], %157 {strides = array<i32>} : memref<256x288xf32, #tpu.memory_space<vmem>>, vector<256x32xf32>,
    %c0_133 = arith.constant 0 : index
    %c0_134 = arith.constant 0 : index
    %159 = vector.load %arg15[%c0_133, %c0_134] : memref<256x288xf32, #tpu.memory_space<vmem>>, vector<256x288xf32>
    %160 = arith.truncf %159 : vector<256x288xf32> to vector<256x288xbf16>
    %c0_135 = arith.constant 0 : index
    %c0_136 = arith.constant 0 : index
    %161 = vector.load %arg11[%c0_135, %c0_136] : memref<288x32xbf16, #tpu.memory_space<vmem>>, vector<288x32xbf16>
    %cst_137 = arith.constant dense<0.000000e+00> : vector<256x32xf32>
    %162 = tpu.matmul %160, %161, %cst_137 {dimension_numbers = #tpu.dot_dimension_numbers<[1], [0], [0], [1], [0, 0, 1, 1], [], []>} : vector<256x288xbf16>, vector<288x32xbf16>, vector<256x32xf32> -> vector<256x32xf32>
    %c0_138 = arith.constant 0 : index
    %c0_139 = arith.constant 0 : index
    %163 = vector.load %arg12[%c0_138, %c0_139] : memref<1x32xf32, #tpu.memory_space<vmem>>, vector<1x32xf32>
    %164 = vector.broadcast %163 : vector<1x32xf32> to vector<256x32xf32>
    %165 = arith.addf %162, %164 : vector<256x32xf32>
    %166 = vector.shape_cast %165 : vector<256x32xf32> to vector<1x16x16x32xf32>
    %c0_140 = arith.constant 0 : index
    %c0_141 = arith.constant 0 : index
    %c0_142 = arith.constant 0 : index
    %c0_143 = arith.constant 0 : index
    %167 = vector.load %arg1[%c0_140, %c0_141, %c0_142, %c0_143] : memref<1x16x16x32xf32, #tpu.memory_space<vmem>>, vector<1x16x16x32xf32>
    %168 = arith.addf %166, %167 : vector<1x16x16x32xf32>
    %c0_144 = arith.constant 0 : index
    %c0_145 = arith.constant 0 : index
    %c0_146 = arith.constant 0 : index
    %c0_147 = arith.constant 0 : index
    %169 = vector.load %arg13[%c0_144, %c0_145, %c0_146, %c0_147] : memref<1x16x16x32xf32, #tpu.memory_space<vmem>>, vector<1x16x16x32xf32>
    tpu.vector_store %arg13[%c0_144, %c0_145, %c0_146, %c0_147], %168 {strides = array<i32>} : memref<1x16x16x32xf32, #tpu.memory_space<vmem>>, vector<1x16x16x32xf32>,
    return
  }
  func.func @transform_0(%arg0: i32) -> (i32, i32, i32, i32) {
    %c0_i32 = arith.constant 0 : i32
    %c0_i32_0 = arith.constant 0 : i32
    %c0_i32_1 = arith.constant 0 : i32
    %c0_i32_2 = arith.constant 0 : i32
    return %arg0, %c0_i32, %c0_i32_0, %c0_i32_1 : i32, i32, i32, i32
  }
  func.func @transform_1(%arg0: i32) -> (i32, i32, i32) {
    %c0_i32 = arith.constant 0 : i32
    %c0_i32_0 = arith.constant 0 : i32
    %c0_i32_1 = arith.constant 0 : i32
    return %arg0, %c0_i32, %c0_i32_0 : i32, i32, i32
  }
  func.func @transform_2(%arg0: i32) -> (i32, i32) {
    %c0_i32 = arith.constant 0 : i32
    %c0_i32_0 = arith.constant 0 : i32
    %c0_i32_1 = arith.constant 0 : i32
    return %c0_i32, %c0_i32_0 : i32, i32
  }
  func.func @transform_3(%arg0: i32) -> (i32, i32) {
    %c0_i32 = arith.constant 0 : i32
    %c0_i32_0 = arith.constant 0 : i32
    %c0_i32_1 = arith.constant 0 : i32
    return %c0_i32, %c0_i32_0 : i32, i32
  }
  func.func @transform_4(%arg0: i32) -> (i32, i32) {
    %c0_i32 = arith.constant 0 : i32
    %c0_i32_0 = arith.constant 0 : i32
    %c0_i32_1 = arith.constant 0 : i32
    return %c0_i32, %c0_i32_0 : i32, i32
  }
  func.func @transform_5(%arg0: i32) -> (i32, i32) {
    %c0_i32 = arith.constant 0 : i32
    %c0_i32_0 = arith.constant 0 : i32
    %c0_i32_1 = arith.constant 0 : i32
    return %c0_i32, %c0_i32_0 : i32, i32
  }
  func.func @transform_6(%arg0: i32) -> (i32, i32) {
    %c0_i32 = arith.constant 0 : i32
    %c0_i32_0 = arith.constant 0 : i32
    %c0_i32_1 = arith.constant 0 : i32
    return %c0_i32, %c0_i32_0 : i32, i32
  }
  func.func @transform_7(%arg0: i32) -> (i32, i32) {
    %c0_i32 = arith.constant 0 : i32
    %c0_i32_0 = arith.constant 0 : i32
    %c0_i32_1 = arith.constant 0 : i32
    return %c0_i32, %c0_i32_0 : i32, i32
  }
  func.func @transform_8(%arg0: i32) -> (i32, i32) {
    %c0_i32 = arith.constant 0 : i32
    %c0_i32_0 = arith.constant 0 : i32
    %c0_i32_1 = arith.constant 0 : i32
    return %c0_i32, %c0_i32_0 : i32, i32
  }
  func.func @transform_9(%arg0: i32) -> (i32, i32) {
    %c0_i32 = arith.constant 0 : i32
    %c0_i32_0 = arith.constant 0 : i32
    %c0_i32_1 = arith.constant 0 : i32
    return %c0_i32, %c0_i32_0 : i32, i32
  }
  func.func @transform_10(%arg0: i32) -> (i32, i32) {
    %c0_i32 = arith.constant 0 : i32
    %c0_i32_0 = arith.constant 0 : i32
    %c0_i32_1 = arith.constant 0 : i32
    return %c0_i32, %c0_i32_0 : i32, i32
  }
  func.func @transform_11(%arg0: i32) -> (i32, i32) {
    %c0_i32 = arith.constant 0 : i32
    %c0_i32_0 = arith.constant 0 : i32
    %c0_i32_1 = arith.constant 0 : i32
    return %c0_i32, %c0_i32_0 : i32, i32
  }
  func.func @transform_12(%arg0: i32) -> (i32, i32, i32, i32) {
    %c0_i32 = arith.constant 0 : i32
    %c0_i32_0 = arith.constant 0 : i32
    %c0_i32_1 = arith.constant 0 : i32
    %c0_i32_2 = arith.constant 0 : i32
    return %arg0, %c0_i32, %c0_i32_0, %c0_i32_1 : i32, i32, i32, i32
  }
}

</mosaic_0001>

<llo_original>
// kernel: residual_block_forward.1
$region0: #{residual_block_forward.1}
  #allocation0 [shape = 'u32[]', space=smem, size = 0x4, offset = 0x4, fixed_abs, tag = 'smem constant byte address 0x4 - core index']
  #allocation1 [shape = 'u32[144,128]{1,0:T(1,128)}', space=vmem, size = 0x12000, scoped, tag = 'internal scratch']
  #allocation2 [shape = 'f32[18,18,32]{2,1,0:T(8,128)}', space=vmem, size = 0x36000, scoped, tag = 'scratch operand']
  #allocation3 [shape = 'f32[256,288]{1,0:T(8,128)}', space=vmem, size = 0x60000, scoped, tag = 'scratch operand']
  %s0 = inlined_call_operand.vmem [shape: f32[2,16,16,32], index: 0, kind: input, shape index: {}]
  %s1 = inlined_call_operand.vmem [shape: f32[2,1,64], index: 1, kind: input, shape index: {}]
  %s2 = inlined_call_operand.vmem [shape: f32[1,32], index: 2, kind: input, shape index: {}]
  %s3 = inlined_call_operand.vmem [shape: f32[1,32], index: 3, kind: input, shape index: {}]
  %s4 = inlined_call_operand.vmem [shape: bf16[288,32], index: 4, kind: input, shape index: {}]
  %s5 = inlined_call_operand.vmem [shape: f32[1,32], index: 5, kind: input, shape index: {}]
  %s6 = inlined_call_operand.vmem [shape: bf16[64,64], index: 6, kind: input, shape index: {}]
  %s7 = inlined_call_operand.vmem [shape: f32[1,64], index: 7, kind: input, shape index: {}]
  %s8 = inlined_call_operand.vmem [shape: f32[1,32], index: 8, kind: input, shape index: {}]
  %s9 = inlined_call_operand.vmem [shape: f32[1,32], index: 9, kind: input, shape index: {}]
  %s10 = inlined_call_operand.vmem [shape: bf16[288,32], index: 10, kind: input, shape index: {}]
  %s11 = inlined_call_operand.vmem [shape: f32[1,32], index: 11, kind: input, shape index: {}]
  %s12 = inlined_call_operand.hbm [shape: f32[2,16,16,32], index: 12, kind: output, shape index: {}]
  %s13 = sld [smem:[#allocation0]]
  $region81: #{residual_block_forward.1} parent=0
    _
  %s15 = ssub.s32 1, %s13
  %s16 = scalar_select 0, %s15, %s13
  $region1: #{residual_block_forward.1} parent=0
    #allocation4 [shape = 'u8[262144]{0}', space=vmem, size = 0x40000, scoped, tag = 'output window, operand 0']
    #allocation5 [shape = 's32[2]{0}', space=sflag, size = 0x8, scoped, tag = 'scoped memory for residual_block_forward.1']
    %17 = vsyncpa [#allocation5], 0
    %s18 = scalar_lea.sflag [#allocation5], 1
    %19 = vsyncpa %s18, 0
    loop: start=0, step=1, limit=4
    $region2: #{residual_block_forward.1} parent=1 // loop_pre_header
      _
    $region3: #{residual_block_forward.1} parent=1 // loop_header
      %s21 = sphi 0, %s25
      %p22 = scmp.ge.s32.totalorder %s21, 4
      %s31 = sphi 0, %s33
      %s34 = sphi 0, %s31
      %s35 = sphi 0, %s34
      %s51 = sphi 0, %s35
      %s57 = sphi 0, %s59
      %s60 = sphi 0, %s57
      %s61 = sphi 0, %s60
      %s77 = sphi 0, %s61
      %s81 = sphi 0, %s81
      %s83 = sphi 0, %s81
      %s84 = sphi 0, %s83
      %s98 = sphi 0, %s84
      %s102 = sphi 0, %s102
      %s104 = sphi 0, %s102
      %s105 = sphi 0, %s104
      %s119 = sphi 0, %s105
      %s123 = sphi 0, %s123
      %s125 = sphi 0, %s123
      %s126 = sphi 0, %s125
      %s140 = sphi 0, %s126
      %s144 = sphi 0, %s144
      %s146 = sphi 0, %s144
      %s147 = sphi 0, %s146
      %s161 = sphi 0, %s147
      %s165 = sphi 0, %s165
      %s167 = sphi 0, %s165
      %s168 = sphi 0, %s167
      %s182 = sphi 0, %s168
      %s186 = sphi 0, %s186
      %s188 = sphi 0, %s186
      %s189 = sphi 0, %s188
      %s203 = sphi 0, %s189
      %s207 = sphi 0, %s207
      %s209 = sphi 0, %s207
      %s210 = sphi 0, %s209
      %s224 = sphi 0, %s210
      %s228 = sphi 0, %s228
      %s230 = sphi 0, %s228
      %s231 = sphi 0, %s230
      %s245 = sphi 0, %s231
      %s249 = sphi 0, %s249
      %s251 = sphi 0, %s249
      %s252 = sphi 0, %s251
      %s266 = sphi 0, %s252
      %s270 = sphi 0, %s270
      %s272 = sphi 0, %s270
      %s273 = sphi 0, %s272
      %s287 = sphi 0, %s273
      %s293 = sphi 0, %s295
      %s296 = sphi 0, %s293
      %s297 = sphi 0, %s296
      %s313 = sphi 0, %s297
    $region4: #{residual_block_forward.1} parent=1 // loop_header_branch
      %24 = sbr.rel (%p22) target = $region8
    $region5: #{residual_block_forward.1} parent=1 // loop_body
      %s26 = ssub.s32 %s21, 1
      %s27 = ssub.s32 %s21, 2
      %s28 = sadd.s32 %s21, 1
      %s29 = ssub.s32 %s21, %s28
      %p30 = scmp.eq.s32.totalorder %s29, 0
      %s32 = sadd.s32 %s31, 1
      %s33 = scalar_select %p30, %s31, %s32
      %p36 = pneg %p30
      %p37 = scmp.eq.s32.totalorder %s21, 1
      %p38 = por %p36, %p37
      %p39 = scmp.ne.s32.totalorder %s31, %s34
      %p40 = scmp.eq.s32.totalorder %s21, 0
      %p41 = por %p39, %p40
      %p42 = scmp.ne.s32.totalorder %s31, %s34
      %p43 = scmp.eq.s32.totalorder %s26, 1
      %p44 = por %p42, %p43
      %p45 = scmp.ne.s32.totalorder %s34, %s35
      %p46 = scmp.eq.s32.totalorder %s26, 0
      %p47 = por %p45, %p46
      %p48 = scmp.ne.s32.totalorder %s34, %s35
      %p49 = scmp.eq.s32.totalorder %s27, 1
      %p50 = por %p48, %p49
      %p52 = scmp.ne.s32.totalorder %s35, %s51
      %p53 = scmp.eq.s32.totalorder %s27, 0
      %p54 = por %p52, %p53
      %s55 = ssub.s32 %s21, %s28
      %p56 = scmp.eq.s32.totalorder %s55, 0
      %s58 = sadd.s32 %s57, 1
      %s59 = scalar_select %p56, %s57, %s58
      %p62 = pneg %p56
      %p63 = scmp.eq.s32.totalorder %s21, 1
      %p64 = por %p62, %p63
      %p65 = scmp.ne.s32.totalorder %s57, %s60
      %p66 = scmp.eq.s32.totalorder %s21, 0
      %p67 = por %p65, %p66
      %p68 = scmp.ne.s32.totalorder %s57, %s60
      %p69 = scmp.eq.s32.totalorder %s26, 1
      %p70 = por %p68, %p69
      %p71 = scmp.ne.s32.totalorder %s60, %s61
      %p72 = scmp.eq.s32.totalorder %s26, 0
      %p73 = por %p71, %p72
      %p74 = scmp.ne.s32.totalorder %s60, %s61
      %p75 = scmp.eq.s32.totalorder %s27, 1
      %p76 = por %p74, %p75
      %p78 = scmp.ne.s32.totalorder %s61, %s77
      %p79 = scmp.eq.s32.totalorder %s27, 0
      %p80 = por %p78, %p79
      %s82 = sadd.s32 %s81, 1
      %p85 = scmp.eq.s32.totalorder %s21, 1
      %p86 = scmp.ne.s32.totalorder %s81, %s83
      %p87 = scmp.eq.s32.totalorder %s21, 0
      %p88 = por %p86, %p87
      %p89 = scmp.ne.s32.totalorder %s81, %s83
      %p90 = scmp.eq.s32.totalorder %s26, 1
      %p91 = por %p89, %p90
      %p92 = scmp.ne.s32.totalorder %s83, %s84
      %p93 = scmp.eq.s32.totalorder %s26, 0
      %p94 = por %p92, %p93
      %p95 = scmp.ne.s32.totalorder %s83, %s84
      %p96 = scmp.eq.s32.totalorder %s27, 1
      %p97 = por %p95, %p96
      %p99 = scmp.ne.s32.totalorder %s84, %s98
      %p100 = scmp.eq.s32.totalorder %s27, 0
      %p101 = por %p99, %p100
      %s103 = sadd.s32 %s102, 1
      %p106 = scmp.eq.s32.totalorder %s21, 1
      %p107 = scmp.ne.s32.totalorder %s102, %s104
      %p108 = scmp.eq.s32.totalorder %s21, 0
      %p109 = por %p107, %p108
      %p110 = scmp.ne.s32.totalorder %s102, %s104
      %p111 = scmp.eq.s32.totalorder %s26, 1
      %p112 = por %p110, %p111
      %p113 = scmp.ne.s32.totalorder %s104, %s105
      %p114 = scmp.eq.s32.totalorder %s26, 0
      %p115 = por %p113, %p114
      %p116 = scmp.ne.s32.totalorder %s104, %s105
      %p117 = scmp.eq.s32.totalorder %s27, 1
      %p118 = por %p116, %p117
      %p120 = scmp.ne.s32.totalorder %s105, %s119
      %p121 = scmp.eq.s32.totalorder %s27, 0
      %p122 = por %p120, %p121
      %s124 = sadd.s32 %s123, 1
      %p127 = scmp.eq.s32.totalorder %s21, 1
      %p128 = scmp.ne.s32.totalorder %s123, %s125
      %p129 = scmp.eq.s32.totalorder %s21, 0
      %p130 = por %p128, %p129
      %p131 = scmp.ne.s32.totalorder %s123, %s125
      %p132 = scmp.eq.s32.totalorder %s26, 1
      %p133 = por %p131, %p132
      %p134 = scmp.ne.s32.totalorder %s125, %s126
      %p135 = scmp.eq.s32.totalorder %s26, 0
      %p136 = por %p134, %p135
      %p137 = scmp.ne.s32.totalorder %s125, %s126
      %p138 = scmp.eq.s32.totalorder %s27, 1
      %p139 = por %p137, %p138
      %p141 = scmp.ne.s32.totalorder %s126, %s140
      %p142 = scmp.eq.s32.totalorder %s27, 0
      %p143 = por %p141, %p142
      %s145 = sadd.s32 %s144, 1
      %p148 = scmp.eq.s32.totalorder %s21, 1
      %p149 = scmp.ne.s32.totalorder %s144, %s146
      %p150 = scmp.eq.s32.totalorder %s21, 0
      %p151 = por %p149, %p150
      %p152 = scmp.ne.s32.totalorder %s144, %s146
      %p153 = scmp.eq.s32.totalorder %s26, 1
      %p154 = por %p152, %p153
      %p155 = scmp.ne.s32.totalorder %s146, %s147
      %p156 = scmp.eq.s32.totalorder %s26, 0
      %p157 = por %p155, %p156
      %p158 = scmp.ne.s32.totalorder %s146, %s147
      %p159 = scmp.eq.s32.totalorder %s27, 1
      %p160 = por %p158, %p159
      %p162 = scmp.ne.s32.totalorder %s147, %s161
      %p163 = scmp.eq.s32.totalorder %s27, 0
      %p164 = por %p162, %p163
      %s166 = sadd.s32 %s165, 1
      %p169 = scmp.eq.s32.totalorder %s21, 1
      %p170 = scmp.ne.s32.totalorder %s165, %s167
      %p171 = scmp.eq.s32.totalorder %s21, 0
      %p172 = por %p170, %p171
      %p173 = scmp.ne.s32.totalorder %s165, %s167
      %p174 = scmp.eq.s32.totalorder %s26, 1
      %p175 = por %p173, %p174
      %p176 = scmp.ne.s32.totalorder %s167, %s168
      %p177 = scmp.eq.s32.totalorder %s26, 0
      %p178 = por %p176, %p177
      %p179 = scmp.ne.s32.totalorder %s167, %s168
      %p180 = scmp.eq.s32.totalorder %s27, 1
      %p181 = por %p179, %p180
      %p183 = scmp.ne.s32.totalorder %s168, %s182
      %p184 = scmp.eq.s32.totalorder %s27, 0
      %p185 = por %p183, %p184
      %s187 = sadd.s32 %s186, 1
      %p190 = scmp.eq.s32.totalorder %s21, 1
      %p191 = scmp.ne.s32.totalorder %s186, %s188
      %p192 = scmp.eq.s32.totalorder %s21, 0
      %p193 = por %p191, %p192
      %p194 = scmp.ne.s32.totalorder %s186, %s188
      %p195 = scmp.eq.s32.totalorder %s26, 1
      %p196 = por %p194, %p195
      %p197 = scmp.ne.s32.totalorder %s188, %s189
      %p198 = scmp.eq.s32.totalorder %s26, 0
      %p199 = por %p197, %p198
      %p200 = scmp.ne.s32.totalorder %s188, %s189
      %p201 = scmp.eq.s32.totalorder %s27, 1
      %p202 = por %p200, %p201
      %p204 = scmp.ne.s32.totalorder %s189, %s203
      %p205 = scmp.eq.s32.totalorder %s27, 0
      %p206 = por %p204, %p205
      %s208 = sadd.s32 %s207, 1
      %p211 = scmp.eq.s32.totalorder %s21, 1
      %p212 = scmp.ne.s32.totalorder %s207, %s209
      %p213 = scmp.eq.s32.totalorder %s21, 0
      %p214 = por %p212, %p213
      %p215 = scmp.ne.s32.totalorder %s207, %s209
      %p216 = scmp.eq.s32.totalorder %s26, 1
      %p217 = por %p215, %p216
      %p218 = scmp.ne.s32.totalorder %s209, %s210
      %p219 = scmp.eq.s32.totalorder %s26, 0
      %p220 = por %p218, %p219
      %p221 = scmp.ne.s32.totalorder %s209, %s210
      %p222 = scmp.eq.s32.totalorder %s27, 1
      %p223 = por %p221, %p222
      %p225 = scmp.ne.s32.totalorder %s210, %s224
      %p226 = scmp.eq.s32.totalorder %s27, 0
      %p227 = por %p225, %p226
      %s229 = sadd.s32 %s228, 1
      %p232 = scmp.eq.s32.totalorder %s21, 1
      %p233 = scmp.ne.s32.totalorder %s228, %s230
      %p234 = scmp.eq.s32.totalorder %s21, 0
      %p235 = por %p233, %p234
      %p236 = scmp.ne.s32.totalorder %s228, %s230
      %p237 = scmp.eq.s32.totalorder %s26, 1
      %p238 = por %p236, %p237
      %p239 = scmp.ne.s32.totalorder %s230, %s231
      %p240 = scmp.eq.s32.totalorder %s26, 0
      %p241 = por %p239, %p240
      %p242 = scmp.ne.s32.totalorder %s230, %s231
      %p243 = scmp.eq.s32.totalorder %s27, 1
      %p244 = por %p242, %p243
      %p246 = scmp.ne.s32.totalorder %s231, %s245
      %p247 = scmp.eq.s32.totalorder %s27, 0
      %p248 = por %p246, %p247
      %s250 = sadd.s32 %s249, 1
      %p253 = scmp.eq.s32.totalorder %s21, 1
      %p254 = scmp.ne.s32.totalorder %s249, %s251
      %p255 = scmp.eq.s32.totalorder %s21, 0
      %p256 = por %p254, %p255
      %p257 = scmp.ne.s32.totalorder %s249, %s251
      %p258 = scmp.eq.s32.totalorder %s26, 1
      %p259 = por %p257, %p258
      %p260 = scmp.ne.s32.totalorder %s251, %s252
      %p261 = scmp.eq.s32.totalorder %s26, 0
      %p262 = por %p260, %p261
      %p263 = scmp.ne.s32.totalorder %s251, %s252
      %p264 = scmp.eq.s32.totalorder %s27, 1
      %p265 = por %p263, %p264
      %p267 = scmp.ne.s32.totalorder %s252, %s266
      %p268 = scmp.eq.s32.totalorder %s27, 0
      %p269 = por %p267, %p268
      %s271 = sadd.s32 %s270, 1
      %p274 = scmp.eq.s32.totalorder %s21, 1
      %p275 = scmp.ne.s32.totalorder %s270, %s272
      %p276 = scmp.eq.s32.totalorder %s21, 0
      %p277 = por %p275, %p276
      %p278 = scmp.ne.s32.totalorder %s270, %s272
      %p279 = scmp.eq.s32.totalorder %s26, 1
      %p280 = por %p278, %p279
      %p281 = scmp.ne.s32.totalorder %s272, %s273
      %p282 = scmp.eq.s32.totalorder %s26, 0
      %p283 = por %p281, %p282
      %p284 = scmp.ne.s32.totalorder %s272, %s273
      %p285 = scmp.eq.s32.totalorder %s27, 1
      %p286 = por %p284, %p285
      %p288 = scmp.ne.s32.totalorder %s273, %s287
      %p289 = scmp.eq.s32.totalorder %s27, 0
      %p290 = por %p288, %p289
      %s291 = ssub.s32 %s21, %s28
      %p292 = scmp.eq.s32.totalorder %s291, 0
      %s294 = sadd.s32 %s293, 1
      %s295 = scalar_select %p292, %s293, %s294
      %p298 = pneg %p292
      %p299 = scmp.eq.s32.totalorder %s21, 1
      %p300 = por %p298, %p299
      %p301 = scmp.ne.s32.totalorder %s293, %s296
      %p302 = scmp.eq.s32.totalorder %s21, 0
      %p303 = por %p301, %p302
      %p304 = scmp.ne.s32.totalorder %s293, %s296
      %p305 = scmp.eq.s32.totalorder %s26, 1
      %p306 = por %p304, %p305
      %p307 = scmp.ne.s32.totalorder %s296, %s297
      %p308 = scmp.eq.s32.totalorder %s26, 0
      %p309 = por %p307, %p308
      %p310 = scmp.ne.s32.totalorder %s296, %s297
      %p311 = scmp.eq.s32.totalorder %s27, 1
      %p312 = por %p310, %p311
      %p314 = scmp.ne.s32.totalorder %s297, %s313
      %p315 = scmp.eq.s32.totalorder %s27, 0
      %p316 = por %p314, %p315
      %p317 = scmp.le.s32.totalorder 1, %s21
      %p318 = scmp.lt.s32.totalorder %s21, 3
      %p319 = pnand %p317, %p318
      %p320 = pneg %p319
      // Predicated region
      $region9: #{residual_block_forward.1} parent=5 // pred_check
        _
      $region10: #{residual_block_forward.1} parent=5 // pred_check_branch
        %322 = sbr.rel (%p319) target = $region12
      $region11: #{residual_block_forward.1} parent=5 // pred_region
        %s323 = ssub.s32 %s21, 1
        // Predicated region
        $region13: #{residual_block_forward.1} parent=11 // pred_check
          %p324 = pneg %p94
        $region14: #{residual_block_forward.1} parent=11 // pred_check_branch
          %326 = sbr.rel (%p324) target = $region16
        $region15: #{residual_block_forward.1} parent=11 // pred_region
          _
        $region16: #{residual_block_forward.1} parent=11 // pred_fallthru
          _
        // Predicated region
        $region17: #{residual_block_forward.1} parent=11 // pred_check
          %p327 = pneg %p115
        $region18: #{residual_block_forward.1} parent=11 // pred_check_branch
          %329 = sbr.rel (%p327) target = $region20
        $region19: #{residual_block_forward.1} parent=11 // pred_region
          _
        $region20: #{residual_block_forward.1} parent=11 // pred_fallthru
          _
        // Predicated region
        $region21: #{residual_block_forward.1} parent=11 // pred_check
          %p330 = pneg %p136
        $region22: #{residual_block_forward.1} parent=11 // pred_check_branch
          %332 = sbr.rel (%p330) target = $region24
        $region23: #{residual_block_forward.1} parent=11 // pred_region
          _
        $region24: #{residual_block_forward.1} parent=11 // pred_fallthru
          _
        // Predicated region
        $region25: #{residual_block_forward.1} parent=11 // pred_check
          %p333 = pneg %p157
        $region26: #{residual_block_forward.1} parent=11 // pred_check_branch
          %335 = sbr.rel (%p333) target = $region28
        $region27: #{residual_block_forward.1} parent=11 // pred_region
          _
        $region28: #{residual_block_forward.1} parent=11 // pred_fallthru
          _
        // Predicated region
        $region29: #{residual_block_forward.1} parent=11 // pred_check
          %p336 = pneg %p178
        $region30: #{residual_block_forward.1} parent=11 // pred_check_branch
          %338 = sbr.rel (%p336) target = $region32
        $region31: #{residual_block_forward.1} parent=11 // pred_region
          _
        $region32: #{residual_block_forward.1} parent=11 // pred_fallthru
          _
        // Predicated region
        $region33: #{residual_block_forward.1} parent=11 // pred_check
          %p339 = pneg %p199
        $region34: #{residual_block_forward.1} parent=11 // pred_check_branch
          %341 = sbr.rel (%p339) target = $region36
        $region35: #{residual_block_forward.1} parent=11 // pred_region
          _
        $region36: #{residual_block_forward.1} parent=11 // pred_fallthru
          _
        // Predicated region
        $region37: #{residual_block_forward.1} parent=11 // pred_check
          %p342 = pneg %p220
        $region38: #{residual_block_forward.1} parent=11 // pred_check_branch
          %344 = sbr.rel (%p342) target = $region40
        $region39: #{residual_block_forward.1} parent=11 // pred_region
          _
        $region40: #{residual_block_forward.1} parent=11 // pred_fallthru
          _
        // Predicated region
        $region41: #{residual_block_forward.1} parent=11 // pred_check
          %p345 = pneg %p241
        $region42: #{residual_block_forward.1} parent=11 // pred_check_branch
          %347 = sbr.rel (%p345) target = $region44
        $region43: #{residual_block_forward.1} parent=11 // pred_region
          _
        $region44: #{residual_block_forward.1} parent=11 // pred_fallthru
          _
        // Predicated region
        $region45: #{residual_block_forward.1} parent=11 // pred_check
          %p348 = pneg %p262
        $region46: #{residual_block_forward.1} parent=11 // pred_check_branch
          %350 = sbr.rel (%p348) target = $region48
        $region47: #{residual_block_forward.1} parent=11 // pred_region
          _
        $region48: #{residual_block_forward.1} parent=11 // pred_fallthru
          _
        // Predicated region
        $region49: #{residual_block_forward.1} parent=11 // pred_check
          %p351 = pneg %p283
        $region50: #{residual_block_forward.1} parent=11 // pred_check_branch
          %353 = sbr.rel (%p351) target = $region52
        $region51: #{residual_block_forward.1} parent=11 // pred_region
          _
        $region52: #{residual_block_forward.1} parent=11 // pred_fallthru
          _
      $region12: #{residual_block_forward.1} parent=5 // pred_fallthru
        _
      %p354 = scmp.lt.s32.totalorder %s21, 2
      // Predicated region
      $region53: #{residual_block_forward.1} parent=5 // pred_check
        %p355 = pneg %p354
      $region54: #{residual_block_forward.1} parent=5 // pred_check_branch
        %357 = sbr.rel (%p355) target = $region56
      $region55: #{residual_block_forward.1} parent=5 // pred_region
        // Predicated region
        $region57: #{residual_block_forward.1} parent=55 // pred_check
          %p358 = pneg %p41
        $region58: #{residual_block_forward.1} parent=55 // pred_check_branch
          %360 = sbr.rel (%p358) target = $region60
        $region59: #{residual_block_forward.1} parent=55 // pred_region
          %p361 = scmp.lt.s32.totalorder %s21, 1
          %s362 = scalar_select %p361, %s21, 1
          %s363 = smul.addr %s362, 32
          %s364 = smul.addr %s363, 8
          %s365 = scalar_lea.vmem %s0, %s364
        $region60: #{residual_block_forward.1} parent=55 // pred_fallthru
          _
        // Predicated region
        $region61: #{residual_block_forward.1} parent=55 // pred_check
          %p366 = pneg %p67
        $region62: #{residual_block_forward.1} parent=55 // pred_check_branch
          %368 = sbr.rel (%p366) target = $region64
        $region63: #{residual_block_forward.1} parent=55 // pred_region
          %p369 = scmp.lt.s32.totalorder %s21, 1
          %s370 = scalar_select %p369, %s21, 1
          %s371 = scalar_lea.vmem %s1, %s370
        $region64: #{residual_block_forward.1} parent=55 // pred_fallthru
          _
      $region56: #{residual_block_forward.1} parent=5 // pred_fallthru
        _
      %p372 = scmp.le.s32.totalorder 1, %s21
      %p373 = scmp.lt.s32.totalorder %s21, 3
      %p374 = pnand %p372, %p373
      %p375 = pneg %p374
      // Predicated region
      $region65: #{residual_block_forward.1} parent=5 // pred_check
        _
      $region66: #{residual_block_forward.1} parent=5 // pred_check_branch
        %377 = sbr.rel (%p374) target = $region68
      $region67: #{residual_block_forward.1} parent=5 // pred_region
        %s378 = ssub.s32 %s21, 1
        %p379 = scmp.lt.s32.totalorder %s26, 1
        %s380 = scalar_select %p379, %s26, 1
        %s381 = smul.addr %s380, 32
        %s382 = smul.addr %s381, 8
        %s383 = scalar_lea.vmem %s0, %s382
        %p384 = pneg %p47
        %p385 = pneg %p44
        %p386 = scmp.lt.s32.totalorder %s26, 1
        %s387 = scalar_select %p386, %s26, 1
        %s388 = scalar_lea.vmem %s1, %s387
        %p389 = pneg %p73
        %p390 = pneg %p70
        %p391 = pneg %p94
        %p392 = pneg %p91
        %p393 = pneg %p115
        %p394 = pneg %p112
        %p395 = pneg %p136
        %p396 = pneg %p133
        %p397 = pneg %p157
        %p398 = pneg %p154
        %p399 = pneg %p178
        %p400 = pneg %p175
        %p401 = pneg %p199
        %p402 = pneg %p196
        %p403 = pneg %p220
        %p404 = pneg %p217
        %p405 = pneg %p241
        %p406 = pneg %p238
        %p407 = pneg %p262
        %p408 = pneg %p259
        %p409 = pneg %p283
        %p410 = pneg %p280
        %p411 = pneg %p309
        %p412 = pneg %p306
        %s413 = sand.u32 %s296, 1
        %s414 = scalar_lea.sflag [#allocation5], %s413
        %s415 = sand.u32 %s296, 1
        %s416 = smul.addr %s415, 256
        %s417 = scalar_lea.vmem [#allocation4], %s416
        %p418 = scmp.lt.s32.totalorder %s26, 1
        %s419 = scalar_select %p418, %s26, 1
        %s420 = smul.addr %s419, 32
        %s421 = smul.addr %s420, 8
        %s422 = scalar_lea.vmem %s0, %s421
        %p423 = scmp.lt.s32.totalorder %s26, 1
        %s424 = scalar_select %p423, %s26, 1
        %s425 = scalar_lea.vmem %s1, %s424
        %vm427 = vcmask 261120
        %428 = vst.msk [vmem:[#allocation2] sm:$0xff] %vm427, 0.0
        %429 = vst.msk [vmem:[#allocation2 + $0x8] sm:$0xff] %vm427, 0.0
        %vm430 = vcmask 254976
        %431 = vst.msk [vmem:[#allocation2 + $0x10] sm:$0x3] %vm430, 0.0
        %432 = vst.msk [vmem:[#allocation2 + $0x18] sm:$0xff] %vm427, 0.0
        %433 = vst.msk [vmem:[#allocation2 + $0x20] sm:$0xff] %vm427, 0.0
        %434 = vst.msk [vmem:[#allocation2 + $0x28] sm:$0x3] %vm430, 0.0
        %435 = vst.msk [vmem:[#allocation2 + $0x30] sm:$0xff] %vm427, 0.0
        %436 = vst.msk [vmem:[#allocation2 + $0x38] sm:$0xff] %vm427, 0.0
        %437 = vst.msk [vmem:[#allocation2 + $0x40] sm:$0x3] %vm430, 0.0
        %438 = vst.msk [vmem:[#allocation2 + $0x48] sm:$0xff] %vm427, 0.0
        %439 = vst.msk [vmem:[#allocation2 + $0x50] sm:$0xff] %vm427, 0.0
        %440 = vst.msk [vmem:[#allocation2 + $0x58] sm:$0x3] %vm430, 0.0
        %441 = vst.msk [vmem:[#allocation2 + $0x60] sm:$0xff] %vm427, 0.0
        %442 = vst.msk [vmem:[#allocation2 + $0x68] sm:$0xff] %vm427, 0.0
        %443 = vst.msk [vmem:[#allocation2 + $0x70] sm:$0x3] %vm430, 0.0
        %444 = vst.msk [vmem:[#allocation2 + $0x78] sm:$0xff] %vm427, 0.0
        %445 = vst.msk [vmem:[#allocation2 + $0x80] sm:$0xff] %vm427, 0.0
        %446 = vst.msk [vmem:[#allocation2 + $0x88] sm:$0x3] %vm430, 0.0
        %447 = vst.msk [vmem:[#allocation2 + $0x90] sm:$0xff] %vm427, 0.0
        %448 = vst.msk [vmem:[#allocation2 + $0x98] sm:$0xff] %vm427, 0.0
        %449 = vst.msk [vmem:[#allocation2 + $0xa0] sm:$0x3] %vm430, 0.0
        %450 = vst.msk [vmem:[#allocation2 + $0xa8] sm:$0xff] %vm427, 0.0
        %451 = vst.msk [vmem:[#allocation2 + $0xb0] sm:$0xff] %vm427, 0.0
        %452 = vst.msk [vmem:[#allocation2 + $0xb8] sm:$0x3] %vm430, 0.0
        %453 = vst.msk [vmem:[#allocation2 + $0xc0] sm:$0xff] %vm427, 0.0
        %454 = vst.msk [vmem:[#allocation2 + $0xc8] sm:$0xff] %vm427, 0.0
        %455 = vst.msk [vmem:[#allocation2 + $0xd0] sm:$0x3] %vm430, 0.0
        %456 = vst.msk [vmem:[#allocation2 + $0xd8] sm:$0xff] %vm427, 0.0
        %457 = vst.msk [vmem:[#allocation2 + $0xe0] sm:$0xff] %vm427, 0.0
        %458 = vst.msk [vmem:[#allocation2 + $0xe8] sm:$0x3] %vm430, 0.0
        %459 = vst.msk [vmem:[#allocation2 + $0xf0] sm:$0xff] %vm427, 0.0
        %460 = vst.msk [vmem:[#allocation2 + $0xf8] sm:$0xff] %vm427, 0.0
        %461 = vst.msk [vmem:[#allocation2 + $0x100] sm:$0x3] %vm430, 0.0
        %462 = vst.msk [vmem:[#allocation2 + $0x108] sm:$0xff] %vm427, 0.0
        %463 = vst.msk [vmem:[#allocation2 + $0x110] sm:$0xff] %vm427, 0.0
        %464 = vst.msk [vmem:[#allocation2 + $0x118] sm:$0x3] %vm430, 0.0
        %465 = vst.msk [vmem:[#allocation2 + $0x120] sm:$0xff] %vm427, 0.0
        %466 = vst.msk [vmem:[#allocation2 + $0x128] sm:$0xff] %vm427, 0.0
        %467 = vst.msk [vmem:[#allocation2 + $0x130] sm:$0x3] %vm430, 0.0
        %468 = vst.msk [vmem:[#allocation2 + $0x138] sm:$0xff] %vm427, 0.0
        %469 = vst.msk [vmem:[#allocation2 + $0x140] sm:$0xff] %vm427, 0.0
        %470 = vst.msk [vmem:[#allocation2 + $0x148] sm:$0x3] %vm430, 0.0
        %471 = vst.msk [vmem:[#allocation2 + $0x150] sm:$0xff] %vm427, 0.0
        %472 = vst.msk [vmem:[#allocation2 + $0x158] sm:$0xff] %vm427, 0.0
        %473 = vst.msk [vmem:[#allocation2 + $0x160] sm:$0x3] %vm430, 0.0
        %474 = vst.msk [vmem:[#allocation2 + $0x168] sm:$0xff] %vm427, 0.0
        %475 = vst.msk [vmem:[#allocation2 + $0x170] sm:$0xff] %vm427, 0.0
        %476 = vst.msk [vmem:[#allocation2 + $0x178] sm:$0x3] %vm430, 0.0
        %477 = vst.msk [vmem:[#allocation2 + $0x180] sm:$0xff] %vm427, 0.0
        %478 = vst.msk [vmem:[#allocation2 + $0x188] sm:$0xff] %vm427, 0.0
        %479 = vst.msk [vmem:[#allocation2 + $0x190] sm:$0x3] %vm430, 0.0
        %480 = vst.msk [vmem:[#allocation2 + $0x198] sm:$0xff] %vm427, 0.0
        %481 = vst.msk [vmem:[#allocation2 + $0x1a0] sm:$0xff] %vm427, 0.0
        %482 = vst.msk [vmem:[#allocation2 + $0x1a8] sm:$0x3] %vm430, 0.0
        %v483 = vld [vmem:[%s422] sm:$0xff]
        %v484 = vld [vmem:[%s422 + $0x8] sm:$0xff]
        %v485 = vld [vmem:[%s422 + $0x10] sm:$0xff]
        %v486 = vld [vmem:[%s422 + $0x18] sm:$0xff]
        %v487 = vld [vmem:[%s422 + $0x20] sm:$0xff]
        %v488 = vld [vmem:[%s422 + $0x28] sm:$0xff]
        %v489 = vld [vmem:[%s422 + $0x30] sm:$0xff]
        %v490 = vld [vmem:[%s422 + $0x38] sm:$0xff]
        %v491 = vld [vmem:[%s422 + $0x40] sm:$0xff]
        %v492 = vld [vmem:[%s422 + $0x48] sm:$0xff]
        %v493 = vld [vmem:[%s422 + $0x50] sm:$0xff]
        %v494 = vld [vmem:[%s422 + $0x58] sm:$0xff]
        %v495 = vld [vmem:[%s422 + $0x60] sm:$0xff]
        %v496 = vld [vmem:[%s422 + $0x68] sm:$0xff]
        %v497 = vld [vmem:[%s422 + $0x70] sm:$0xff]
        %v498 = vld [vmem:[%s422 + $0x78] sm:$0xff]
        %v499 = vld [vmem:[%s422 + $0x80] sm:$0xff]
        %v500 = vld [vmem:[%s422 + $0x88] sm:$0xff]
        %v501 = vld [vmem:[%s422 + $0x90] sm:$0xff]
        %v502 = vld [vmem:[%s422 + $0x98] sm:$0xff]
        %v503 = vld [vmem:[%s422 + $0xa0] sm:$0xff]
        %v504 = vld [vmem:[%s422 + $0xa8] sm:$0xff]
        %v505 = vld [vmem:[%s422 + $0xb0] sm:$0xff]
        %v506 = vld [vmem:[%s422 + $0xb8] sm:$0xff]
        %v507 = vld [vmem:[%s422 + $0xc0] sm:$0xff]
        %v508 = vld [vmem:[%s422 + $0xc8] sm:$0xff]
        %v509 = vld [vmem:[%s422 + $0xd0] sm:$0xff]
        %v510 = vld [vmem:[%s422 + $0xd8] sm:$0xff]
        %v511 = vld [vmem:[%s422 + $0xe0] sm:$0xff]
        %v512 = vld [vmem:[%s422 + $0xe8] sm:$0xff]
        %v513 = vld [vmem:[%s422 + $0xf0] sm:$0xff]
        %v514 = vld [vmem:[%s422 + $0xf8] sm:$0xff]
        %v515 = vld [vmem:[%s425] sm:$0x1]
        %v516 = vxor.u32 %v515, 2147483648
        %v517 = vmul.f32 %v516, 1.442695
        %v518 = vpow.pop %v517
        %v519 = vadd.f32 %v518, 1.0
        %v520 = vrcp.pop %v519
        %v521 = vmul.f32 1.0, %v520
        %v522 = vmul.f32 %v515, %v521
        %v523 = vpack.c.bf16 %v522, %v522
        %v524 = vld [vmem:[%s6] sm:$0xf]
        %v525 = vld [vmem:[%s6 + $0x4] sm:$0xf]
        %v526 = vld [vmem:[%s6 + $0x8] sm:$0xf]
        %v527 = vld [vmem:[%s6 + $0xc] sm:$0xf]
        %v528 = vld [vmem:[%s6 + $0x10] sm:$0xf]
        %v529 = vld [vmem:[%s6 + $0x14] sm:$0xf]
        %v530 = vld [vmem:[%s6 + $0x18] sm:$0xf]
        %v531 = vld [vmem:[%s6 + $0x1c] sm:$0xf]
        %v532 = vld [vmem:[%s7] sm:$0x1]
        %v541 = vunpack.c.l.b16 %v524
        %v542 = vunpack.c.l.b16 %v525
        %v543 = vunpack.c.l.b16 %v526
        %v544 = vunpack.c.l.b16 %v527
        %v545 = vunpack.c.l.b16 %v528
        %v546 = vunpack.c.l.b16 %v529
        %v547 = vunpack.c.l.b16 %v530
        %v548 = vunpack.c.l.b16 %v531
        %v549 = vpack.c.b16 %v542, %v541
        %v550 = vpack.c.b16 %v544, %v543
        %v551 = vpack.c.b16 %v546, %v545
        %v552 = vpack.c.b16 %v548, %v547
        %vm557 = vcmask 523264
        %v559 = vsel %vm557, %v523, 0
        %561 = vmatprep.subr.bf16.mxu0 0
        %562 = vmatpush1.bf16.msra.mxu0 0
        %563 = vmatprep.subr.bf16.mxu0 0
        %564 = vmatpush1.bf16.msra.mxu0 0
        %565 = vmatprep.subr.bf16.mxu0 0
        %566 = vmatpush1.bf16.msra.mxu0 0
        %567 = vmatprep.subr.bf16.mxu0 0
        %568 = vmatpush1.bf16.msra.mxu0 0
        %569 = vmatprep.subr.bf16.mxu0 0
        %570 = vmatpush1.bf16.msra.mxu0 %v552
        %571 = vmatprep.subr.bf16.mxu0 0
        %572 = vmatpush1.bf16.msra.mxu0 %v551
        %573 = vmatprep.subr.bf16.mxu0 0
        %574 = vmatpush1.bf16.msra.mxu0 %v550
        %575 = vmatprep.subr.bf16.mxu0 0
        %576 = vmatpush1.bf16.msra.mxu0 %v549
        %577 = vmatprep.subr.bf16.mxu0 0
        %578 = vmatpush2.bf16.msra.mxu0 0
        %579 = vmatprep.subr.bf16.mxu0 0
        %580 = vmatpush2.bf16.msra.mxu0 0
        %581 = vmatprep.subr.bf16.mxu0 0
        %582 = vmatpush2.bf16.msra.mxu0 0
        %583 = vmatprep.subr.bf16.mxu0 0
        %584 = vmatpush2.bf16.msra.mxu0 0
        %585 = vmatprep.subr.bf16.mxu0 0
        %586 = vmatpush2.bf16.msra.mxu0 0
        %587 = vmatprep.subr.bf16.mxu0 0
        %588 = vmatpush2.bf16.msra.mxu0 0
        %589 = vmatprep.subr.bf16.mxu0 0
        %590 = vmatpush2.bf16.msra.mxu0 0
        %591 = vmatprep.subr.bf16.mxu0 0
        %592 = vmatpush2.bf16.msra.mxu0 0
        %593 = vmatprep.mubr.bf16.mxu0 0
        %594 = vmatmul.mubr.bf16.gmra.mxu0 %v559
        %v595 = vpop.f32.mrf.mxu0
        %v596 = vadd.f32 %v532, %v595
        %v597 = vpop.f32.mrf.mxu0
        %v598 = vpop.f32.mrf.mxu0
        %v599 = vpop.f32.mrf.mxu0
        %600 = vdwg.mxu0
        %v601 = vld [vmem:[%s2] sm:$0x1]
        %v602 = vld [vmem:[%s3] sm:$0x1]
        %v603 = vsel %vm427, %v483, 0.0
        %v604 = vsel %vm427, %v484, 0.0
        %v605 = vadd.f32 %v603, %v604
        %v606 = vsel %vm427, %v485, 0.0
        %v607 = vadd.f32 %v605, %v606
        %v608 = vsel %vm427, %v486, 0.0
        %v609 = vadd.f32 %v607, %v608
        %v610 = vsel %vm427, %v487, 0.0
        %v611 = vadd.f32 %v609, %v610
        %v612 = vsel %vm427, %v488, 0.0
        %v613 = vadd.f32 %v611, %v612
        %v614 = vsel %vm427, %v489, 0.0
        %v615 = vadd.f32 %v613, %v614
        %v616 = vsel %vm427, %v490, 0.0
        %v617 = vadd.f32 %v615, %v616
        %v618 = vsel %vm427, %v491, 0.0
        %v619 = vadd.f32 %v617, %v618
        %v620 = vsel %vm427, %v492, 0.0
        %v621 = vadd.f32 %v619, %v620
        %v622 = vsel %vm427, %v493, 0.0
        %v623 = vadd.f32 %v621, %v622
        %v624 = vsel %vm427, %v494, 0.0
        %v625 = vadd.f32 %v623, %v624
        %v626 = vsel %vm427, %v495, 0.0
        %v627 = vadd.f32 %v625, %v626
        %v628 = vsel %vm427, %v496, 0.0
        %v629 = vadd.f32 %v627, %v628
        %v630 = vsel %vm427, %v497, 0.0
        %v631 = vadd.f32 %v629, %v630
        %v632 = vsel %vm427, %v498, 0.0
        %v633 = vadd.f32 %v631, %v632
        %v634 = vsel %vm427, %v499, 0.0
        %v635 = vadd.f32 %v633, %v634
        %v636 = vsel %vm427, %v500, 0.0
        %v637 = vadd.f32 %v635, %v636
        %v638 = vsel %vm427, %v501, 0.0
        %v639 = vadd.f32 %v637, %v638
        %v640 = vsel %vm427, %v502, 0.0
        %v641 = vadd.f32 %v639, %v640
        %v642 = vsel %vm427, %v503, 0.0
        %v643 = vadd.f32 %v641, %v642
        %v644 = vsel %vm427, %v504, 0.0
        %v645 = vadd.f32 %v643, %v644
        %v646 = vsel %vm427, %v505, 0.0
        %v647 = vadd.f32 %v645, %v646
        %v648 = vsel %vm427, %v506, 0.0
        %v649 = vadd.f32 %v647, %v648
        %v650 = vsel %vm427, %v507, 0.0
        %v651 = vadd.f32 %v649, %v650
        %v652 = vsel %vm427, %v508, 0.0
        %v653 = vadd.f32 %v651, %v652
        %v654 = vsel %vm427, %v509, 0.0
        %v655 = vadd.f32 %v653, %v654
        %v656 = vsel %vm427, %v510, 0.0
        %v657 = vadd.f32 %v655, %v656
        %v658 = vsel %vm427, %v511, 0.0
        %v659 = vadd.f32 %v657, %v658
        %v660 = vsel %vm427, %v512, 0.0
        %v661 = vadd.f32 %v659, %v660
        %v662 = vsel %vm427, %v513, 0.0
        %v663 = vadd.f32 %v661, %v662
        %v664 = vsel %vm427, %v514, 0.0
        %v665 = vadd.f32 %v663, %v664
        %v666 = vrot.slane %v665, 4
        %v667 = vadd.f32 %v665, %v666
        %v668 = vrot.slane %v667, 2
        %v669 = vadd.f32 %v667, %v668
        %v670 = vrot.slane %v669, 1
        %v671 = vadd.f32 %v669, %v670
        %v672 = vadd.f32 %v671, 0.0
        %v673 = vrcp.pop 256.0
        %v674 = vmul.f32 %v672, %v673
        %v675 = vsub.f32 %v483, %v674
        %v676 = vsub.f32 %v484, %v674
        %v677 = vsub.f32 %v485, %v674
        %v678 = vsub.f32 %v486, %v674
        %v679 = vsub.f32 %v487, %v674
        %v680 = vsub.f32 %v488, %v674
        %v681 = vsub.f32 %v489, %v674
        %v682 = vsub.f32 %v490, %v674
        %v683 = vsub.f32 %v491, %v674
        %v684 = vsub.f32 %v492, %v674
        %v685 = vsub.f32 %v493, %v674
        %v686 = vsub.f32 %v494, %v674
        %v687 = vsub.f32 %v495, %v674
        %v688 = vsub.f32 %v496, %v674
        %v689 = vsub.f32 %v497, %v674
        %v690 = vsub.f32 %v498, %v674
        %v691 = vsub.f32 %v499, %v674
        %v692 = vsub.f32 %v500, %v674
        %v693 = vsub.f32 %v501, %v674
        %v694 = vsub.f32 %v502, %v674
        %v695 = vsub.f32 %v503, %v674
        %v696 = vsub.f32 %v504, %v674
        %v697 = vsub.f32 %v505, %v674
        %v698 = vsub.f32 %v506, %v674
        %v699 = vsub.f32 %v507, %v674
        %v700 = vsub.f32 %v508, %v674
        %v701 = vsub.f32 %v509, %v674
        %v702 = vsub.f32 %v510, %v674
        %v703 = vsub.f32 %v511, %v674
        %v704 = vsub.f32 %v512, %v674
        %v705 = vsub.f32 %v513, %v674
        %v706 = vsub.f32 %v514, %v674
        %v707 = vmul.f32 %v675, %v675
        %v708 = vmul.f32 %v676, %v676
        %v709 = vmul.f32 %v677, %v677
        %v710 = vmul.f32 %v678, %v678
        %v711 = vmul.f32 %v679, %v679
        %v712 = vmul.f32 %v680, %v680
        %v713 = vmul.f32 %v681, %v681
        %v714 = vmul.f32 %v682, %v682
        %v715 = vmul.f32 %v683, %v683
        %v716 = vmul.f32 %v684, %v684
        %v717 = vmul.f32 %v685, %v685
        %v718 = vmul.f32 %v686, %v686
        %v719 = vmul.f32 %v687, %v687
        %v720 = vmul.f32 %v688, %v688
        %v721 = vmul.f32 %v689, %v689
        %v722 = vmul.f32 %v690, %v690
        %v723 = vmul.f32 %v691, %v691
        %v724 = vmul.f32 %v692, %v692
        %v725 = vmul.f32 %v693, %v693
        %v726 = vmul.f32 %v694, %v694
        %v727 = vmul.f32 %v695, %v695
        %v728 = vmul.f32 %v696, %v696
        %v729 = vmul.f32 %v697, %v697
        %v730 = vmul.f32 %v698, %v698
        %v731 = vmul.f32 %v699, %v699
        %v732 = vmul.f32 %v700, %v700
        %v733 = vmul.f32 %v701, %v701
        %v734 = vmul.f32 %v702, %v702
        %v735 = vmul.f32 %v703, %v703
        %v736 = vmul.f32 %v704, %v704
        %v737 = vmul.f32 %v705, %v705
        %v738 = vmul.f32 %v706, %v706
        %v739 = vsel %vm427, %v707, 0.0
        %v740 = vsel %vm427, %v708, 0.0
        %v741 = vadd.f32 %v739, %v740
        %v742 = vsel %vm427, %v709, 0.0
        %v743 = vadd.f32 %v741, %v742
        %v744 = vsel %vm427, %v710, 0.0
        %v745 = vadd.f32 %v743, %v744
        %v746 = vsel %vm427, %v711, 0.0
        %v747 = vadd.f32 %v745, %v746
        %v748 = vsel %vm427, %v712, 0.0
        %v749 = vadd.f32 %v747, %v748
        %v750 = vsel %vm427, %v713, 0.0
        %v751 = vadd.f32 %v749, %v750
        %v752 = vsel %vm427, %v714, 0.0
        %v753 = vadd.f32 %v751, %v752
        %v754 = vsel %vm427, %v715, 0.0
        %v755 = vadd.f32 %v753, %v754
        %v756 = vsel %vm427, %v716, 0.0
        %v757 = vadd.f32 %v755, %v756
        %v758 = vsel %vm427, %v717, 0.0
        %v759 = vadd.f32 %v757, %v758
        %v760 = vsel %vm427, %v718, 0.0
        %v761 = vadd.f32 %v759, %v760
        %v762 = vsel %vm427, %v719, 0.0
        %v763 = vadd.f32 %v761, %v762
        %v764 = vsel %vm427, %v720, 0.0
        %v765 = vadd.f32 %v763, %v764
        %v766 = vsel %vm427, %v721, 0.0
        %v767 = vadd.f32 %v765, %v766
        %v768 = vsel %vm427, %v722, 0.0
        %v769 = vadd.f32 %v767, %v768
        %v770 = vsel %vm427, %v723, 0.0
        %v771 = vadd.f32 %v769, %v770
        %v772 = vsel %vm427, %v724, 0.0
        %v773 = vadd.f32 %v771, %v772
        %v774 = vsel %vm427, %v725, 0.0
        %v775 = vadd.f32 %v773, %v774
        %v776 = vsel %vm427, %v726, 0.0
        %v777 = vadd.f32 %v775, %v776
        %v778 = vsel %vm427, %v727, 0.0
        %v779 = vadd.f32 %v777, %v778
        %v780 = vsel %vm427, %v728, 0.0
        %v781 = vadd.f32 %v779, %v780
        %v782 = vsel %vm427, %v729, 0.0
        %v783 = vadd.f32 %v781, %v782
        %v784 = vsel %vm427, %v730, 0.0
        %v785 = vadd.f32 %v783, %v784
        %v786 = vsel %vm427, %v731, 0.0
        %v787 = vadd.f32 %v785, %v786
        %v788 = vsel %vm427, %v732, 0.0
        %v789 = vadd.f32 %v787, %v788
        %v790 = vsel %vm427, %v733, 0.0
        %v791 = vadd.f32 %v789, %v790
        %v792 = vsel %vm427, %v734, 0.0
        %v793 = vadd.f32 %v791, %v792
        %v794 = vsel %vm427, %v735, 0.0
        %v795 = vadd.f32 %v793, %v794
        %v796 = vsel %vm427, %v736, 0.0
        %v797 = vadd.f32 %v795, %v796
        %v798 = vsel %vm427, %v737, 0.0
        %v799 = vadd.f32 %v797, %v798
        %v800 = vsel %vm427, %v738, 0.0
        %v801 = vadd.f32 %v799, %v800
        %v802 = vrot.slane %v801, 4
        %v803 = vadd.f32 %v801, %v802
        %v804 = vrot.slane %v803, 2
        %v805 = vadd.f32 %v803, %v804
        %v806 = vrot.slane %v805, 1
        %v807 = vadd.f32 %v805, %v806
        %v808 = vadd.f32 %v807, 0.0
        %v809 = vmul.f32 %v808, %v673
        %v810 = vadd.f32 %v809, 1e-06
        %v811 = vrsqrt.pop %v810
        %v812 = vmul.f32 %v601, %v811
        %v814 = vlaneseq
        %v815 = vshrl.u32 %v814, 7
        %v816 = vsub.s32 0, %v815
        %v817 = vrot.slane %v812, %v816
        %v819 = vmul.f32 %v675, %v817
        %v820 = vmul.f32 %v676, %v817
        %v821 = vmul.f32 %v677, %v817
        %v822 = vmul.f32 %v678, %v817
        %v823 = vmul.f32 %v679, %v817
        %v824 = vmul.f32 %v680, %v817
        %v825 = vmul.f32 %v681, %v817
        %v826 = vmul.f32 %v682, %v817
        %v827 = vmul.f32 %v683, %v817
        %v828 = vmul.f32 %v684, %v817
        %v829 = vmul.f32 %v685, %v817
        %v830 = vmul.f32 %v686, %v817
        %v831 = vmul.f32 %v687, %v817
        %v832 = vmul.f32 %v688, %v817
        %v833 = vmul.f32 %v689, %v817
        %v834 = vmul.f32 %v690, %v817
        %v835 = vmul.f32 %v691, %v817
        %v836 = vmul.f32 %v692, %v817
        %v837 = vmul.f32 %v693, %v817
        %v838 = vmul.f32 %v694, %v817
        %v839 = vmul.f32 %v695, %v817
        %v840 = vmul.f32 %v696, %v817
        %v841 = vmul.f32 %v697, %v817
        %v842 = vmul.f32 %v698, %v817
        %v843 = vmul.f32 %v699, %v817
        %v844 = vmul.f32 %v700, %v817
        %v845 = vmul.f32 %v701, %v817
        %v846 = vmul.f32 %v702, %v817
        %v847 = vmul.f32 %v703, %v817
        %v848 = vmul.f32 %v704, %v817
        %v849 = vmul.f32 %v705, %v817
        %v850 = vmul.f32 %v706, %v817
        %v852 = vlaneseq
        %v853 = vshrl.u32 %v852, 7
        %v854 = vsub.s32 0, %v853
        %v855 = vrot.slane %v602, %v854
        %v857 = vadd.f32 %v819, %v855
        %v858 = vadd.f32 %v820, %v855
        %v859 = vadd.f32 %v821, %v855
        %v860 = vadd.f32 %v822, %v855
        %v861 = vadd.f32 %v823, %v855
        %v862 = vadd.f32 %v824, %v855
        %v863 = vadd.f32 %v825, %v855
        %v864 = vadd.f32 %v826, %v855
        %v865 = vadd.f32 %v827, %v855
        %v866 = vadd.f32 %v828, %v855
        %v867 = vadd.f32 %v829, %v855
        %v868 = vadd.f32 %v830, %v855
        %v869 = vadd.f32 %v831, %v855
        %v870 = vadd.f32 %v832, %v855
        %v871 = vadd.f32 %v833, %v855
        %v872 = vadd.f32 %v834, %v855
        %v873 = vadd.f32 %v835, %v855
        %v874 = vadd.f32 %v836, %v855
        %v875 = vadd.f32 %v837, %v855
        %v876 = vadd.f32 %v838, %v855
        %v877 = vadd.f32 %v839, %v855
        %v878 = vadd.f32 %v840, %v855
        %v879 = vadd.f32 %v841, %v855
        %v880 = vadd.f32 %v842, %v855
        %v881 = vadd.f32 %v843, %v855
        %v882 = vadd.f32 %v844, %v855
        %v883 = vadd.f32 %v845, %v855
        %v884 = vadd.f32 %v846, %v855
        %v885 = vadd.f32 %v847, %v855
        %v886 = vadd.f32 %v848, %v855
        %v887 = vadd.f32 %v849, %v855
        %v888 = vadd.f32 %v850, %v855
        %v889 = vxor.u32 %v857, 2147483648
        %v890 = vxor.u32 %v858, 2147483648
        %v891 = vxor.u32 %v859, 2147483648
        %v892 = vxor.u32 %v860, 2147483648
        %v893 = vxor.u32 %v861, 2147483648
        %v894 = vxor.u32 %v862, 2147483648
        %v895 = vxor.u32 %v863, 2147483648
        %v896 = vxor.u32 %v864, 2147483648
        %v897 = vxor.u32 %v865, 2147483648
        %v898 = vxor.u32 %v866, 2147483648
        %v899 = vxor.u32 %v867, 2147483648
        %v900 = vxor.u32 %v868, 2147483648
        %v901 = vxor.u32 %v869, 2147483648
        %v902 = vxor.u32 %v870, 2147483648
        %v903 = vxor.u32 %v871, 2147483648
        %v904 = vxor.u32 %v872, 2147483648
        %v905 = vxor.u32 %v873, 2147483648
        %v906 = vxor.u32 %v874, 2147483648
        %v907 = vxor.u32 %v875, 2147483648
        %v908 = vxor.u32 %v876, 2147483648
        %v909 = vxor.u32 %v877, 2147483648
        %v910 = vxor.u32 %v878, 2147483648
        %v911 = vxor.u32 %v879, 2147483648
        %v912 = vxor.u32 %v880, 2147483648
        %v913 = vxor.u32 %v881, 2147483648
        %v914 = vxor.u32 %v882, 2147483648
        %v915 = vxor.u32 %v883, 2147483648
        %v916 = vxor.u32 %v884, 2147483648
        %v917 = vxor.u32 %v885, 2147483648
        %v918 = vxor.u32 %v886, 2147483648
        %v919 = vxor.u32 %v887, 2147483648
        %v920 = vxor.u32 %v888, 2147483648
        %v921 = vmul.f32 %v889, 1.442695
        %v922 = vpow.pop %v921
        %v923 = vmul.f32 %v890, 1.442695
        %v924 = vpow.pop %v923
        %v925 = vmul.f32 %v891, 1.442695
        %v926 = vpow.pop %v925
        %v927 = vmul.f32 %v892, 1.442695
        %v928 = vpow.pop %v927
        %v929 = vmul.f32 %v893, 1.442695
        %v930 = vpow.pop %v929
        %v931 = vmul.f32 %v894, 1.442695
        %v932 = vpow.pop %v931
        %v933 = vmul.f32 %v895, 1.442695
        %v934 = vpow.pop %v933
        %v935 = vmul.f32 %v896, 1.442695
        %v936 = vpow.pop %v935
        %v937 = vmul.f32 %v897, 1.442695
        %v938 = vpow.pop %v937
        %v939 = vmul.f32 %v898, 1.442695
        %v940 = vpow.pop %v939
        %v941 = vmul.f32 %v899, 1.442695
        %v942 = vpow.pop %v941
        %v943 = vmul.f32 %v900, 1.442695
        %v944 = vpow.pop %v943
        %v945 = vmul.f32 %v901, 1.442695
        %v946 = vpow.pop %v945
        %v947 = vmul.f32 %v902, 1.442695
        %v948 = vpow.pop %v947
        %v949 = vmul.f32 %v903, 1.442695
        %v950 = vpow.pop %v949
        %v951 = vmul.f32 %v904, 1.442695
        %v952 = vpow.pop %v951
        %v953 = vmul.f32 %v905, 1.442695
        %v954 = vpow.pop %v953
        %v955 = vmul.f32 %v906, 1.442695
        %v956 = vpow.pop %v955
        %v957 = vmul.f32 %v907, 1.442695
        %v958 = vpow.pop %v957
        %v959 = vmul.f32 %v908, 1.442695
        %v960 = vpow.pop %v959
        %v961 = vmul.f32 %v909, 1.442695
        %v962 = vpow.pop %v961
        %v963 = vmul.f32 %v910, 1.442695
        %v964 = vpow.pop %v963
        %v965 = vmul.f32 %v911, 1.442695
        %v966 = vpow.pop %v965
        %v967 = vmul.f32 %v912, 1.442695
        %v968 = vpow.pop %v967
        %v969 = vmul.f32 %v913, 1.442695
        %v970 = vpow.pop %v969
        %v971 = vmul.f32 %v914, 1.442695
        %v972 = vpow.pop %v971
        %v973 = vmul.f32 %v915, 1.442695
        %v974 = vpow.pop %v973
        %v975 = vmul.f32 %v916, 1.442695
        %v976 = vpow.pop %v975
        %v977 = vmul.f32 %v917, 1.442695
        %v978 = vpow.pop %v977
        %v979 = vmul.f32 %v918, 1.442695
        %v980 = vpow.pop %v979
        %v981 = vmul.f32 %v919, 1.442695
        %v982 = vpow.pop %v981
        %v983 = vmul.f32 %v920, 1.442695
        %v984 = vpow.pop %v983
        %v985 = vadd.f32 %v922, 1.0
        %v986 = vadd.f32 %v924, 1.0
        %v987 = vadd.f32 %v926, 1.0
        %v988 = vadd.f32 %v928, 1.0
        %v989 = vadd.f32 %v930, 1.0
        %v990 = vadd.f32 %v932, 1.0
        %v991 = vadd.f32 %v934, 1.0
        %v992 = vadd.f32 %v936, 1.0
        %v993 = vadd.f32 %v938, 1.0
        %v994 = vadd.f32 %v940, 1.0
        %v995 = vadd.f32 %v942, 1.0
        %v996 = vadd.f32 %v944, 1.0
        %v997 = vadd.f32 %v946, 1.0
        %v998 = vadd.f32 %v948, 1.0
        %v999 = vadd.f32 %v950, 1.0
        %v1000 = vadd.f32 %v952, 1.0
        %v1001 = vadd.f32 %v954, 1.0
        %v1002 = vadd.f32 %v956, 1.0
        %v1003 = vadd.f32 %v958, 1.0
        %v1004 = vadd.f32 %v960, 1.0
        %v1005 = vadd.f32 %v962, 1.0
        %v1006 = vadd.f32 %v964, 1.0
        %v1007 = vadd.f32 %v966, 1.0
        %v1008 = vadd.f32 %v968, 1.0
        %v1009 = vadd.f32 %v970, 1.0
        %v1010 = vadd.f32 %v972, 1.0
        %v1011 = vadd.f32 %v974, 1.0
        %v1012 = vadd.f32 %v976, 1.0
        %v1013 = vadd.f32 %v978, 1.0
        %v1014 = vadd.f32 %v980, 1.0
        %v1015 = vadd.f32 %v982, 1.0
        %v1016 = vadd.f32 %v984, 1.0
        %v1017 = vrcp.pop %v985
        %v1018 = vmul.f32 1.0, %v1017
        %v1019 = vrcp.pop %v986
        %v1020 = vmul.f32 1.0, %v1019
        %v1021 = vrcp.pop %v987
        %v1022 = vmul.f32 1.0, %v1021
        %v1023 = vrcp.pop %v988
        %v1024 = vmul.f32 1.0, %v1023
        %v1025 = vrcp.pop %v989
        %v1026 = vmul.f32 1.0, %v1025
        %v1027 = vrcp.pop %v990
        %v1028 = vmul.f32 1.0, %v1027
        %v1029 = vrcp.pop %v991
        %v1030 = vmul.f32 1.0, %v1029
        %v1031 = vrcp.pop %v992
        %v1032 = vmul.f32 1.0, %v1031
        %v1033 = vrcp.pop %v993
        %v1034 = vmul.f32 1.0, %v1033
        %v1035 = vrcp.pop %v994
        %v1036 = vmul.f32 1.0, %v1035
        %v1037 = vrcp.pop %v995
        %v1038 = vmul.f32 1.0, %v1037
        %v1039 = vrcp.pop %v996
        %v1040 = vmul.f32 1.0, %v1039
        %v1041 = vrcp.pop %v997
        %v1042 = vmul.f32 1.0, %v1041
        %v1043 = vrcp.pop %v998
        %v1044 = vmul.f32 1.0, %v1043
        %v1045 = vrcp.pop %v999
        %v1046 = vmul.f32 1.0, %v1045
        %v1047 = vrcp.pop %v1000
        %v1048 = vmul.f32 1.0, %v1047
        %v1049 = vrcp.pop %v1001
        %v1050 = vmul.f32 1.0, %v1049
        %v1051 = vrcp.pop %v1002
        %v1052 = vmul.f32 1.0, %v1051
        %v1053 = vrcp.pop %v1003
        %v1054 = vmul.f32 1.0, %v1053
        %v1055 = vrcp.pop %v1004
        %v1056 = vmul.f32 1.0, %v1055
        %v1057 = vrcp.pop %v1005
        %v1058 = vmul.f32 1.0, %v1057
        %v1059 = vrcp.pop %v1006
        %v1060 = vmul.f32 1.0, %v1059
        %v1061 = vrcp.pop %v1007
        %v1062 = vmul.f32 1.0, %v1061
        %v1063 = vrcp.pop %v1008
        %v1064 = vmul.f32 1.0, %v1063
        %v1065 = vrcp.pop %v1009
        %v1066 = vmul.f32 1.0, %v1065
        %v1067 = vrcp.pop %v1010
        %v1068 = vmul.f32 1.0, %v1067
        %v1069 = vrcp.pop %v1011
        %v1070 = vmul.f32 1.0, %v1069
        %v1071 = vrcp.pop %v1012
        %v1072 = vmul.f32 1.0, %v1071
        %v1073 = vrcp.pop %v1013
        %v1074 = vmul.f32 1.0, %v1073
        %v1075 = vrcp.pop %v1014
        %v1076 = vmul.f32 1.0, %v1075
        %v1077 = vrcp.pop %v1015
        %v1078 = vmul.f32 1.0, %v1077
        %v1079 = vrcp.pop %v1016
        %v1080 = vmul.f32 1.0, %v1079
        %v1081 = vmul.f32 %v857, %v1018
        %v1082 = vmul.f32 %v858, %v1020
        %v1083 = vmul.f32 %v859, %v1022
        %v1084 = vmul.f32 %v860, %v1024
        %v1085 = vmul.f32 %v861, %v1026
        %v1086 = vmul.f32 %v862, %v1028
        %v1087 = vmul.f32 %v863, %v1030
        %v1088 = vmul.f32 %v864, %v1032
        %v1089 = vmul.f32 %v865, %v1034
        %v1090 = vmul.f32 %v866, %v1036
        %v1091 = vmul.f32 %v867, %v1038
        %v1092 = vmul.f32 %v868, %v1040
        %v1093 = vmul.f32 %v869, %v1042
        %v1094 = vmul.f32 %v870, %v1044
        %v1095 = vmul.f32 %v871, %v1046
        %v1096 = vmul.f32 %v872, %v1048
        %v1097 = vmul.f32 %v873, %v1050
        %v1098 = vmul.f32 %v874, %v1052
        %v1099 = vmul.f32 %v875, %v1054
        %v1100 = vmul.f32 %v876, %v1056
        %v1101 = vmul.f32 %v877, %v1058
        %v1102 = vmul.f32 %v878, %v1060
        %v1103 = vmul.f32 %v879, %v1062
        %v1104 = vmul.f32 %v880, %v1064
        %v1105 = vmul.f32 %v881, %v1066
        %v1106 = vmul.f32 %v882, %v1068
        %v1107 = vmul.f32 %v883, %v1070
        %v1108 = vmul.f32 %v884, %v1072
        %v1109 = vmul.f32 %v885, %v1074
        %v1110 = vmul.f32 %v886, %v1076
        %v1111 = vmul.f32 %v887, %v1078
        %v1112 = vmul.f32 %v888, %v1080
        %s1113 = scalar_lea.vmem [#allocation2], 24
        %1114 = vst.msk [vmem:[%s1113 + $0x1] sm:$0xff] %vm427, %v1081
        %1115 = vst.msk [vmem:[%s1113 + $0x9] sm:$0xff] %vm427, %v1082
        %1116 = vst.msk [vmem:[%s1113 + $0x19] sm:$0xff] %vm427, %v1083
        %1117 = vst.msk [vmem:[%s1113 + $0x21] sm:$0xff] %vm427, %v1084
        %1118 = vst.msk [vmem:[%s1113 + $0x31] sm:$0xff] %vm427, %v1085
        %1119 = vst.msk [vmem:[%s1113 + $0x39] sm:$0xff] %vm427, %v1086
        %1120 = vst.msk [vmem:[%s1113 + $0x49] sm:$0xff] %vm427, %v1087
        %1121 = vst.msk [vmem:[%s1113 + $0x51] sm:$0xff] %vm427, %v1088
        %1122 = vst.msk [vmem:[%s1113 + $0x61] sm:$0xff] %vm427, %v1089
        %1123 = vst.msk [vmem:[%s1113 + $0x69] sm:$0xff] %vm427, %v1090
        %1124 = vst.msk [vmem:[%s1113 + $0x79] sm:$0xff] %vm427, %v1091
        %1125 = vst.msk [vmem:[%s1113 + $0x81] sm:$0xff] %vm427, %v1092
        %1126 = vst.msk [vmem:[%s1113 + $0x91] sm:$0xff] %vm427, %v1093
        %1127 = vst.msk [vmem:[%s1113 + $0x99] sm:$0xff] %vm427, %v1094
        %1128 = vst.msk [vmem:[%s1113 + $0xa9] sm:$0xff] %vm427, %v1095
        %1129 = vst.msk [vmem:[%s1113 + $0xb1] sm:$0xff] %vm427, %v1096
        %1130 = vst.msk [vmem:[%s1113 + $0xc1] sm:$0xff] %vm427, %v1097
        %1131 = vst.msk [vmem:[%s1113 + $0xc9] sm:$0xff] %vm427, %v1098
        %1132 = vst.msk [vmem:[%s1113 + $0xd9] sm:$0xff] %vm427, %v1099
        %1133 = vst.msk [vmem:[%s1113 + $0xe1] sm:$0xff] %vm427, %v1100
        %1134 = vst.msk [vmem:[%s1113 + $0xf1] sm:$0xff] %vm427, %v1101
        %1135 = vst.msk [vmem:[%s1113 + $0xf9] sm:$0xff] %vm427, %v1102
        %1136 = vst.msk [vmem:[%s1113 + $0x109] sm:$0xff] %vm427, %v1103
        %1137 = vst.msk [vmem:[%s1113 + $0x111] sm:$0xff] %vm427, %v1104
        %1138 = vst.msk [vmem:[%s1113 + $0x121] sm:$0xff] %vm427, %v1105
        %1139 = vst.msk [vmem:[%s1113 + $0x129] sm:$0xff] %vm427, %v1106
        %1140 = vst.msk [vmem:[%s1113 + $0x139] sm:$0xff] %vm427, %v1107
        %1141 = vst.msk [vmem:[%s1113 + $0x141] sm:$0xff] %vm427, %v1108
        %1142 = vst.msk [vmem:[%s1113 + $0x151] sm:$0xff] %vm427, %v1109
        %1143 = vst.msk [vmem:[%s1113 + $0x159] sm:$0xff] %vm427, %v1110
        %1144 = vst.msk [vmem:[%s1113 + $0x169] sm:$0xff] %vm427, %v1111
        %1145 = vst.msk [vmem:[%s1113 + $0x171] sm:$0xff] %vm427, %v1112
        %v1146 = vld [vmem:[#allocation2] sm:$0xff]
        %v1147 = vld [vmem:[#allocation2 + $0x8] sm:$0xff]
        %v1148 = vld [vmem:[#allocation2 + $0x18] sm:$0xff]
        %v1149 = vld [vmem:[#allocation2 + $0x20] sm:$0xff]
        %v1150 = vld [vmem:[#allocation2 + $0x30] sm:$0xff]
        %v1151 = vld [vmem:[#allocation2 + $0x38] sm:$0xff]
        %v1152 = vld [vmem:[#allocation2 + $0x48] sm:$0xff]
        %v1153 = vld [vmem:[#allocation2 + $0x50] sm:$0xff]
        %v1154 = vld [vmem:[#allocation2 + $0x60] sm:$0xff]
        %v1155 = vld [vmem:[#allocation2 + $0x68] sm:$0xff]
        %v1156 = vld [vmem:[#allocation2 + $0x78] sm:$0xff]
        %v1157 = vld [vmem:[#allocation2 + $0x80] sm:$0xff]
        %v1158 = vld [vmem:[#allocation2 + $0x90] sm:$0xff]
        %v1159 = vld [vmem:[#allocation2 + $0x98] sm:$0xff]
        %v1160 = vld [vmem:[#allocation2 + $0xa8] sm:$0xff]
        %v1161 = vld [vmem:[#allocation2 + $0xb0] sm:$0xff]
        %v1162 = vld [vmem:[#allocation2 + $0xc0] sm:$0xff]
        %v1163 = vld [vmem:[#allocation2 + $0xc8] sm:$0xff]
        %v1164 = vld [vmem:[#allocation2 + $0xd8] sm:$0xff]
        %v1165 = vld [vmem:[#allocation2 + $0xe0] sm:$0xff]
        %v1166 = vld [vmem:[#allocation2 + $0xf0] sm:$0xff]
        %v1167 = vld [vmem:[#allocation2 + $0xf8] sm:$0xff]
        %v1168 = vld [vmem:[#allocation2 + $0x108] sm:$0xff]
        %v1169 = vld [vmem:[#allocation2 + $0x110] sm:$0xff]
        %v1170 = vld [vmem:[#allocation2 + $0x120] sm:$0xff]
        %v1171 = vld [vmem:[#allocation2 + $0x128] sm:$0xff]
        %v1172 = vld [vmem:[#allocation2 + $0x138] sm:$0xff]
        %v1173 = vld [vmem:[#allocation2 + $0x140] sm:$0xff]
        %v1174 = vld [vmem:[#allocation2 + $0x150] sm:$0xff]
        %v1175 = vld [vmem:[#allocation2 + $0x158] sm:$0xff]
        %v1176 = vld [vmem:[#allocation2 + $0x168] sm:$0xff]
        %v1177 = vld [vmem:[#allocation2 + $0x170] sm:$0xff]
        %1178 = vst.msk [vmem:[#allocation3] sm:$0xff] %vm427, %v1146
        %1179 = vst.msk [vmem:[#allocation3 + $0x18] sm:$0xff] %vm427, %v1147
        %1180 = vst.msk [vmem:[#allocation3 + $0x30] sm:$0xff] %vm427, %v1148
        %1181 = vst.msk [vmem:[#allocation3 + $0x48] sm:$0xff] %vm427, %v1149
        %1182 = vst.msk [vmem:[#allocation3 + $0x60] sm:$0xff] %vm427, %v1150
        %1183 = vst.msk [vmem:[#allocation3 + $0x78] sm:$0xff] %vm427, %v1151
        %1184 = vst.msk [vmem:[#allocation3 + $0x90] sm:$0xff] %vm427, %v1152
        %1185 = vst.msk [vmem:[#allocation3 + $0xa8] sm:$0xff] %vm427, %v1153
        %1186 = vst.msk [vmem:[#allocation3 + $0xc0] sm:$0xff] %vm427, %v1154
        %1187 = vst.msk [vmem:[#allocation3 + $0xd8] sm:$0xff] %vm427, %v1155
        %1188 = vst.msk [vmem:[#allocation3 + $0xf0] sm:$0xff] %vm427, %v1156
        %1189 = vst.msk [vmem:[#allocation3 + $0x108] sm:$0xff] %vm427, %v1157
        %1190 = vst.msk [vmem:[#allocation3 + $0x120] sm:$0xff] %vm427, %v1158
        %1191 = vst.msk [vmem:[#allocation3 + $0x138] sm:$0xff] %vm427, %v1159
        %1192 = vst.msk [vmem:[#allocation3 + $0x150] sm:$0xff] %vm427, %v1160
        %1193 = vst.msk [vmem:[#allocation3 + $0x168] sm:$0xff] %vm427, %v1161
        %1194 = vst.msk [vmem:[#allocation3 + $0x180] sm:$0xff] %vm427, %v1162
        %1195 = vst.msk [vmem:[#allocation3 + $0x198] sm:$0xff] %vm427, %v1163
        %1196 = vst.msk [vmem:[#allocation3 + $0x1b0] sm:$0xff] %vm427, %v1164
        %1197 = vst.msk [vmem:[#allocation3 + $0x1c8] sm:$0xff] %vm427, %v1165
        %1198 = vst.msk [vmem:[#allocation3 + $0x1e0] sm:$0xff] %vm427, %v1166
        %1199 = vst.msk [vmem:[#allocation3 + $0x1f8] sm:$0xff] %vm427, %v1167
        %1200 = vst.msk [vmem:[#allocation3 + $0x210] sm:$0xff] %vm427, %v1168
        %1201 = vst.msk [vmem:[#allocation3 + $0x228] sm:$0xff] %vm427, %v1169
        %1202 = vst.msk [vmem:[#allocation3 + $0x240] sm:$0xff] %vm427, %v1170
        %1203 = vst.msk [vmem:[#allocation3 + $0x258] sm:$0xff] %vm427, %v1171
        %1204 = vst.msk [vmem:[#allocation3 + $0x270] sm:$0xff] %vm427, %v1172
        %1205 = vst.msk [vmem:[#allocation3 + $0x288] sm:$0xff] %vm427, %v1173
        %1206 = vst.msk [vmem:[#allocation3 + $0x2a0] sm:$0xff] %vm427, %v1174
        %1207 = vst.msk [vmem:[#allocation3 + $0x2b8] sm:$0xff] %vm427, %v1175
        %1208 = vst.msk [vmem:[#allocation3 + $0x2d0] sm:$0xff] %vm427, %v1176
        %1209 = vst.msk [vmem:[#allocation3 + $0x2e8] sm:$0xff] %vm427, %v1177
        %v1210 = vld [vmem:[#allocation2 + $0x1] sm:$0xff]
        %v1211 = vld [vmem:[#allocation2 + $0x9] sm:$0xff]
        %v1212 = vld [vmem:[#allocation2 + $0x19] sm:$0xff]
        %v1213 = vld [vmem:[#allocation2 + $0x21] sm:$0xff]
        %v1214 = vld [vmem:[#allocation2 + $0x31] sm:$0xff]
        %v1215 = vld [vmem:[#allocation2 + $0x39] sm:$0xff]
        %v1216 = vld [vmem:[#allocation2 + $0x49] sm:$0xff]
        %v1217 = vld [vmem:[#allocation2 + $0x51] sm:$0xff]
        %v1218 = vld [vmem:[#allocation2 + $0x61] sm:$0xff]
        %v1219 = vld [vmem:[#allocation2 + $0x69] sm:$0xff]
        %v1220 = vld [vmem:[#allocation2 + $0x79] sm:$0xff]
        %v1221 = vld [vmem:[#allocation2 + $0x81] sm:$0xff]
        %v1222 = vld [vmem:[#allocation2 + $0x91] sm:$0xff]
        %v1223 = vld [vmem:[#allocation2 + $0x99] sm:$0xff]
        %v1224 = vld [vmem:[#allocation2 + $0xa9] sm:$0xff]
        %v1225 = vld [vmem:[#allocation2 + $0xb1] sm:$0xff]
        %v1226 = vld [vmem:[#allocation2 + $0xc1] sm:$0xff]
        %v1227 = vld [vmem:[#allocation2 + $0xc9] sm:$0xff]
        %v1228 = vld [vmem:[#allocation2 + $0xd9] sm:$0xff]
        %v1229 = vld [vmem:[#allocation2 + $0xe1] sm:$0xff]
        %v1230 = vld [vmem:[#allocation2 + $0xf1] sm:$0xff]
        %v1231 = vld [vmem:[#allocation2 + $0xf9] sm:$0xff]
        %v1232 = vld [vmem:[#allocation2 + $0x109] sm:$0xff]
        %v1233 = vld [vmem:[#allocation2 + $0x111] sm:$0xff]
        %v1234 = vld [vmem:[#allocation2 + $0x121] sm:$0xff]
        %v1235 = vld [vmem:[#allocation2 + $0x129] sm:$0xff]
        %v1236 = vld [vmem:[#allocation2 + $0x139] sm:$0xff]
        %v1237 = vld [vmem:[#allocation2 + $0x141] sm:$0xff]
        %v1238 = vld [vmem:[#allocation2 + $0x151] sm:$0xff]
        %v1239 = vld [vmem:[#allocation2 + $0x159] sm:$0xff]
        %v1240 = vld [vmem:[#allocation2 + $0x169] sm:$0xff]
        %v1241 = vld [vmem:[#allocation2 + $0x171] sm:$0xff]
        %1274 = vrot.lane.b32.xlu0 %v1210, 32
        %v1275 = vpop.permute.xlu0 %1274
        %1276 = vrot.lane.b32.xlu0 %v1211, 32
        %v1277 = vpop.permute.xlu0 %1276
        %1278 = vrot.lane.b32.xlu0 %v1212, 32
        %v1279 = vpop.permute.xlu0 %1278
        %1280 = vrot.lane.b32.xlu0 %v1213, 32
        %v1281 = vpop.permute.xlu0 %1280
        %1282 = vrot.lane.b32.xlu0 %v1214, 32
        %v1283 = vpop.permute.xlu0 %1282
        %1284 = vrot.lane.b32.xlu0 %v1215, 32
        %v1285 = vpop.permute.xlu0 %1284
        %1286 = vrot.lane.b32.xlu0 %v1216, 32
        %v1287 = vpop.permute.xlu0 %1286
        %1288 = vrot.lane.b32.xlu0 %v1217, 32
        %v1289 = vpop.permute.xlu0 %1288
        %1290 = vrot.lane.b32.xlu0 %v1218, 32
        %v1291 = vpop.permute.xlu0 %1290
        %1292 = vrot.lane.b32.xlu0 %v1219, 32
        %v1293 = vpop.permute.xlu0 %1292
        %1294 = vrot.lane.b32.xlu0 %v1220, 32
        %v1295 = vpop.permute.xlu0 %1294
        %1296 = vrot.lane.b32.xlu0 %v1221, 32
        %v1297 = vpop.permute.xlu0 %1296
        %1298 = vrot.lane.b32.xlu0 %v1222, 32
        %v1299 = vpop.permute.xlu0 %1298
        %1300 = vrot.lane.b32.xlu0 %v1223, 32
        %v1301 = vpop.permute.xlu0 %1300
        %1302 = vrot.lane.b32.xlu0 %v1224, 32
        %v1303 = vpop.permute.xlu0 %1302
        %1304 = vrot.lane.b32.xlu0 %v1225, 32
        %v1305 = vpop.permute.xlu0 %1304
        %1306 = vrot.lane.b32.xlu0 %v1226, 32
        %v1307 = vpop.permute.xlu0 %1306
        %1308 = vrot.lane.b32.xlu0 %v1227, 32
        %v1309 = vpop.permute.xlu0 %1308
        %1310 = vrot.lane.b32.xlu0 %v1228, 32
        %v1311 = vpop.permute.xlu0 %1310
        %1312 = vrot.lane.b32.xlu0 %v1229, 32
        %v1313 = vpop.permute.xlu0 %1312
        %1314 = vrot.lane.b32.xlu0 %v1230, 32
        %v1315 = vpop.permute.xlu0 %1314
        %1316 = vrot.lane.b32.xlu0 %v1231, 32
        %v1317 = vpop.permute.xlu0 %1316
        %1318 = vrot.lane.b32.xlu0 %v1232, 32
        %v1319 = vpop.permute.xlu0 %1318
        %1320 = vrot.lane.b32.xlu0 %v1233, 32
        %v1321 = vpop.permute.xlu0 %1320
        %1322 = vrot.lane.b32.xlu0 %v1234, 32
        %v1323 = vpop.permute.xlu0 %1322
        %1324 = vrot.lane.b32.xlu0 %v1235, 32
        %v1325 = vpop.permute.xlu0 %1324
        %1326 = vrot.lane.b32.xlu0 %v1236, 32
        %v1327 = vpop.permute.xlu0 %1326
        %1328 = vrot.lane.b32.xlu0 %v1237, 32
        %v1329 = vpop.permute.xlu0 %1328
        %1330 = vrot.lane.b32.xlu0 %v1238, 32
        %v1331 = vpop.permute.xlu0 %1330
        %1332 = vrot.lane.b32.xlu0 %v1239, 32
        %v1333 = vpop.permute.xlu0 %1332
        %1334 = vrot.lane.b32.xlu0 %v1240, 32
        %v1335 = vpop.permute.xlu0 %1334
        %1336 = vrot.lane.b32.xlu0 %v1241, 32
        %v1337 = vpop.permute.xlu0 %1336
        %vm1370 = vcmask 523520
        %1371 = vst.msk [vmem:[#allocation3] sm:$0xff] %vm1370, %v1275
        %1372 = vst.msk [vmem:[#allocation3 + $0x18] sm:$0xff] %vm1370, %v1277
        %1373 = vst.msk [vmem:[#allocation3 + $0x30] sm:$0xff] %vm1370, %v1279
        %1374 = vst.msk [vmem:[#allocation3 + $0x48] sm:$0xff] %vm1370, %v1281
        %1375 = vst.msk [vmem:[#allocation3 + $0x60] sm:$0xff] %vm1370, %v1283
        %1376 = vst.msk [vmem:[#allocation3 + $0x78] sm:$0xff] %vm1370, %v1285
        %1377 = vst.msk [vmem:[#allocation3 + $0x90] sm:$0xff] %vm1370, %v1287
        %1378 = vst.msk [vmem:[#allocation3 + $0xa8] sm:$0xff] %vm1370, %v1289
        %1379 = vst.msk [vmem:[#allocation3 + $0xc0] sm:$0xff] %vm1370, %v1291
        %1380 = vst.msk [vmem:[#allocation3 + $0xd8] sm:$0xff] %vm1370, %v1293
        %1381 = vst.msk [vmem:[#allocation3 + $0xf0] sm:$0xff] %vm1370, %v1295
        %1382 = vst.msk [vmem:[#allocation3 + $0x108] sm:$0xff] %vm1370, %v1297
        %1383 = vst.msk [vmem:[#allocation3 + $0x120] sm:$0xff] %vm1370, %v1299
        %1384 = vst.msk [vmem:[#allocation3 + $0x138] sm:$0xff] %vm1370, %v1301
        %1385 = vst.msk [vmem:[#allocation3 + $0x150] sm:$0xff] %vm1370, %v1303
        %1386 = vst.msk [vmem:[#allocation3 + $0x168] sm:$0xff] %vm1370, %v1305
        %1387 = vst.msk [vmem:[#allocation3 + $0x180] sm:$0xff] %vm1370, %v1307
        %1388 = vst.msk [vmem:[#allocation3 + $0x198] sm:$0xff] %vm1370, %v1309
        %1389 = vst.msk [vmem:[#allocation3 + $0x1b0] sm:$0xff] %vm1370, %v1311
        %1390 = vst.msk [vmem:[#allocation3 + $0x1c8] sm:$0xff] %vm1370, %v1313
        %1391 = vst.msk [vmem:[#allocation3 + $0x1e0] sm:$0xff] %vm1370, %v1315
        %1392 = vst.msk [vmem:[#allocation3 + $0x1f8] sm:$0xff] %vm1370, %v1317
        %1393 = vst.msk [vmem:[#allocation3 + $0x210] sm:$0xff] %vm1370, %v1319
        %1394 = vst.msk [vmem:[#allocation3 + $0x228] sm:$0xff] %vm1370, %v1321
        %1395 = vst.msk [vmem:[#allocation3 + $0x240] sm:$0xff] %vm1370, %v1323
        %1396 = vst.msk [vmem:[#allocation3 + $0x258] sm:$0xff] %vm1370, %v1325
        %1397 = vst.msk [vmem:[#allocation3 + $0x270] sm:$0xff] %vm1370, %v1327
        %1398 = vst.msk [vmem:[#allocation3 + $0x288] sm:$0xff] %vm1370, %v1329
        %1399 = vst.msk [vmem:[#allocation3 + $0x2a0] sm:$0xff] %vm1370, %v1331
        %1400 = vst.msk [vmem:[#allocation3 + $0x2b8] sm:$0xff] %vm1370, %v1333
        %1401 = vst.msk [vmem:[#allocation3 + $0x2d0] sm:$0xff] %vm1370, %v1335
        %1402 = vst.msk [vmem:[#allocation3 + $0x2e8] sm:$0xff] %vm1370, %v1337
        %v1403 = vld [vmem:[#allocation2 + $0x2] sm:$0xff]
        %v1404 = vld [vmem:[#allocation2 + $0xa] sm:$0xff]
        %v1405 = vld [vmem:[#allocation2 + $0x1a] sm:$0xff]
        %v1406 = vld [vmem:[#allocation2 + $0x22] sm:$0xff]
        %v1407 = vld [vmem:[#allocation2 + $0x32] sm:$0xff]
        %v1408 = vld [vmem:[#allocation2 + $0x3a] sm:$0xff]
        %v1409 = vld [vmem:[#allocation2 + $0x4a] sm:$0xff]
        %v1410 = vld [vmem:[#allocation2 + $0x52] sm:$0xff]
        %v1411 = vld [vmem:[#allocation2 + $0x62] sm:$0xff]
        %v1412 = vld [vmem:[#allocation2 + $0x6a] sm:$0xff]
        %v1413 = vld [vmem:[#allocation2 + $0x7a] sm:$0xff]
        %v1414 = vld [vmem:[#allocation2 + $0x82] sm:$0xff]
        %v1415 = vld [vmem:[#allocation2 + $0x92] sm:$0xff]
        %v1416 = vld [vmem:[#allocation2 + $0x9a] sm:$0xff]
        %v1417 = vld [vmem:[#allocation2 + $0xaa] sm:$0xff]
        %v1418 = vld [vmem:[#allocation2 + $0xb2] sm:$0xff]
        %v1419 = vld [vmem:[#allocation2 + $0xc2] sm:$0xff]
        %v1420 = vld [vmem:[#allocation2 + $0xca] sm:$0xff]
        %v1421 = vld [vmem:[#allocation2 + $0xda] sm:$0xff]
        %v1422 = vld [vmem:[#allocation2 + $0xe2] sm:$0xff]
        %v1423 = vld [vmem:[#allocation2 + $0xf2] sm:$0xff]
        %v1424 = vld [vmem:[#allocation2 + $0xfa] sm:$0xff]
        %v1425 = vld [vmem:[#allocation2 + $0x10a] sm:$0xff]
        %v1426 = vld [vmem:[#allocation2 + $0x112] sm:$0xff]
        %v1427 = vld [vmem:[#allocation2 + $0x122] sm:$0xff]
        %v1428 = vld [vmem:[#allocation2 + $0x12a] sm:$0xff]
        %v1429 = vld [vmem:[#allocation2 + $0x13a] sm:$0xff]
        %v1430 = vld [vmem:[#allocation2 + $0x142] sm:$0xff]
        %v1431 = vld [vmem:[#allocation2 + $0x152] sm:$0xff]
        %v1432 = vld [vmem:[#allocation2 + $0x15a] sm:$0xff]
        %v1433 = vld [vmem:[#allocation2 + $0x16a] sm:$0xff]
        %v1434 = vld [vmem:[#allocation2 + $0x172] sm:$0xff]
        %1467 = vrot.lane.b32.xlu0 %v1403, 64
        %v1468 = vpop.permute.xlu0 %1467
        %1469 = vrot.lane.b32.xlu0 %v1404, 64
        %v1470 = vpop.permute.xlu0 %1469
        %1471 = vrot.lane.b32.xlu0 %v1405, 64
        %v1472 = vpop.permute.xlu0 %1471
        %1473 = vrot.lane.b32.xlu0 %v1406, 64
        %v1474 = vpop.permute.xlu0 %1473
        %1475 = vrot.lane.b32.xlu0 %v1407, 64
        %v1476 = vpop.permute.xlu0 %1475
        %1477 = vrot.lane.b32.xlu0 %v1408, 64
        %v1478 = vpop.permute.xlu0 %1477
        %1479 = vrot.lane.b32.xlu0 %v1409, 64
        %v1480 = vpop.permute.xlu0 %1479
        %1481 = vrot.lane.b32.xlu0 %v1410, 64
        %v1482 = vpop.permute.xlu0 %1481
        %1483 = vrot.lane.b32.xlu0 %v1411, 64
        %v1484 = vpop.permute.xlu0 %1483
        %1485 = vrot.lane.b32.xlu0 %v1412, 64
        %v1486 = vpop.permute.xlu0 %1485
        %1487 = vrot.lane.b32.xlu0 %v1413, 64
        %v1488 = vpop.permute.xlu0 %1487
        %1489 = vrot.lane.b32.xlu0 %v1414, 64
        %v1490 = vpop.permute.xlu0 %1489
        %1491 = vrot.lane.b32.xlu0 %v1415, 64
        %v1492 = vpop.permute.xlu0 %1491
        %1493 = vrot.lane.b32.xlu0 %v1416, 64
        %v1494 = vpop.permute.xlu0 %1493
        %1495 = vrot.lane.b32.xlu0 %v1417, 64
        %v1496 = vpop.permute.xlu0 %1495
        %1497 = vrot.lane.b32.xlu0 %v1418, 64
        %v1498 = vpop.permute.xlu0 %1497
        %1499 = vrot.lane.b32.xlu0 %v1419, 64
        %v1500 = vpop.permute.xlu0 %1499
        %1501 = vrot.lane.b32.xlu0 %v1420, 64
        %v1502 = vpop.permute.xlu0 %1501
        %1503 = vrot.lane.b32.xlu0 %v1421, 64
        %v1504 = vpop.permute.xlu0 %1503
        %1505 = vrot.lane.b32.xlu0 %v1422, 64
        %v1506 = vpop.permute.xlu0 %1505
        %1507 = vrot.lane.b32.xlu0 %v1423, 64
        %v1508 = vpop.permute.xlu0 %1507
        %1509 = vrot.lane.b32.xlu0 %v1424, 64
        %v1510 = vpop.permute.xlu0 %1509
        %1511 = vrot.lane.b32.xlu0 %v1425, 64
        %v1512 = vpop.permute.xlu0 %1511
        %1513 = vrot.lane.b32.xlu0 %v1426, 64
        %v1514 = vpop.permute.xlu0 %1513
        %1515 = vrot.lane.b32.xlu0 %v1427, 64
        %v1516 = vpop.permute.xlu0 %1515
        %1517 = vrot.lane.b32.xlu0 %v1428, 64
        %v1518 = vpop.permute.xlu0 %1517
        %1519 = vrot.lane.b32.xlu0 %v1429, 64
        %v1520 = vpop.permute.xlu0 %1519
        %1521 = vrot.lane.b32.xlu0 %v1430, 64
        %v1522 = vpop.permute.xlu0 %1521
        %1523 = vrot.lane.b32.xlu0 %v1431, 64
        %v1524 = vpop.permute.xlu0 %1523
        %1525 = vrot.lane.b32.xlu0 %v1432, 64
        %v1526 = vpop.permute.xlu0 %1525
        %1527 = vrot.lane.b32.xlu0 %v1433, 64
        %v1528 = vpop.permute.xlu0 %1527
        %1529 = vrot.lane.b32.xlu0 %v1434, 64
        %v1530 = vpop.permute.xlu0 %1529
        %vm1563 = vcmask 785920
        %1564 = vst.msk [vmem:[#allocation3] sm:$0xff] %vm1563, %v1468
        %1565 = vst.msk [vmem:[#allocation3 + $0x18] sm:$0xff] %vm1563, %v1470
        %1566 = vst.msk [vmem:[#allocation3 + $0x30] sm:$0xff] %vm1563, %v1472
        %1567 = vst.msk [vmem:[#allocation3 + $0x48] sm:$0xff] %vm1563, %v1474
        %1568 = vst.msk [vmem:[#allocation3 + $0x60] sm:$0xff] %vm1563, %v1476
        %1569 = vst.msk [vmem:[#allocation3 + $0x78] sm:$0xff] %vm1563, %v1478
        %1570 = vst.msk [vmem:[#allocation3 + $0x90] sm:$0xff] %vm1563, %v1480
        %1571 = vst.msk [vmem:[#allocation3 + $0xa8] sm:$0xff] %vm1563, %v1482
        %1572 = vst.msk [vmem:[#allocation3 + $0xc0] sm:$0xff] %vm1563, %v1484
        %1573 = vst.msk [vmem:[#allocation3 + $0xd8] sm:$0xff] %vm1563, %v1486
        %1574 = vst.msk [vmem:[#allocation3 + $0xf0] sm:$0xff] %vm1563, %v1488
        %1575 = vst.msk [vmem:[#allocation3 + $0x108] sm:$0xff] %vm1563, %v1490
        %1576 = vst.msk [vmem:[#allocation3 + $0x120] sm:$0xff] %vm1563, %v1492
        %1577 = vst.msk [vmem:[#allocation3 + $0x138] sm:$0xff] %vm1563, %v1494
        %1578 = vst.msk [vmem:[#allocation3 + $0x150] sm:$0xff] %vm1563, %v1496
        %1579 = vst.msk [vmem:[#allocation3 + $0x168] sm:$0xff] %vm1563, %v1498
        %1580 = vst.msk [vmem:[#allocation3 + $0x180] sm:$0xff] %vm1563, %v1500
        %1581 = vst.msk [vmem:[#allocation3 + $0x198] sm:$0xff] %vm1563, %v1502
        %1582 = vst.msk [vmem:[#allocation3 + $0x1b0] sm:$0xff] %vm1563, %v1504
        %1583 = vst.msk [vmem:[#allocation3 + $0x1c8] sm:$0xff] %vm1563, %v1506
        %1584 = vst.msk [vmem:[#allocation3 + $0x1e0] sm:$0xff] %vm1563, %v1508
        %1585 = vst.msk [vmem:[#allocation3 + $0x1f8] sm:$0xff] %vm1563, %v1510
        %1586 = vst.msk [vmem:[#allocation3 + $0x210] sm:$0xff] %vm1563, %v1512
        %1587 = vst.msk [vmem:[#allocation3 + $0x228] sm:$0xff] %vm1563, %v1514
        %1588 = vst.msk [vmem:[#allocation3 + $0x240] sm:$0xff] %vm1563, %v1516
        %1589 = vst.msk [vmem:[#allocation3 + $0x258] sm:$0xff] %vm1563, %v1518
        %1590 = vst.msk [vmem:[#allocation3 + $0x270] sm:$0xff] %vm1563, %v1520
        %1591 = vst.msk [vmem:[#allocation3 + $0x288] sm:$0xff] %vm1563, %v1522
        %1592 = vst.msk [vmem:[#allocation3 + $0x2a0] sm:$0xff] %vm1563, %v1524
        %1593 = vst.msk [vmem:[#allocation3 + $0x2b8] sm:$0xff] %vm1563, %v1526
        %1594 = vst.msk [vmem:[#allocation3 + $0x2d0] sm:$0xff] %vm1563, %v1528
        %1595 = vst.msk [vmem:[#allocation3 + $0x2e8] sm:$0xff] %vm1563, %v1530
        %v1596 = vld [vmem:[%s1113] sm:$0xff]
        %v1597 = vld [vmem:[%s1113 + $0x8] sm:$0xff]
        %v1598 = vld [vmem:[%s1113 + $0x18] sm:$0xff]
        %v1599 = vld [vmem:[%s1113 + $0x20] sm:$0xff]
        %v1600 = vld [vmem:[%s1113 + $0x30] sm:$0xff]
        %v1601 = vld [vmem:[%s1113 + $0x38] sm:$0xff]
        %v1602 = vld [vmem:[%s1113 + $0x48] sm:$0xff]
        %v1603 = vld [vmem:[%s1113 + $0x50] sm:$0xff]
        %v1604 = vld [vmem:[%s1113 + $0x60] sm:$0xff]
        %v1605 = vld [vmem:[%s1113 + $0x68] sm:$0xff]
        %v1606 = vld [vmem:[%s1113 + $0x78] sm:$0xff]
        %v1607 = vld [vmem:[%s1113 + $0x80] sm:$0xff]
        %v1608 = vld [vmem:[%s1113 + $0x90] sm:$0xff]
        %v1609 = vld [vmem:[%s1113 + $0x98] sm:$0xff]
        %v1610 = vld [vmem:[%s1113 + $0xa8] sm:$0xff]
        %v1611 = vld [vmem:[%s1113 + $0xb0] sm:$0xff]
        %v1612 = vld [vmem:[%s1113 + $0xc0] sm:$0xff]
        %v1613 = vld [vmem:[%s1113 + $0xc8] sm:$0xff]
        %v1614 = vld [vmem:[%s1113 + $0xd8] sm:$0xff]
        %v1615 = vld [vmem:[%s1113 + $0xe0] sm:$0xff]
        %v1616 = vld [vmem:[%s1113 + $0xf0] sm:$0xff]
        %v1617 = vld [vmem:[%s1113 + $0xf8] sm:$0xff]
        %v1618 = vld [vmem:[%s1113 + $0x108] sm:$0xff]
        %v1619 = vld [vmem:[%s1113 + $0x110] sm:$0xff]
        %v1620 = vld [vmem:[%s1113 + $0x120] sm:$0xff]
        %v1621 = vld [vmem:[%s1113 + $0x128] sm:$0xff]
        %v1622 = vld [vmem:[%s1113 + $0x138] sm:$0xff]
        %v1623 = vld [vmem:[%s1113 + $0x140] sm:$0xff]
        %v1624 = vld [vmem:[%s1113 + $0x150] sm:$0xff]
        %v1625 = vld [vmem:[%s1113 + $0x158] sm:$0xff]
        %v1626 = vld [vmem:[%s1113 + $0x168] sm:$0xff]
        %v1627 = vld [vmem:[%s1113 + $0x170] sm:$0xff]
        %1660 = vrot.lane.b32.xlu0 %v1596, 96
        %v1661 = vpop.permute.xlu0 %1660
        %1662 = vrot.lane.b32.xlu0 %v1597, 96
        %v1663 = vpop.permute.xlu0 %1662
        %1664 = vrot.lane.b32.xlu0 %v1598, 96
        %v1665 = vpop.permute.xlu0 %1664
        %1666 = vrot.lane.b32.xlu0 %v1599, 96
        %v1667 = vpop.permute.xlu0 %1666
        %1668 = vrot.lane.b32.xlu0 %v1600, 96
        %v1669 = vpop.permute.xlu0 %1668
        %1670 = vrot.lane.b32.xlu0 %v1601, 96
        %v1671 = vpop.permute.xlu0 %1670
        %1672 = vrot.lane.b32.xlu0 %v1602, 96
        %v1673 = vpop.permute.xlu0 %1672
        %1674 = vrot.lane.b32.xlu0 %v1603, 96
        %v1675 = vpop.permute.xlu0 %1674
        %1676 = vrot.lane.b32.xlu0 %v1604, 96
        %v1677 = vpop.permute.xlu0 %1676
        %1678 = vrot.lane.b32.xlu0 %v1605, 96
        %v1679 = vpop.permute.xlu0 %1678
        %1680 = vrot.lane.b32.xlu0 %v1606, 96
        %v1681 = vpop.permute.xlu0 %1680
        %1682 = vrot.lane.b32.xlu0 %v1607, 96
        %v1683 = vpop.permute.xlu0 %1682
        %1684 = vrot.lane.b32.xlu0 %v1608, 96
        %v1685 = vpop.permute.xlu0 %1684
        %1686 = vrot.lane.b32.xlu0 %v1609, 96
        %v1687 = vpop.permute.xlu0 %1686
        %1688 = vrot.lane.b32.xlu0 %v1610, 96
        %v1689 = vpop.permute.xlu0 %1688
        %1690 = vrot.lane.b32.xlu0 %v1611, 96
        %v1691 = vpop.permute.xlu0 %1690
        %1692 = vrot.lane.b32.xlu0 %v1612, 96
        %v1693 = vpop.permute.xlu0 %1692
        %1694 = vrot.lane.b32.xlu0 %v1613, 96
        %v1695 = vpop.permute.xlu0 %1694
        %1696 = vrot.lane.b32.xlu0 %v1614, 96
        %v1697 = vpop.permute.xlu0 %1696
        %1698 = vrot.lane.b32.xlu0 %v1615, 96
        %v1699 = vpop.permute.xlu0 %1698
        %1700 = vrot.lane.b32.xlu0 %v1616, 96
        %v1701 = vpop.permute.xlu0 %1700
        %1702 = vrot.lane.b32.xlu0 %v1617, 96
        %v1703 = vpop.permute.xlu0 %1702
        %1704 = vrot.lane.b32.xlu0 %v1618, 96
        %v1705 = vpop.permute.xlu0 %1704
        %1706 = vrot.lane.b32.xlu0 %v1619, 96
        %v1707 = vpop.permute.xlu0 %1706
        %1708 = vrot.lane.b32.xlu0 %v1620, 96
        %v1709 = vpop.permute.xlu0 %1708
        %1710 = vrot.lane.b32.xlu0 %v1621, 96
        %v1711 = vpop.permute.xlu0 %1710
        %1712 = vrot.lane.b32.xlu0 %v1622, 96
        %v1713 = vpop.permute.xlu0 %1712
        %1714 = vrot.lane.b32.xlu0 %v1623, 96
        %v1715 = vpop.permute.xlu0 %1714
        %1716 = vrot.lane.b32.xlu0 %v1624, 96
        %v1717 = vpop.permute.xlu0 %1716
        %1718 = vrot.lane.b32.xlu0 %v1625, 96
        %v1719 = vpop.permute.xlu0 %1718
        %1720 = vrot.lane.b32.xlu0 %v1626, 96
        %v1721 = vpop.permute.xlu0 %1720
        %1722 = vrot.lane.b32.xlu0 %v1627, 96
        %v1723 = vpop.permute.xlu0 %1722
        %vm1756 = vcmask 1048320
        %1757 = vst.msk [vmem:[#allocation3] sm:$0xff] %vm1756, %v1661
        %1758 = vst.msk [vmem:[#allocation3 + $0x18] sm:$0xff] %vm1756, %v1663
        %1759 = vst.msk [vmem:[#allocation3 + $0x30] sm:$0xff] %vm1756, %v1665
        %1760 = vst.msk [vmem:[#allocation3 + $0x48] sm:$0xff] %vm1756, %v1667
        %1761 = vst.msk [vmem:[#allocation3 + $0x60] sm:$0xff] %vm1756, %v1669
        %1762 = vst.msk [vmem:[#allocation3 + $0x78] sm:$0xff] %vm1756, %v1671
        %1763 = vst.msk [vmem:[#allocation3 + $0x90] sm:$0xff] %vm1756, %v1673
        %1764 = vst.msk [vmem:[#allocation3 + $0xa8] sm:$0xff] %vm1756, %v1675
        %1765 = vst.msk [vmem:[#allocation3 + $0xc0] sm:$0xff] %vm1756, %v1677
        %1766 = vst.msk [vmem:[#allocation3 + $0xd8] sm:$0xff] %vm1756, %v1679
        %1767 = vst.msk [vmem:[#allocation3 + $0xf0] sm:$0xff] %vm1756, %v1681
        %1768 = vst.msk [vmem:[#allocation3 + $0x108] sm:$0xff] %vm1756, %v1683
        %1769 = vst.msk [vmem:[#allocation3 + $0x120] sm:$0xff] %vm1756, %v1685
        %1770 = vst.msk [vmem:[#allocation3 + $0x138] sm:$0xff] %vm1756, %v1687
        %1771 = vst.msk [vmem:[#allocation3 + $0x150] sm:$0xff] %vm1756, %v1689
        %1772 = vst.msk [vmem:[#allocation3 + $0x168] sm:$0xff] %vm1756, %v1691
        %1773 = vst.msk [vmem:[#allocation3 + $0x180] sm:$0xff] %vm1756, %v1693
        %1774 = vst.msk [vmem:[#allocation3 + $0x198] sm:$0xff] %vm1756, %v1695
        %1775 = vst.msk [vmem:[#allocation3 + $0x1b0] sm:$0xff] %vm1756, %v1697
        %1776 = vst.msk [vmem:[#allocation3 + $0x1c8] sm:$0xff] %vm1756, %v1699
        %1777 = vst.msk [vmem:[#allocation3 + $0x1e0] sm:$0xff] %vm1756, %v1701
        %1778 = vst.msk [vmem:[#allocation3 + $0x1f8] sm:$0xff] %vm1756, %v1703
        %1779 = vst.msk [vmem:[#allocation3 + $0x210] sm:$0xff] %vm1756, %v1705
        %1780 = vst.msk [vmem:[#allocation3 + $0x228] sm:$0xff] %vm1756, %v1707
        %1781 = vst.msk [vmem:[#allocation3 + $0x240] sm:$0xff] %vm1756, %v1709
        %1782 = vst.msk [vmem:[#allocation3 + $0x258] sm:$0xff] %vm1756, %v1711
        %1783 = vst.msk [vmem:[#allocation3 + $0x270] sm:$0xff] %vm1756, %v1713
        %1784 = vst.msk [vmem:[#allocation3 + $0x288] sm:$0xff] %vm1756, %v1715
        %1785 = vst.msk [vmem:[#allocation3 + $0x2a0] sm:$0xff] %vm1756, %v1717
        %1786 = vst.msk [vmem:[#allocation3 + $0x2b8] sm:$0xff] %vm1756, %v1719
        %1787 = vst.msk [vmem:[#allocation3 + $0x2d0] sm:$0xff] %vm1756, %v1721
        %1788 = vst.msk [vmem:[#allocation3 + $0x2e8] sm:$0xff] %vm1756, %v1723
        %v1789 = vld [vmem:[%s1113 + $0x1] sm:$0xff]
        %v1790 = vld [vmem:[%s1113 + $0x9] sm:$0xff]
        %v1791 = vld [vmem:[%s1113 + $0x19] sm:$0xff]
        %v1792 = vld [vmem:[%s1113 + $0x21] sm:$0xff]
        %v1793 = vld [vmem:[%s1113 + $0x31] sm:$0xff]
        %v1794 = vld [vmem:[%s1113 + $0x39] sm:$0xff]
        %v1795 = vld [vmem:[%s1113 + $0x49] sm:$0xff]
        %v1796 = vld [vmem:[%s1113 + $0x51] sm:$0xff]
        %v1797 = vld [vmem:[%s1113 + $0x61] sm:$0xff]
        %v1798 = vld [vmem:[%s1113 + $0x69] sm:$0xff]
        %v1799 = vld [vmem:[%s1113 + $0x79] sm:$0xff]
        %v1800 = vld [vmem:[%s1113 + $0x81] sm:$0xff]
        %v1801 = vld [vmem:[%s1113 + $0x91] sm:$0xff]
        %v1802 = vld [vmem:[%s1113 + $0x99] sm:$0xff]
        %v1803 = vld [vmem:[%s1113 + $0xa9] sm:$0xff]
        %v1804 = vld [vmem:[%s1113 + $0xb1] sm:$0xff]
        %v1805 = vld [vmem:[%s1113 + $0xc1] sm:$0xff]
        %v1806 = vld [vmem:[%s1113 + $0xc9] sm:$0xff]
        %v1807 = vld [vmem:[%s1113 + $0xd9] sm:$0xff]
        %v1808 = vld [vmem:[%s1113 + $0xe1] sm:$0xff]
        %v1809 = vld [vmem:[%s1113 + $0xf1] sm:$0xff]
        %v1810 = vld [vmem:[%s1113 + $0xf9] sm:$0xff]
        %v1811 = vld [vmem:[%s1113 + $0x109] sm:$0xff]
        %v1812 = vld [vmem:[%s1113 + $0x111] sm:$0xff]
        %v1813 = vld [vmem:[%s1113 + $0x121] sm:$0xff]
        %v1814 = vld [vmem:[%s1113 + $0x129] sm:$0xff]
        %v1815 = vld [vmem:[%s1113 + $0x139] sm:$0xff]
        %v1816 = vld [vmem:[%s1113 + $0x141] sm:$0xff]
        %v1817 = vld [vmem:[%s1113 + $0x151] sm:$0xff]
        %v1818 = vld [vmem:[%s1113 + $0x159] sm:$0xff]
        %v1819 = vld [vmem:[%s1113 + $0x169] sm:$0xff]
        %v1820 = vld [vmem:[%s1113 + $0x171] sm:$0xff]
        %1821 = vst.msk [vmem:[#allocation3 + $0x8] sm:$0xff] %vm427, %v1789
        %1822 = vst.msk [vmem:[#allocation3 + $0x20] sm:$0xff] %vm427, %v1790
        %1823 = vst.msk [vmem:[#allocation3 + $0x38] sm:$0xff] %vm427, %v1791
        %1824 = vst.msk [vmem:[#allocation3 + $0x50] sm:$0xff] %vm427, %v1792
        %1825 = vst.msk [vmem:[#allocation3 + $0x68] sm:$0xff] %vm427, %v1793
        %1826 = vst.msk [vmem:[#allocation3 + $0x80] sm:$0xff] %vm427, %v1794
        %1827 = vst.msk [vmem:[#allocation3 + $0x98] sm:$0xff] %vm427, %v1795
        %1828 = vst.msk [vmem:[#allocation3 + $0xb0] sm:$0xff] %vm427, %v1796
        %1829 = vst.msk [vmem:[#allocation3 + $0xc8] sm:$0xff] %vm427, %v1797
        %1830 = vst.msk [vmem:[#allocation3 + $0xe0] sm:$0xff] %vm427, %v1798
        %1831 = vst.msk [vmem:[#allocation3 + $0xf8] sm:$0xff] %vm427, %v1799
        %1832 = vst.msk [vmem:[#allocation3 + $0x110] sm:$0xff] %vm427, %v1800
        %1833 = vst.msk [vmem:[#allocation3 + $0x128] sm:$0xff] %vm427, %v1801
        %1834 = vst.msk [vmem:[#allocation3 + $0x140] sm:$0xff] %vm427, %v1802
        %1835 = vst.msk [vmem:[#allocation3 + $0x158] sm:$0xff] %vm427, %v1803
        %1836 = vst.msk [vmem:[#allocation3 + $0x170] sm:$0xff] %vm427, %v1804
        %1837 = vst.msk [vmem:[#allocation3 + $0x188] sm:$0xff] %vm427, %v1805
        %1838 = vst.msk [vmem:[#allocation3 + $0x1a0] sm:$0xff] %vm427, %v1806
        %1839 = vst.msk [vmem:[#allocation3 + $0x1b8] sm:$0xff] %vm427, %v1807
        %1840 = vst.msk [vmem:[#allocation3 + $0x1d0] sm:$0xff] %vm427, %v1808
        %1841 = vst.msk [vmem:[#allocation3 + $0x1e8] sm:$0xff] %vm427, %v1809
        %1842 = vst.msk [vmem:[#allocation3 + $0x200] sm:$0xff] %vm427, %v1810
        %1843 = vst.msk [vmem:[#allocation3 + $0x218] sm:$0xff] %vm427, %v1811
        %1844 = vst.msk [vmem:[#allocation3 + $0x230] sm:$0xff] %vm427, %v1812
        %1845 = vst.msk [vmem:[#allocation3 + $0x248] sm:$0xff] %vm427, %v1813
        %1846 = vst.msk [vmem:[#allocation3 + $0x260] sm:$0xff] %vm427, %v1814
        %1847 = vst.msk [vmem:[#allocation3 + $0x278] sm:$0xff] %vm427, %v1815
        %1848 = vst.msk [vmem:[#allocation3 + $0x290] sm:$0xff] %vm427, %v1816
        %1849 = vst.msk [vmem:[#allocation3 + $0x2a8] sm:$0xff] %vm427, %v1817
        %1850 = vst.msk [vmem:[#allocation3 + $0x2c0] sm:$0xff] %vm427, %v1818
        %1851 = vst.msk [vmem:[#allocation3 + $0x2d8] sm:$0xff] %vm427, %v1819
        %1852 = vst.msk [vmem:[#allocation3 + $0x2f0] sm:$0xff] %vm427, %v1820
        %v1853 = vld [vmem:[%s1113 + $0x2] sm:$0xff]
        %v1854 = vld [vmem:[%s1113 + $0xa] sm:$0xff]
        %v1855 = vld [vmem:[%s1113 + $0x1a] sm:$0xff]
        %v1856 = vld [vmem:[%s1113 + $0x22] sm:$0xff]
        %v1857 = vld [vmem:[%s1113 + $0x32] sm:$0xff]
        %v1858 = vld [vmem:[%s1113 + $0x3a] sm:$0xff]
        %v1859 = vld [vmem:[%s1113 + $0x4a] sm:$0xff]
        %v1860 = vld [vmem:[%s1113 + $0x52] sm:$0xff]
        %v1861 = vld [vmem:[%s1113 + $0x62] sm:$0xff]
        %v1862 = vld [vmem:[%s1113 + $0x6a] sm:$0xff]
        %v1863 = vld [vmem:[%s1113 + $0x7a] sm:$0xff]
        %v1864 = vld [vmem:[%s1113 + $0x82] sm:$0xff]
        %v1865 = vld [vmem:[%s1113 + $0x92] sm:$0xff]
        %v1866 = vld [vmem:[%s1113 + $0x9a] sm:$0xff]
        %v1867 = vld [vmem:[%s1113 + $0xaa] sm:$0xff]
        %v1868 = vld [vmem:[%s1113 + $0xb2] sm:$0xff]
        %v1869 = vld [vmem:[%s1113 + $0xc2] sm:$0xff]
        %v1870 = vld [vmem:[%s1113 + $0xca] sm:$0xff]
        %v1871 = vld [vmem:[%s1113 + $0xda] sm:$0xff]
        %v1872 = vld [vmem:[%s1113 + $0xe2] sm:$0xff]
        %v1873 = vld [vmem:[%s1113 + $0xf2] sm:$0xff]
        %v1874 = vld [vmem:[%s1113 + $0xfa] sm:$0xff]
        %v1875 = vld [vmem:[%s1113 + $0x10a] sm:$0xff]
        %v1876 = vld [vmem:[%s1113 + $0x112] sm:$0xff]
        %v1877 = vld [vmem:[%s1113 + $0x122] sm:$0xff]
        %v1878 = vld [vmem:[%s1113 + $0x12a] sm:$0xff]
        %v1879 = vld [vmem:[%s1113 + $0x13a] sm:$0xff]
        %v1880 = vld [vmem:[%s1113 + $0x142] sm:$0xff]
        %v1881 = vld [vmem:[%s1113 + $0x152] sm:$0xff]
        %v1882 = vld [vmem:[%s1113 + $0x15a] sm:$0xff]
        %v1883 = vld [vmem:[%s1113 + $0x16a] sm:$0xff]
        %v1884 = vld [vmem:[%s1113 + $0x172] sm:$0xff]
        %1917 = vrot.lane.b32.xlu0 %v1853, 32
        %v1918 = vpop.permute.xlu0 %1917
        %1919 = vrot.lane.b32.xlu0 %v1854, 32
        %v1920 = vpop.permute.xlu0 %1919
        %1921 = vrot.lane.b32.xlu0 %v1855, 32
        %v1922 = vpop.permute.xlu0 %1921
        %1923 = vrot.lane.b32.xlu0 %v1856, 32
        %v1924 = vpop.permute.xlu0 %1923
        %1925 = vrot.lane.b32.xlu0 %v1857, 32
        %v1926 = vpop.permute.xlu0 %1925
        %1927 = vrot.lane.b32.xlu0 %v1858, 32
        %v1928 = vpop.permute.xlu0 %1927
        %1929 = vrot.lane.b32.xlu0 %v1859, 32
        %v1930 = vpop.permute.xlu0 %1929
        %1931 = vrot.lane.b32.xlu0 %v1860, 32
        %v1932 = vpop.permute.xlu0 %1931
        %1933 = vrot.lane.b32.xlu0 %v1861, 32
        %v1934 = vpop.permute.xlu0 %1933
        %1935 = vrot.lane.b32.xlu0 %v1862, 32
        %v1936 = vpop.permute.xlu0 %1935
        %1937 = vrot.lane.b32.xlu0 %v1863, 32
        %v1938 = vpop.permute.xlu0 %1937
        %1939 = vrot.lane.b32.xlu0 %v1864, 32
        %v1940 = vpop.permute.xlu0 %1939
        %1941 = vrot.lane.b32.xlu0 %v1865, 32
        %v1942 = vpop.permute.xlu0 %1941
        %1943 = vrot.lane.b32.xlu0 %v1866, 32
        %v1944 = vpop.permute.xlu0 %1943
        %1945 = vrot.lane.b32.xlu0 %v1867, 32
        %v1946 = vpop.permute.xlu0 %1945
        %1947 = vrot.lane.b32.xlu0 %v1868, 32
        %v1948 = vpop.permute.xlu0 %1947
        %1949 = vrot.lane.b32.xlu0 %v1869, 32
        %v1950 = vpop.permute.xlu0 %1949
        %1951 = vrot.lane.b32.xlu0 %v1870, 32
        %v1952 = vpop.permute.xlu0 %1951
        %1953 = vrot.lane.b32.xlu0 %v1871, 32
        %v1954 = vpop.permute.xlu0 %1953
        %1955 = vrot.lane.b32.xlu0 %v1872, 32
        %v1956 = vpop.permute.xlu0 %1955
        %1957 = vrot.lane.b32.xlu0 %v1873, 32
        %v1958 = vpop.permute.xlu0 %1957
        %1959 = vrot.lane.b32.xlu0 %v1874, 32
        %v1960 = vpop.permute.xlu0 %1959
        %1961 = vrot.lane.b32.xlu0 %v1875, 32
        %v1962 = vpop.permute.xlu0 %1961
        %1963 = vrot.lane.b32.xlu0 %v1876, 32
        %v1964 = vpop.permute.xlu0 %1963
        %1965 = vrot.lane.b32.xlu0 %v1877, 32
        %v1966 = vpop.permute.xlu0 %1965
        %1967 = vrot.lane.b32.xlu0 %v1878, 32
        %v1968 = vpop.permute.xlu0 %1967
        %1969 = vrot.lane.b32.xlu0 %v1879, 32
        %v1970 = vpop.permute.xlu0 %1969
        %1971 = vrot.lane.b32.xlu0 %v1880, 32
        %v1972 = vpop.permute.xlu0 %1971
        %1973 = vrot.lane.b32.xlu0 %v1881, 32
        %v1974 = vpop.permute.xlu0 %1973
        %1975 = vrot.lane.b32.xlu0 %v1882, 32
        %v1976 = vpop.permute.xlu0 %1975
        %1977 = vrot.lane.b32.xlu0 %v1883, 32
        %v1978 = vpop.permute.xlu0 %1977
        %1979 = vrot.lane.b32.xlu0 %v1884, 32
        %v1980 = vpop.permute.xlu0 %1979
        %2013 = vst.msk [vmem:[#allocation3 + $0x8] sm:$0xff] %vm1370, %v1918
        %2014 = vst.msk [vmem:[#allocation3 + $0x20] sm:$0xff] %vm1370, %v1920
        %2015 = vst.msk [vmem:[#allocation3 + $0x38] sm:$0xff] %vm1370, %v1922
        %2016 = vst.msk [vmem:[#allocation3 + $0x50] sm:$0xff] %vm1370, %v1924
        %2017 = vst.msk [vmem:[#allocation3 + $0x68] sm:$0xff] %vm1370, %v1926
        %2018 = vst.msk [vmem:[#allocation3 + $0x80] sm:$0xff] %vm1370, %v1928
        %2019 = vst.msk [vmem:[#allocation3 + $0x98] sm:$0xff] %vm1370, %v1930
        %2020 = vst.msk [vmem:[#allocation3 + $0xb0] sm:$0xff] %vm1370, %v1932
        %2021 = vst.msk [vmem:[#allocation3 + $0xc8] sm:$0xff] %vm1370, %v1934
        %2022 = vst.msk [vmem:[#allocation3 + $0xe0] sm:$0xff] %vm1370, %v1936
        %2023 = vst.msk [vmem:[#allocation3 + $0xf8] sm:$0xff] %vm1370, %v1938
        %2024 = vst.msk [vmem:[#allocation3 + $0x110] sm:$0xff] %vm1370, %v1940
        %2025 = vst.msk [vmem:[#allocation3 + $0x128] sm:$0xff] %vm1370, %v1942
        %2026 = vst.msk [vmem:[#allocation3 + $0x140] sm:$0xff] %vm1370, %v1944
        %2027 = vst.msk [vmem:[#allocation3 + $0x158] sm:$0xff] %vm1370, %v1946
        %2028 = vst.msk [vmem:[#allocation3 + $0x170] sm:$0xff] %vm1370, %v1948
        %2029 = vst.msk [vmem:[#allocation3 + $0x188] sm:$0xff] %vm1370, %v1950
        %2030 = vst.msk [vmem:[#allocation3 + $0x1a0] sm:$0xff] %vm1370, %v1952
        %2031 = vst.msk [vmem:[#allocation3 + $0x1b8] sm:$0xff] %vm1370, %v1954
        %2032 = vst.msk [vmem:[#allocation3 + $0x1d0] sm:$0xff] %vm1370, %v1956
        %2033 = vst.msk [vmem:[#allocation3 + $0x1e8] sm:$0xff] %vm1370, %v1958
        %2034 = vst.msk [vmem:[#allocation3 + $0x200] sm:$0xff] %vm1370, %v1960
        %2035 = vst.msk [vmem:[#allocation3 + $0x218] sm:$0xff] %vm1370, %v1962
        %2036 = vst.msk [vmem:[#allocation3 + $0x230] sm:$0xff] %vm1370, %v1964
        %2037 = vst.msk [vmem:[#allocation3 + $0x248] sm:$0xff] %vm1370, %v1966
        %2038 = vst.msk [vmem:[#allocation3 + $0x260] sm:$0xff] %vm1370, %v1968
        %2039 = vst.msk [vmem:[#allocation3 + $0x278] sm:$0xff] %vm1370, %v1970
        %2040 = vst.msk [vmem:[#allocation3 + $0x290] sm:$0xff] %vm1370, %v1972
        %2041 = vst.msk [vmem:[#allocation3 + $0x2a8] sm:$0xff] %vm1370, %v1974
        %2042 = vst.msk [vmem:[#allocation3 + $0x2c0] sm:$0xff] %vm1370, %v1976
        %2043 = vst.msk [vmem:[#allocation3 + $0x2d8] sm:$0xff] %vm1370, %v1978
        %2044 = vst.msk [vmem:[#allocation3 + $0x2f0] sm:$0xff] %vm1370, %v1980
        %s2045 = scalar_lea.vmem [#allocation2], 48
        %v2046 = vld [vmem:[%s2045] sm:$0xff]
        %v2047 = vld [vmem:[%s2045 + $0x8] sm:$0xff]
        %v2048 = vld [vmem:[%s2045 + $0x18] sm:$0xff]
        %v2049 = vld [vmem:[%s2045 + $0x20] sm:$0xff]
        %v2050 = vld [vmem:[%s2045 + $0x30] sm:$0xff]
        %v2051 = vld [vmem:[%s2045 + $0x38] sm:$0xff]
        %v2052 = vld [vmem:[%s2045 + $0x48] sm:$0xff]
        %v2053 = vld [vmem:[%s2045 + $0x50] sm:$0xff]
        %v2054 = vld [vmem:[%s2045 + $0x60] sm:$0xff]
        %v2055 = vld [vmem:[%s2045 + $0x68] sm:$0xff]
        %v2056 = vld [vmem:[%s2045 + $0x78] sm:$0xff]
        %v2057 = vld [vmem:[%s2045 + $0x80] sm:$0xff]
        %v2058 = vld [vmem:[%s2045 + $0x90] sm:$0xff]
        %v2059 = vld [vmem:[%s2045 + $0x98] sm:$0xff]
        %v2060 = vld [vmem:[%s2045 + $0xa8] sm:$0xff]
        %v2061 = vld [vmem:[%s2045 + $0xb0] sm:$0xff]
        %v2062 = vld [vmem:[%s2045 + $0xc0] sm:$0xff]
        %v2063 = vld [vmem:[%s2045 + $0xc8] sm:$0xff]
        %v2064 = vld [vmem:[%s2045 + $0xd8] sm:$0xff]
        %v2065 = vld [vmem:[%s2045 + $0xe0] sm:$0xff]
        %v2066 = vld [vmem:[%s2045 + $0xf0] sm:$0xff]
        %v2067 = vld [vmem:[%s2045 + $0xf8] sm:$0xff]
        %v2068 = vld [vmem:[%s2045 + $0x108] sm:$0xff]
        %v2069 = vld [vmem:[%s2045 + $0x110] sm:$0xff]
        %v2070 = vld [vmem:[%s2045 + $0x120] sm:$0xff]
        %v2071 = vld [vmem:[%s2045 + $0x128] sm:$0xff]
        %v2072 = vld [vmem:[%s2045 + $0x138] sm:$0xff]
        %v2073 = vld [vmem:[%s2045 + $0x140] sm:$0xff]
        %v2074 = vld [vmem:[%s2045 + $0x150] sm:$0xff]
        %v2075 = vld [vmem:[%s2045 + $0x158] sm:$0xff]
        %v2076 = vld [vmem:[%s2045 + $0x168] sm:$0xff]
        %v2077 = vld [vmem:[%s2045 + $0x170] sm:$0xff]
        %2110 = vrot.lane.b32.xlu0 %v2046, 64
        %v2111 = vpop.permute.xlu0 %2110
        %2112 = vrot.lane.b32.xlu0 %v2047, 64
        %v2113 = vpop.permute.xlu0 %2112
        %2114 = vrot.lane.b32.xlu0 %v2048, 64
        %v2115 = vpop.permute.xlu0 %2114
        %2116 = vrot.lane.b32.xlu0 %v2049, 64
        %v2117 = vpop.permute.xlu0 %2116
        %2118 = vrot.lane.b32.xlu0 %v2050, 64
        %v2119 = vpop.permute.xlu0 %2118
        %2120 = vrot.lane.b32.xlu0 %v2051, 64
        %v2121 = vpop.permute.xlu0 %2120
        %2122 = vrot.lane.b32.xlu0 %v2052, 64
        %v2123 = vpop.permute.xlu0 %2122
        %2124 = vrot.lane.b32.xlu0 %v2053, 64
        %v2125 = vpop.permute.xlu0 %2124
        %2126 = vrot.lane.b32.xlu0 %v2054, 64
        %v2127 = vpop.permute.xlu0 %2126
        %2128 = vrot.lane.b32.xlu0 %v2055, 64
        %v2129 = vpop.permute.xlu0 %2128
        %2130 = vrot.lane.b32.xlu0 %v2056, 64
        %v2131 = vpop.permute.xlu0 %2130
        %2132 = vrot.lane.b32.xlu0 %v2057, 64
        %v2133 = vpop.permute.xlu0 %2132
        %2134 = vrot.lane.b32.xlu0 %v2058, 64
        %v2135 = vpop.permute.xlu0 %2134
        %2136 = vrot.lane.b32.xlu0 %v2059, 64
        %v2137 = vpop.permute.xlu0 %2136
        %2138 = vrot.lane.b32.xlu0 %v2060, 64
        %v2139 = vpop.permute.xlu0 %2138
        %2140 = vrot.lane.b32.xlu0 %v2061, 64
        %v2141 = vpop.permute.xlu0 %2140
        %2142 = vrot.lane.b32.xlu0 %v2062, 64
        %v2143 = vpop.permute.xlu0 %2142
        %2144 = vrot.lane.b32.xlu0 %v2063, 64
        %v2145 = vpop.permute.xlu0 %2144
        %2146 = vrot.lane.b32.xlu0 %v2064, 64
        %v2147 = vpop.permute.xlu0 %2146
        %2148 = vrot.lane.b32.xlu0 %v2065, 64
        %v2149 = vpop.permute.xlu0 %2148
        %2150 = vrot.lane.b32.xlu0 %v2066, 64
        %v2151 = vpop.permute.xlu0 %2150
        %2152 = vrot.lane.b32.xlu0 %v2067, 64
        %v2153 = vpop.permute.xlu0 %2152
        %2154 = vrot.lane.b32.xlu0 %v2068, 64
        %v2155 = vpop.permute.xlu0 %2154
        %2156 = vrot.lane.b32.xlu0 %v2069, 64
        %v2157 = vpop.permute.xlu0 %2156
        %2158 = vrot.lane.b32.xlu0 %v2070, 64
        %v2159 = vpop.permute.xlu0 %2158
        %2160 = vrot.lane.b32.xlu0 %v2071, 64
        %v2161 = vpop.permute.xlu0 %2160
        %2162 = vrot.lane.b32.xlu0 %v2072, 64
        %v2163 = vpop.permute.xlu0 %2162
        %2164 = vrot.lane.b32.xlu0 %v2073, 64
        %v2165 = vpop.permute.xlu0 %2164
        %2166 = vrot.lane.b32.xlu0 %v2074, 64
        %v2167 = vpop.permute.xlu0 %2166
        %2168 = vrot.lane.b32.xlu0 %v2075, 64
        %v2169 = vpop.permute.xlu0 %2168
        %2170 = vrot.lane.b32.xlu0 %v2076, 64
        %v2171 = vpop.permute.xlu0 %2170
        %2172 = vrot.lane.b32.xlu0 %v2077, 64
        %v2173 = vpop.permute.xlu0 %2172
        %2206 = vst.msk [vmem:[#allocation3 + $0x8] sm:$0xff] %vm1563, %v2111
        %2207 = vst.msk [vmem:[#allocation3 + $0x20] sm:$0xff] %vm1563, %v2113
        %2208 = vst.msk [vmem:[#allocation3 + $0x38] sm:$0xff] %vm1563, %v2115
        %2209 = vst.msk [vmem:[#allocation3 + $0x50] sm:$0xff] %vm1563, %v2117
        %2210 = vst.msk [vmem:[#allocation3 + $0x68] sm:$0xff] %vm1563, %v2119
        %2211 = vst.msk [vmem:[#allocation3 + $0x80] sm:$0xff] %vm1563, %v2121
        %2212 = vst.msk [vmem:[#allocation3 + $0x98] sm:$0xff] %vm1563, %v2123
        %2213 = vst.msk [vmem:[#allocation3 + $0xb0] sm:$0xff] %vm1563, %v2125
        %2214 = vst.msk [vmem:[#allocation3 + $0xc8] sm:$0xff] %vm1563, %v2127
        %2215 = vst.msk [vmem:[#allocation3 + $0xe0] sm:$0xff] %vm1563, %v2129
        %2216 = vst.msk [vmem:[#allocation3 + $0xf8] sm:$0xff] %vm1563, %v2131
        %2217 = vst.msk [vmem:[#allocation3 + $0x110] sm:$0xff] %vm1563, %v2133
        %2218 = vst.msk [vmem:[#allocation3 + $0x128] sm:$0xff] %vm1563, %v2135
        %2219 = vst.msk [vmem:[#allocation3 + $0x140] sm:$0xff] %vm1563, %v2137
        %2220 = vst.msk [vmem:[#allocation3 + $0x158] sm:$0xff] %vm1563, %v2139
        %2221 = vst.msk [vmem:[#allocation3 + $0x170] sm:$0xff] %vm1563, %v2141
        %2222 = vst.msk [vmem:[#allocation3 + $0x188] sm:$0xff] %vm1563, %v2143
        %2223 = vst.msk [vmem:[#allocation3 + $0x1a0] sm:$0xff] %vm1563, %v2145
        %2224 = vst.msk [vmem:[#allocation3 + $0x1b8] sm:$0xff] %vm1563, %v2147
        %2225 = vst.msk [vmem:[#allocation3 + $0x1d0] sm:$0xff] %vm1563, %v2149
        %2226 = vst.msk [vmem:[#allocation3 + $0x1e8] sm:$0xff] %vm1563, %v2151
        %2227 = vst.msk [vmem:[#allocation3 + $0x200] sm:$0xff] %vm1563, %v2153
        %2228 = vst.msk [vmem:[#allocation3 + $0x218] sm:$0xff] %vm1563, %v2155
        %2229 = vst.msk [vmem:[#allocation3 + $0x230] sm:$0xff] %vm1563, %v2157
        %2230 = vst.msk [vmem:[#allocation3 + $0x248] sm:$0xff] %vm1563, %v2159
        %2231 = vst.msk [vmem:[#allocation3 + $0x260] sm:$0xff] %vm1563, %v2161
        %2232 = vst.msk [vmem:[#allocation3 + $0x278] sm:$0xff] %vm1563, %v2163
        %2233 = vst.msk [vmem:[#allocation3 + $0x290] sm:$0xff] %vm1563, %v2165
        %2234 = vst.msk [vmem:[#allocation3 + $0x2a8] sm:$0xff] %vm1563, %v2167
        %2235 = vst.msk [vmem:[#allocation3 + $0x2c0] sm:$0xff] %vm1563, %v2169
        %2236 = vst.msk [vmem:[#allocation3 + $0x2d8] sm:$0xff] %vm1563, %v2171
        %2237 = vst.msk [vmem:[#allocation3 + $0x2f0] sm:$0xff] %vm1563, %v2173
        %v2238 = vld [vmem:[%s2045 + $0x1] sm:$0xff]
        %v2239 = vld [vmem:[%s2045 + $0x9] sm:$0xff]
        %v2240 = vld [vmem:[%s2045 + $0x19] sm:$0xff]
        %v2241 = vld [vmem:[%s2045 + $0x21] sm:$0xff]
        %v2242 = vld [vmem:[%s2045 + $0x31] sm:$0xff]
        %v2243 = vld [vmem:[%s2045 + $0x39] sm:$0xff]
        %v2244 = vld [vmem:[%s2045 + $0x49] sm:$0xff]
        %v2245 = vld [vmem:[%s2045 + $0x51] sm:$0xff]
        %v2246 = vld [vmem:[%s2045 + $0x61] sm:$0xff]
        %v2247 = vld [vmem:[%s2045 + $0x69] sm:$0xff]
        %v2248 = vld [vmem:[%s2045 + $0x79] sm:$0xff]
        %v2249 = vld [vmem:[%s2045 + $0x81] sm:$0xff]
        %v2250 = vld [vmem:[%s2045 + $0x91] sm:$0xff]
        %v2251 = vld [vmem:[%s2045 + $0x99] sm:$0xff]
        %v2252 = vld [vmem:[%s2045 + $0xa9] sm:$0xff]
        %v2253 = vld [vmem:[%s2045 + $0xb1] sm:$0xff]
        %v2254 = vld [vmem:[%s2045 + $0xc1] sm:$0xff]
        %v2255 = vld [vmem:[%s2045 + $0xc9] sm:$0xff]
        %v2256 = vld [vmem:[%s2045 + $0xd9] sm:$0xff]
        %v2257 = vld [vmem:[%s2045 + $0xe1] sm:$0xff]
        %v2258 = vld [vmem:[%s2045 + $0xf1] sm:$0xff]
        %v2259 = vld [vmem:[%s2045 + $0xf9] sm:$0xff]
        %v2260 = vld [vmem:[%s2045 + $0x109] sm:$0xff]
        %v2261 = vld [vmem:[%s2045 + $0x111] sm:$0xff]
        %v2262 = vld [vmem:[%s2045 + $0x121] sm:$0xff]
        %v2263 = vld [vmem:[%s2045 + $0x129] sm:$0xff]
        %v2264 = vld [vmem:[%s2045 + $0x139] sm:$0xff]
        %v2265 = vld [vmem:[%s2045 + $0x141] sm:$0xff]
        %v2266 = vld [vmem:[%s2045 + $0x151] sm:$0xff]
        %v2267 = vld [vmem:[%s2045 + $0x159] sm:$0xff]
        %v2268 = vld [vmem:[%s2045 + $0x169] sm:$0xff]
        %v2269 = vld [vmem:[%s2045 + $0x171] sm:$0xff]
        %2302 = vrot.lane.b32.xlu0 %v2238, 96
        %v2303 = vpop.permute.xlu0 %2302
        %2304 = vrot.lane.b32.xlu0 %v2239, 96
        %v2305 = vpop.permute.xlu0 %2304
        %2306 = vrot.lane.b32.xlu0 %v2240, 96
        %v2307 = vpop.permute.xlu0 %2306
        %2308 = vrot.lane.b32.xlu0 %v2241, 96
        %v2309 = vpop.permute.xlu0 %2308
        %2310 = vrot.lane.b32.xlu0 %v2242, 96
        %v2311 = vpop.permute.xlu0 %2310
        %2312 = vrot.lane.b32.xlu0 %v2243, 96
        %v2313 = vpop.permute.xlu0 %2312
        %2314 = vrot.lane.b32.xlu0 %v2244, 96
        %v2315 = vpop.permute.xlu0 %2314
        %2316 = vrot.lane.b32.xlu0 %v2245, 96
        %v2317 = vpop.permute.xlu0 %2316
        %2318 = vrot.lane.b32.xlu0 %v2246, 96
        %v2319 = vpop.permute.xlu0 %2318
        %2320 = vrot.lane.b32.xlu0 %v2247, 96
        %v2321 = vpop.permute.xlu0 %2320
        %2322 = vrot.lane.b32.xlu0 %v2248, 96
        %v2323 = vpop.permute.xlu0 %2322
        %2324 = vrot.lane.b32.xlu0 %v2249, 96
        %v2325 = vpop.permute.xlu0 %2324
        %2326 = vrot.lane.b32.xlu0 %v2250, 96
        %v2327 = vpop.permute.xlu0 %2326
        %2328 = vrot.lane.b32.xlu0 %v2251, 96
        %v2329 = vpop.permute.xlu0 %2328
        %2330 = vrot.lane.b32.xlu0 %v2252, 96
        %v2331 = vpop.permute.xlu0 %2330
        %2332 = vrot.lane.b32.xlu0 %v2253, 96
        %v2333 = vpop.permute.xlu0 %2332
        %2334 = vrot.lane.b32.xlu0 %v2254, 96
        %v2335 = vpop.permute.xlu0 %2334
        %2336 = vrot.lane.b32.xlu0 %v2255, 96
        %v2337 = vpop.permute.xlu0 %2336
        %2338 = vrot.lane.b32.xlu0 %v2256, 96
        %v2339 = vpop.permute.xlu0 %2338
        %2340 = vrot.lane.b32.xlu0 %v2257, 96
        %v2341 = vpop.permute.xlu0 %2340
        %2342 = vrot.lane.b32.xlu0 %v2258, 96
        %v2343 = vpop.permute.xlu0 %2342
        %2344 = vrot.lane.b32.xlu0 %v2259, 96
        %v2345 = vpop.permute.xlu0 %2344
        %2346 = vrot.lane.b32.xlu0 %v2260, 96
        %v2347 = vpop.permute.xlu0 %2346
        %2348 = vrot.lane.b32.xlu0 %v2261, 96
        %v2349 = vpop.permute.xlu0 %2348
        %2350 = vrot.lane.b32.xlu0 %v2262, 96
        %v2351 = vpop.permute.xlu0 %2350
        %2352 = vrot.lane.b32.xlu0 %v2263, 96
        %v2353 = vpop.permute.xlu0 %2352
        %2354 = vrot.lane.b32.xlu0 %v2264, 96
        %v2355 = vpop.permute.xlu0 %2354
        %2356 = vrot.lane.b32.xlu0 %v2265, 96
        %v2357 = vpop.permute.xlu0 %2356
        %2358 = vrot.lane.b32.xlu0 %v2266, 96
        %v2359 = vpop.permute.xlu0 %2358
        %2360 = vrot.lane.b32.xlu0 %v2267, 96
        %v2361 = vpop.permute.xlu0 %2360
        %2362 = vrot.lane.b32.xlu0 %v2268, 96
        %v2363 = vpop.permute.xlu0 %2362
        %2364 = vrot.lane.b32.xlu0 %v2269, 96
        %v2365 = vpop.permute.xlu0 %2364
        %2398 = vst.msk [vmem:[#allocation3 + $0x8] sm:$0xff] %vm1756, %v2303
        %2399 = vst.msk [vmem:[#allocation3 + $0x20] sm:$0xff] %vm1756, %v2305
        %2400 = vst.msk [vmem:[#allocation3 + $0x38] sm:$0xff] %vm1756, %v2307
        %2401 = vst.msk [vmem:[#allocation3 + $0x50] sm:$0xff] %vm1756, %v2309
        %2402 = vst.msk [vmem:[#allocation3 + $0x68] sm:$0xff] %vm1756, %v2311
        %2403 = vst.msk [vmem:[#allocation3 + $0x80] sm:$0xff] %vm1756, %v2313
        %2404 = vst.msk [vmem:[#allocation3 + $0x98] sm:$0xff] %vm1756, %v2315
        %2405 = vst.msk [vmem:[#allocation3 + $0xb0] sm:$0xff] %vm1756, %v2317
        %2406 = vst.msk [vmem:[#allocation3 + $0xc8] sm:$0xff] %vm1756, %v2319
        %2407 = vst.msk [vmem:[#allocation3 + $0xe0] sm:$0xff] %vm1756, %v2321
        %2408 = vst.msk [vmem:[#allocation3 + $0xf8] sm:$0xff] %vm1756, %v2323
        %2409 = vst.msk [vmem:[#allocation3 + $0x110] sm:$0xff] %vm1756, %v2325
        %2410 = vst.msk [vmem:[#allocation3 + $0x128] sm:$0xff] %vm1756, %v2327
        %2411 = vst.msk [vmem:[#allocation3 + $0x140] sm:$0xff] %vm1756, %v2329
        %2412 = vst.msk [vmem:[#allocation3 + $0x158] sm:$0xff] %vm1756, %v2331
        %2413 = vst.msk [vmem:[#allocation3 + $0x170] sm:$0xff] %vm1756, %v2333
        %2414 = vst.msk [vmem:[#allocation3 + $0x188] sm:$0xff] %vm1756, %v2335
        %2415 = vst.msk [vmem:[#allocation3 + $0x1a0] sm:$0xff] %vm1756, %v2337
        %2416 = vst.msk [vmem:[#allocation3 + $0x1b8] sm:$0xff] %vm1756, %v2339
        %2417 = vst.msk [vmem:[#allocation3 + $0x1d0] sm:$0xff] %vm1756, %v2341
        %2418 = vst.msk [vmem:[#allocation3 + $0x1e8] sm:$0xff] %vm1756, %v2343
        %2419 = vst.msk [vmem:[#allocation3 + $0x200] sm:$0xff] %vm1756, %v2345
        %2420 = vst.msk [vmem:[#allocation3 + $0x218] sm:$0xff] %vm1756, %v2347
        %2421 = vst.msk [vmem:[#allocation3 + $0x230] sm:$0xff] %vm1756, %v2349
        %2422 = vst.msk [vmem:[#allocation3 + $0x248] sm:$0xff] %vm1756, %v2351
        %2423 = vst.msk [vmem:[#allocation3 + $0x260] sm:$0xff] %vm1756, %v2353
        %2424 = vst.msk [vmem:[#allocation3 + $0x278] sm:$0xff] %vm1756, %v2355
        %2425 = vst.msk [vmem:[#allocation3 + $0x290] sm:$0xff] %vm1756, %v2357
        %2426 = vst.msk [vmem:[#allocation3 + $0x2a8] sm:$0xff] %vm1756, %v2359
        %2427 = vst.msk [vmem:[#allocation3 + $0x2c0] sm:$0xff] %vm1756, %v2361
        %2428 = vst.msk [vmem:[#allocation3 + $0x2d8] sm:$0xff] %vm1756, %v2363
        %2429 = vst.msk [vmem:[#allocation3 + $0x2f0] sm:$0xff] %vm1756, %v2365
        %v2430 = vld [vmem:[%s2045 + $0x2] sm:$0xff]
        %v2431 = vld [vmem:[%s2045 + $0xa] sm:$0xff]
        %v2432 = vld [vmem:[%s2045 + $0x1a] sm:$0xff]
        %v2433 = vld [vmem:[%s2045 + $0x22] sm:$0xff]
        %v2434 = vld [vmem:[%s2045 + $0x32] sm:$0xff]
        %v2435 = vld [vmem:[%s2045 + $0x3a] sm:$0xff]
        %v2436 = vld [vmem:[%s2045 + $0x4a] sm:$0xff]
        %v2437 = vld [vmem:[%s2045 + $0x52] sm:$0xff]
        %v2438 = vld [vmem:[%s2045 + $0x62] sm:$0xff]
        %v2439 = vld [vmem:[%s2045 + $0x6a] sm:$0xff]
        %v2440 = vld [vmem:[%s2045 + $0x7a] sm:$0xff]
        %v2441 = vld [vmem:[%s2045 + $0x82] sm:$0xff]
        %v2442 = vld [vmem:[%s2045 + $0x92] sm:$0xff]
        %v2443 = vld [vmem:[%s2045 + $0x9a] sm:$0xff]
        %v2444 = vld [vmem:[%s2045 + $0xaa] sm:$0xff]
        %v2445 = vld [vmem:[%s2045 + $0xb2] sm:$0xff]
        %v2446 = vld [vmem:[%s2045 + $0xc2] sm:$0xff]
        %v2447 = vld [vmem:[%s2045 + $0xca] sm:$0xff]
        %v2448 = vld [vmem:[%s2045 + $0xda] sm:$0xff]
        %v2449 = vld [vmem:[%s2045 + $0xe2] sm:$0xff]
        %v2450 = vld [vmem:[%s2045 + $0xf2] sm:$0xff]
        %v2451 = vld [vmem:[%s2045 + $0xfa] sm:$0xff]
        %v2452 = vld [vmem:[%s2045 + $0x10a] sm:$0xff]
        %v2453 = vld [vmem:[%s2045 + $0x112] sm:$0xff]
        %v2454 = vld [vmem:[%s2045 + $0x122] sm:$0xff]
        %v2455 = vld [vmem:[%s2045 + $0x12a] sm:$0xff]
        %v2456 = vld [vmem:[%s2045 + $0x13a] sm:$0xff]
        %v2457 = vld [vmem:[%s2045 + $0x142] sm:$0xff]
        %v2458 = vld [vmem:[%s2045 + $0x152] sm:$0xff]
        %v2459 = vld [vmem:[%s2045 + $0x15a] sm:$0xff]
        %v2460 = vld [vmem:[%s2045 + $0x16a] sm:$0xff]
        %v2461 = vld [vmem:[%s2045 + $0x172] sm:$0xff]
        %2462 = vst.msk [vmem:[#allocation3 + $0x10] sm:$0xff] %vm427, %v2430
        %2463 = vst.msk [vmem:[#allocation3 + $0x28] sm:$0xff] %vm427, %v2431
        %2464 = vst.msk [vmem:[#allocation3 + $0x40] sm:$0xff] %vm427, %v2432
        %2465 = vst.msk [vmem:[#allocation3 + $0x58] sm:$0xff] %vm427, %v2433
        %2466 = vst.msk [vmem:[#allocation3 + $0x70] sm:$0xff] %vm427, %v2434
        %2467 = vst.msk [vmem:[#allocation3 + $0x88] sm:$0xff] %vm427, %v2435
        %2468 = vst.msk [vmem:[#allocation3 + $0xa0] sm:$0xff] %vm427, %v2436
        %2469 = vst.msk [vmem:[#allocation3 + $0xb8] sm:$0xff] %vm427, %v2437
        %2470 = vst.msk [vmem:[#allocation3 + $0xd0] sm:$0xff] %vm427, %v2438
        %2471 = vst.msk [vmem:[#allocation3 + $0xe8] sm:$0xff] %vm427, %v2439
        %2472 = vst.msk [vmem:[#allocation3 + $0x100] sm:$0xff] %vm427, %v2440
        %2473 = vst.msk [vmem:[#allocation3 + $0x118] sm:$0xff] %vm427, %v2441
        %2474 = vst.msk [vmem:[#allocation3 + $0x130] sm:$0xff] %vm427, %v2442
        %2475 = vst.msk [vmem:[#allocation3 + $0x148] sm:$0xff] %vm427, %v2443
        %2476 = vst.msk [vmem:[#allocation3 + $0x160] sm:$0xff] %vm427, %v2444
        %2477 = vst.msk [vmem:[#allocation3 + $0x178] sm:$0xff] %vm427, %v2445
        %2478 = vst.msk [vmem:[#allocation3 + $0x190] sm:$0xff] %vm427, %v2446
        %2479 = vst.msk [vmem:[#allocation3 + $0x1a8] sm:$0xff] %vm427, %v2447
        %2480 = vst.msk [vmem:[#allocation3 + $0x1c0] sm:$0xff] %vm427, %v2448
        %2481 = vst.msk [vmem:[#allocation3 + $0x1d8] sm:$0xff] %vm427, %v2449
        %2482 = vst.msk [vmem:[#allocation3 + $0x1f0] sm:$0xff] %vm427, %v2450
        %2483 = vst.msk [vmem:[#allocation3 + $0x208] sm:$0xff] %vm427, %v2451
        %2484 = vst.msk [vmem:[#allocation3 + $0x220] sm:$0xff] %vm427, %v2452
        %2485 = vst.msk [vmem:[#allocation3 + $0x238] sm:$0xff] %vm427, %v2453
        %2486 = vst.msk [vmem:[#allocation3 + $0x250] sm:$0xff] %vm427, %v2454
        %2487 = vst.msk [vmem:[#allocation3 + $0x268] sm:$0xff] %vm427, %v2455
        %2488 = vst.msk [vmem:[#allocation3 + $0x280] sm:$0xff] %vm427, %v2456
        %2489 = vst.msk [vmem:[#allocation3 + $0x298] sm:$0xff] %vm427, %v2457
        %2490 = vst.msk [vmem:[#allocation3 + $0x2b0] sm:$0xff] %vm427, %v2458
        %2491 = vst.msk [vmem:[#allocation3 + $0x2c8] sm:$0xff] %vm427, %v2459
        %2492 = vst.msk [vmem:[#allocation3 + $0x2e0] sm:$0xff] %vm427, %v2460
        %2493 = vst.msk [vmem:[#allocation3 + $0x2f8] sm:$0xff] %vm427, %v2461
        %v2494 = vld [vmem:[#allocation3] sm:$0xff]
        %v2495 = vld [vmem:[#allocation3 + $0x8] sm:$0xff]
        %v2496 = vld [vmem:[#allocation3 + $0x10] sm:$0xff]
        %v2497 = vld [vmem:[#allocation3 + $0x18] sm:$0xff]
        %v2498 = vld [vmem:[#allocation3 + $0x20] sm:$0xff]
        %v2499 = vld [vmem:[#allocation3 + $0x28] sm:$0xff]
        %v2500 = vld [vmem:[#allocation3 + $0x30] sm:$0xff]
        %v2501 = vld [vmem:[#allocation3 + $0x38] sm:$0xff]
        %v2502 = vld [vmem:[#allocation3 + $0x40] sm:$0xff]
        %v2503 = vld [vmem:[#allocation3 + $0x48] sm:$0xff]
        %v2504 = vld [vmem:[#allocation3 + $0x50] sm:$0xff]
        %v2505 = vld [vmem:[#allocation3 + $0x58] sm:$0xff]
        %v2506 = vld [vmem:[#allocation3 + $0x60] sm:$0xff]
        %v2507 = vld [vmem:[#allocation3 + $0x68] sm:$0xff]
        %v2508 = vld [vmem:[#allocation3 + $0x70] sm:$0xff]
        %v2509 = vld [vmem:[#allocation3 + $0x78] sm:$0xff]
        %v2510 = vld [vmem:[#allocation3 + $0x80] sm:$0xff]
        %v2511 = vld [vmem:[#allocation3 + $0x88] sm:$0xff]
        %v2512 = vld [vmem:[#allocation3 + $0x90] sm:$0xff]
        %v2513 = vld [vmem:[#allocation3 + $0x98] sm:$0xff]
        %v2514 = vld [vmem:[#allocation3 + $0xa0] sm:$0xff]
        %v2515 = vld [vmem:[#allocation3 + $0xa8] sm:$0xff]
        %v2516 = vld [vmem:[#allocation3 + $0xb0] sm:$0xff]
        %v2517 = vld [vmem:[#allocation3 + $0xb8] sm:$0xff]
        %v2518 = vld [vmem:[#allocation3 + $0xc0] sm:$0xff]
        %v2519 = vld [vmem:[#allocation3 + $0xc8] sm:$0xff]
        %v2520 = vld [vmem:[#allocation3 + $0xd0] sm:$0xff]
        %v2521 = vld [vmem:[#allocation3 + $0xd8] sm:$0xff]
        %v2522 = vld [vmem:[#allocation3 + $0xe0] sm:$0xff]
        %v2523 = vld [vmem:[#allocation3 + $0xe8] sm:$0xff]
        %v2524 = vld [vmem:[#allocation3 + $0xf0] sm:$0xff]
        %v2525 = vld [vmem:[#allocation3 + $0xf8] sm:$0xff]
        %v2526 = vld [vmem:[#allocation3 + $0x100] sm:$0xff]
        %v2527 = vld [vmem:[#allocation3 + $0x108] sm:$0xff]
        %v2528 = vld [vmem:[#allocation3 + $0x110] sm:$0xff]
        %v2529 = vld [vmem:[#allocation3 + $0x118] sm:$0xff]
        %v2530 = vld [vmem:[#allocation3 + $0x120] sm:$0xff]
        %v2531 = vld [vmem:[#allocation3 + $0x128] sm:$0xff]
        %v2532 = vld [vmem:[#allocation3 + $0x130] sm:$0xff]
        %v2533 = vld [vmem:[#allocation3 + $0x138] sm:$0xff]
        %v2534 = vld [vmem:[#allocation3 + $0x140] sm:$0xff]
        %v2535 = vld [vmem:[#allocation3 + $0x148] sm:$0xff]
        %v2536 = vld [vmem:[#allocation3 + $0x150] sm:$0xff]
        %v2537 = vld [vmem:[#allocation3 + $0x158] sm:$0xff]
        %v2538 = vld [vmem:[#allocation3 + $0x160] sm:$0xff]
        %v2539 = vld [vmem:[#allocation3 + $0x168] sm:$0xff]
        %v2540 = vld [vmem:[#allocation3 + $0x170] sm:$0xff]
        %v2541 = vld [vmem:[#allocation3 + $0x178] sm:$0xff]
        %v2542 = vld [vmem:[#allocation3 + $0x180] sm:$0xff]
        %v2543 = vld [vmem:[#allocation3 + $0x188] sm:$0xff]
        %v2544 = vld [vmem:[#allocation3 + $0x190] sm:$0xff]
        %v2545 = vld [vmem:[#allocation3 + $0x198] sm:$0xff]
        %v2546 = vld [vmem:[#allocation3 + $0x1a0] sm:$0xff]
        %v2547 = vld [vmem:[#allocation3 + $0x1a8] sm:$0xff]
        %v2548 = vld [vmem:[#allocation3 + $0x1b0] sm:$0xff]
        %v2549 = vld [vmem:[#allocation3 + $0x1b8] sm:$0xff]
        %v2550 = vld [vmem:[#allocation3 + $0x1c0] sm:$0xff]
        %v2551 = vld [vmem:[#allocation3 + $0x1c8] sm:$0xff]
        %v2552 = vld [vmem:[#allocation3 + $0x1d0] sm:$0xff]
        %v2553 = vld [vmem:[#allocation3 + $0x1d8] sm:$0xff]
        %v2554 = vld [vmem:[#allocation3 + $0x1e0] sm:$0xff]
        %v2555 = vld [vmem:[#allocation3 + $0x1e8] sm:$0xff]
        %v2556 = vld [vmem:[#allocation3 + $0x1f0] sm:$0xff]
        %v2557 = vld [vmem:[#allocation3 + $0x1f8] sm:$0xff]
        %v2558 = vld [vmem:[#allocation3 + $0x200] sm:$0xff]
        %v2559 = vld [vmem:[#allocation3 + $0x208] sm:$0xff]
        %v2560 = vld [vmem:[#allocation3 + $0x210] sm:$0xff]
        %v2561 = vld [vmem:[#allocation3 + $0x218] sm:$0xff]
        %v2562 = vld [vmem:[#allocation3 + $0x220] sm:$0xff]
        %v2563 = vld [vmem:[#allocation3 + $0x228] sm:$0xff]
        %v2564 = vld [vmem:[#allocation3 + $0x230] sm:$0xff]
        %v2565 = vld [vmem:[#allocation3 + $0x238] sm:$0xff]
        %v2566 = vld [vmem:[#allocation3 + $0x240] sm:$0xff]
        %v2567 = vld [vmem:[#allocation3 + $0x248] sm:$0xff]
        %v2568 = vld [vmem:[#allocation3 + $0x250] sm:$0xff]
        %v2569 = vld [vmem:[#allocation3 + $0x258] sm:$0xff]
        %v2570 = vld [vmem:[#allocation3 + $0x260] sm:$0xff]
        %v2571 = vld [vmem:[#allocation3 + $0x268] sm:$0xff]
        %v2572 = vld [vmem:[#allocation3 + $0x270] sm:$0xff]
        %v2573 = vld [vmem:[#allocation3 + $0x278] sm:$0xff]
        %v2574 = vld [vmem:[#allocation3 + $0x280] sm:$0xff]
        %v2575 = vld [vmem:[#allocation3 + $0x288] sm:$0xff]
        %v2576 = vld [vmem:[#allocation3 + $0x290] sm:$0xff]
        %v2577 = vld [vmem:[#allocation3 + $0x298] sm:$0xff]
        %v2578 = vld [vmem:[#allocation3 + $0x2a0] sm:$0xff]
        %v2579 = vld [vmem:[#allocation3 + $0x2a8] sm:$0xff]
        %v2580 = vld [vmem:[#allocation3 + $0x2b0] sm:$0xff]
        %v2581 = vld [vmem:[#allocation3 + $0x2b8] sm:$0xff]
        %v2582 = vld [vmem:[#allocation3 + $0x2c0] sm:$0xff]
        %v2583 = vld [vmem:[#allocation3 + $0x2c8] sm:$0xff]
        %v2584 = vld [vmem:[#allocation3 + $0x2d0] sm:$0xff]
        %v2585 = vld [vmem:[#allocation3 + $0x2d8] sm:$0xff]
        %v2586 = vld [vmem:[#allocation3 + $0x2e0] sm:$0xff]
        %v2587 = vld [vmem:[#allocation3 + $0x2e8] sm:$0xff]
        %v2588 = vld [vmem:[#allocation3 + $0x2f0] sm:$0xff]
        %v2589 = vld [vmem:[#allocation3 + $0x2f8] sm:$0xff]
        %v2590 = vpack.c.bf16 %v2497, %v2494
        %v2591 = vpack.c.bf16 %v2498, %v2495
        %v2592 = vpack.c.bf16 %v2499, %v2496
        %v2593 = vpack.c.bf16 %v2503, %v2500
        %v2594 = vpack.c.bf16 %v2504, %v2501
        %v2595 = vpack.c.bf16 %v2505, %v2502
        %v2596 = vpack.c.bf16 %v2509, %v2506
        %v2597 = vpack.c.bf16 %v2510, %v2507
        %v2598 = vpack.c.bf16 %v2511, %v2508
        %v2599 = vpack.c.bf16 %v2515, %v2512
        %v2600 = vpack.c.bf16 %v2516, %v2513
        %v2601 = vpack.c.bf16 %v2517, %v2514
        %v2602 = vpack.c.bf16 %v2521, %v2518
        %v2603 = vpack.c.bf16 %v2522, %v2519
        %v2604 = vpack.c.bf16 %v2523, %v2520
        %v2605 = vpack.c.bf16 %v2527, %v2524
        %v2606 = vpack.c.bf16 %v2528, %v2525
        %v2607 = vpack.c.bf16 %v2529, %v2526
        %v2608 = vpack.c.bf16 %v2533, %v2530
        %v2609 = vpack.c.bf16 %v2534, %v2531
        %v2610 = vpack.c.bf16 %v2535, %v2532
        %v2611 = vpack.c.bf16 %v2539, %v2536
        %v2612 = vpack.c.bf16 %v2540, %v2537
        %v2613 = vpack.c.bf16 %v2541, %v2538
        %v2614 = vpack.c.bf16 %v2545, %v2542
        %v2615 = vpack.c.bf16 %v2546, %v2543
        %v2616 = vpack.c.bf16 %v2547, %v2544
        %v2617 = vpack.c.bf16 %v2551, %v2548
        %v2618 = vpack.c.bf16 %v2552, %v2549
        %v2619 = vpack.c.bf16 %v2553, %v2550
        %v2620 = vpack.c.bf16 %v2557, %v2554
        %v2621 = vpack.c.bf16 %v2558, %v2555
        %v2622 = vpack.c.bf16 %v2559, %v2556
        %v2623 = vpack.c.bf16 %v2563, %v2560
        %v2624 = vpack.c.bf16 %v2564, %v2561
        %v2625 = vpack.c.bf16 %v2565, %v2562
        %v2626 = vpack.c.bf16 %v2569, %v2566
        %v2627 = vpack.c.bf16 %v2570, %v2567
        %v2628 = vpack.c.bf16 %v2571, %v2568
        %v2629 = vpack.c.bf16 %v2575, %v2572
        %v2630 = vpack.c.bf16 %v2576, %v2573
        %v2631 = vpack.c.bf16 %v2577, %v2574
        %v2632 = vpack.c.bf16 %v2581, %v2578
        %v2633 = vpack.c.bf16 %v2582, %v2579
        %v2634 = vpack.c.bf16 %v2583, %v2580
        %v2635 = vpack.c.bf16 %v2587, %v2584
        %v2636 = vpack.c.bf16 %v2588, %v2585
        %v2637 = vpack.c.bf16 %v2589, %v2586
        %v2638 = vld [vmem:[%s4] sm:$0xf]
        %v2639 = vld [vmem:[%s4 + $0x4] sm:$0xf]
        %v2640 = vld [vmem:[%s4 + $0x8] sm:$0xf]
        %v2641 = vld [vmem:[%s4 + $0xc] sm:$0xf]
        %v2642 = vld [vmem:[%s4 + $0x10] sm:$0xf]
        %v2643 = vld [vmem:[%s4 + $0x14] sm:$0xf]
        %v2644 = vld [vmem:[%s4 + $0x18] sm:$0xf]
        %v2645 = vld [vmem:[%s4 + $0x1c] sm:$0xf]
        %v2646 = vld [vmem:[%s4 + $0x20] sm:$0xf]
        %v2647 = vld [vmem:[%s4 + $0x24] sm:$0xf]
        %v2648 = vld [vmem:[%s4 + $0x28] sm:$0xf]
        %v2649 = vld [vmem:[%s4 + $0x2c] sm:$0xf]
        %v2650 = vld [vmem:[%s4 + $0x30] sm:$0xf]
        %v2651 = vld [vmem:[%s4 + $0x34] sm:$0xf]
        %v2652 = vld [vmem:[%s4 + $0x38] sm:$0xf]
        %v2653 = vld [vmem:[%s4 + $0x3c] sm:$0xf]
        %v2654 = vld [vmem:[%s4 + $0x40] sm:$0xf]
        %v2655 = vld [vmem:[%s4 + $0x44] sm:$0xf]
        %v2656 = vld [vmem:[%s4 + $0x48] sm:$0xf]
        %v2657 = vld [vmem:[%s4 + $0x4c] sm:$0xf]
        %v2658 = vld [vmem:[%s4 + $0x50] sm:$0xf]
        %v2659 = vld [vmem:[%s4 + $0x54] sm:$0xf]
        %v2660 = vld [vmem:[%s4 + $0x58] sm:$0xf]
        %v2661 = vld [vmem:[%s4 + $0x5c] sm:$0xf]
        %v2662 = vld [vmem:[%s4 + $0x60] sm:$0xf]
        %v2663 = vld [vmem:[%s4 + $0x64] sm:$0xf]
        %v2664 = vld [vmem:[%s4 + $0x68] sm:$0xf]
        %v2665 = vld [vmem:[%s4 + $0x6c] sm:$0xf]
        %v2666 = vld [vmem:[%s4 + $0x70] sm:$0xf]
        %v2667 = vld [vmem:[%s4 + $0x74] sm:$0xf]
        %v2668 = vld [vmem:[%s4 + $0x78] sm:$0xf]
        %v2669 = vld [vmem:[%s4 + $0x7c] sm:$0xf]
        %v2670 = vld [vmem:[%s4 + $0x80] sm:$0xf]
        %v2671 = vld [vmem:[%s4 + $0x84] sm:$0xf]
        %v2672 = vld [vmem:[%s4 + $0x88] sm:$0xf]
        %v2673 = vld [vmem:[%s4 + $0x8c] sm:$0xf]
        %v2674 = vld [vmem:[%s5] sm:$0x1]
        %v2676 = vlaneseq
        %v2677 = vshrl.u32 %v2676, 7
        %v2678 = vsub.s32 0, %v2677
        %v2679 = vrot.slane %v2674, %v2678
        %v2717 = vunpack.c.l.b16 %v2638
        %v2718 = vunpack.c.l.b16 %v2639
        %v2719 = vunpack.c.l.b16 %v2640
        %v2720 = vunpack.c.l.b16 %v2641
        %v2721 = vunpack.c.l.b16 %v2642
        %v2722 = vunpack.c.l.b16 %v2643
        %v2723 = vunpack.c.l.b16 %v2644
        %v2724 = vunpack.c.l.b16 %v2645
        %v2725 = vunpack.c.l.b16 %v2646
        %v2726 = vunpack.c.l.b16 %v2647
        %v2727 = vunpack.c.l.b16 %v2648
        %v2728 = vunpack.c.l.b16 %v2649
        %v2729 = vunpack.c.l.b16 %v2650
        %v2730 = vunpack.c.l.b16 %v2651
        %v2731 = vunpack.c.l.b16 %v2652
        %v2732 = vunpack.c.l.b16 %v2653
        %v2733 = vunpack.c.l.b16 %v2654
        %v2734 = vunpack.c.l.b16 %v2655
        %v2735 = vunpack.c.l.b16 %v2656
        %v2736 = vunpack.c.l.b16 %v2657
        %v2737 = vunpack.c.l.b16 %v2658
        %v2738 = vunpack.c.l.b16 %v2659
        %v2739 = vunpack.c.l.b16 %v2660
        %v2740 = vunpack.c.l.b16 %v2661
        %v2741 = vunpack.c.l.b16 %v2662
        %v2742 = vunpack.c.l.b16 %v2663
        %v2743 = vunpack.c.l.b16 %v2664
        %v2744 = vunpack.c.l.b16 %v2665
        %v2745 = vunpack.c.l.b16 %v2666
        %v2746 = vunpack.c.l.b16 %v2667
        %v2747 = vunpack.c.l.b16 %v2668
        %v2748 = vunpack.c.l.b16 %v2669
        %v2749 = vunpack.c.l.b16 %v2670
        %v2750 = vunpack.c.l.b16 %v2671
        %v2751 = vunpack.c.l.b16 %v2672
        %v2752 = vunpack.c.l.b16 %v2673
        %v2753 = vpack.c.b16 %v2718, %v2717
        %v2754 = vpack.c.b16 %v2720, %v2719
        %v2755 = vpack.c.b16 %v2722, %v2721
        %v2756 = vpack.c.b16 %v2724, %v2723
        %v2757 = vpack.c.b16 %v2726, %v2725
        %v2758 = vpack.c.b16 %v2728, %v2727
        %v2759 = vpack.c.b16 %v2730, %v2729
        %v2760 = vpack.c.b16 %v2732, %v2731
        %v2761 = vpack.c.b16 %v2734, %v2733
        %v2762 = vpack.c.b16 %v2736, %v2735
        %v2763 = vpack.c.b16 %v2738, %v2737
        %v2764 = vpack.c.b16 %v2740, %v2739
        %v2765 = vpack.c.b16 %v2742, %v2741
        %v2766 = vpack.c.b16 %v2744, %v2743
        %v2767 = vpack.c.b16 %v2746, %v2745
        %v2768 = vpack.c.b16 %v2748, %v2747
        %v2769 = vpack.c.b16 %v2750, %v2749
        %v2770 = vpack.c.b16 %v2752, %v2751
        %v2790 = vsel %vm427, %v2592, 0
        %v2793 = vsel %vm427, %v2595, 0
        %v2796 = vsel %vm427, %v2598, 0
        %v2799 = vsel %vm427, %v2601, 0
        %v2802 = vsel %vm427, %v2604, 0
        %v2805 = vsel %vm427, %v2607, 0
        %v2808 = vsel %vm427, %v2610, 0
        %v2811 = vsel %vm427, %v2613, 0
        %v2814 = vsel %vm427, %v2616, 0
        %v2817 = vsel %vm427, %v2619, 0
        %v2820 = vsel %vm427, %v2622, 0
        %v2823 = vsel %vm427, %v2625, 0
        %v2826 = vsel %vm427, %v2628, 0
        %v2829 = vsel %vm427, %v2631, 0
        %v2832 = vsel %vm427, %v2634, 0
        %v2835 = vsel %vm427, %v2637, 0
        %2837 = vmatprep.subr.bf16.mxu0 0
        %2838 = vmatpush1.bf16.msra.mxu0 %v2760
        %2839 = vmatprep.subr.bf16.mxu0 0
        %2840 = vmatpush1.bf16.msra.mxu0 %v2759
        %2841 = vmatprep.subr.bf16.mxu0 0
        %2842 = vmatpush1.bf16.msra.mxu0 %v2758
        %2843 = vmatprep.subr.bf16.mxu0 0
        %2844 = vmatpush1.bf16.msra.mxu0 %v2757
        %2845 = vmatprep.subr.bf16.mxu0 0
        %2846 = vmatpush1.bf16.msra.mxu0 %v2756
        %2847 = vmatprep.subr.bf16.mxu0 0
        %2848 = vmatpush1.bf16.msra.mxu0 %v2755
        %2849 = vmatprep.subr.bf16.mxu0 0
        %2850 = vmatpush1.bf16.msra.mxu0 %v2754
        %2851 = vmatprep.subr.bf16.mxu0 0
        %2852 = vmatpush1.bf16.msra.mxu0 %v2753
        %2853 = vmatprep.subr.bf16.mxu0 0
        %2854 = vmatpush2.bf16.msra.mxu0 %v2768
        %2855 = vmatprep.subr.bf16.mxu0 0
        %2856 = vmatpush2.bf16.msra.mxu0 %v2767
        %2857 = vmatprep.subr.bf16.mxu0 0
        %2858 = vmatpush2.bf16.msra.mxu0 %v2766
        %2859 = vmatprep.subr.bf16.mxu0 0
        %2860 = vmatpush2.bf16.msra.mxu0 %v2765
        %2861 = vmatprep.subr.bf16.mxu0 0
        %2862 = vmatpush2.bf16.msra.mxu0 %v2764
        %2863 = vmatprep.subr.bf16.mxu0 0
        %2864 = vmatpush2.bf16.msra.mxu0 %v2763
        %2865 = vmatprep.subr.bf16.mxu0 0
        %2866 = vmatpush2.bf16.msra.mxu0 %v2762
        %2867 = vmatprep.subr.bf16.mxu0 0
        %2868 = vmatpush2.bf16.msra.mxu0 %v2761
        %2869 = vmatprep.mubr.bf16.mxu0 %v2591
        %2870 = vmatmul.mubr.bf16.gmra.mxu0 %v2590
        %v2871 = vpop.f32.mrf.mxu0
        %v2872 = vadd.f32 %v2679, %v2871
        %v2873 = vpop.f32.mrf.mxu0
        %v2874 = vpop.f32.mrf.mxu0
        %v2875 = vadd.f32 %v2679, %v2874
        %v2876 = vpop.f32.mrf.mxu0
        %2877 = vmatprep.mubr.bf16.mxu0 %v2594
        %2878 = vmatmul.mubr.bf16.gmra.mxu0 %v2593
        %v2879 = vpop.f32.mrf.mxu0
        %v2880 = vadd.f32 %v2679, %v2879
        %v2881 = vpop.f32.mrf.mxu0
        %v2882 = vpop.f32.mrf.mxu0
        %v2883 = vadd.f32 %v2679, %v2882
        %v2884 = vpop.f32.mrf.mxu0
        %2885 = vmatprep.mubr.bf16.mxu0 %v2597
        %2886 = vmatmul.mubr.bf16.gmra.mxu0 %v2596
        %v2887 = vpop.f32.mrf.mxu0
        %v2888 = vadd.f32 %v2679, %v2887
        %v2889 = vpop.f32.mrf.mxu0
        %v2890 = vpop.f32.mrf.mxu0
        %v2891 = vadd.f32 %v2679, %v2890
        %v2892 = vpop.f32.mrf.mxu0
        %2893 = vmatprep.mubr.bf16.mxu0 %v2600
        %2894 = vmatmul.mubr.bf16.gmra.mxu0 %v2599
        %v2895 = vpop.f32.mrf.mxu0
        %v2896 = vadd.f32 %v2679, %v2895
        %v2897 = vpop.f32.mrf.mxu0
        %v2898 = vpop.f32.mrf.mxu0
        %v2899 = vadd.f32 %v2679, %v2898
        %v2900 = vpop.f32.mrf.mxu0
        %2901 = vmatprep.mubr.bf16.mxu0 %v2603
        %2902 = vmatmul.mubr.bf16.gmra.mxu0 %v2602
        %v2903 = vpop.f32.mrf.mxu0
        %v2904 = vadd.f32 %v2679, %v2903
        %v2905 = vpop.f32.mrf.mxu0
        %v2906 = vpop.f32.mrf.mxu0
        %v2907 = vadd.f32 %v2679, %v2906
        %v2908 = vpop.f32.mrf.mxu0
        %2909 = vmatprep.mubr.bf16.mxu0 %v2606
        %2910 = vmatmul.mubr.bf16.gmra.mxu0 %v2605
        %v2911 = vpop.f32.mrf.mxu0
        %v2912 = vadd.f32 %v2679, %v2911
        %v2913 = vpop.f32.mrf.mxu0
        %v2914 = vpop.f32.mrf.mxu0
        %v2915 = vadd.f32 %v2679, %v2914
        %v2916 = vpop.f32.mrf.mxu0
        %2917 = vmatprep.mubr.bf16.mxu0 %v2609
        %2918 = vmatmul.mubr.bf16.gmra.mxu0 %v2608
        %v2919 = vpop.f32.mrf.mxu0
        %v2920 = vadd.f32 %v2679, %v2919
        %v2921 = vpop.f32.mrf.mxu0
        %v2922 = vpop.f32.mrf.mxu0
        %v2923 = vadd.f32 %v2679, %v2922
        %v2924 = vpop.f32.mrf.mxu0
        %2925 = vmatprep.mubr.bf16.mxu0 %v2612
        %2926 = vmatmul.mubr.bf16.gmra.mxu0 %v2611
        %v2927 = vpop.f32.mrf.mxu0
        %v2928 = vadd.f32 %v2679, %v2927
        %v2929 = vpop.f32.mrf.mxu0
        %v2930 = vpop.f32.mrf.mxu0
        %v2931 = vadd.f32 %v2679, %v2930
        %v2932 = vpop.f32.mrf.mxu0
        %2933 = vmatprep.mubr.bf16.mxu0 %v2615
        %2934 = vmatmul.mubr.bf16.gmra.mxu0 %v2614
        %v2935 = vpop.f32.mrf.mxu0
        %v2936 = vadd.f32 %v2679, %v2935
        %v2937 = vpop.f32.mrf.mxu0
        %v2938 = vpop.f32.mrf.mxu0
        %v2939 = vadd.f32 %v2679, %v2938
        %v2940 = vpop.f32.mrf.mxu0
        %2941 = vmatprep.mubr.bf16.mxu0 %v2618
        %2942 = vmatmul.mubr.bf16.gmra.mxu0 %v2617
        %v2943 = vpop.f32.mrf.mxu0
        %v2944 = vadd.f32 %v2679, %v2943
        %v2945 = vpop.f32.mrf.mxu0
        %v2946 = vpop.f32.mrf.mxu0
        %v2947 = vadd.f32 %v2679, %v2946
        %v2948 = vpop.f32.mrf.mxu0
        %2949 = vmatprep.mubr.bf16.mxu0 %v2621
        %2950 = vmatmul.mubr.bf16.gmra.mxu0 %v2620
        %v2951 = vpop.f32.mrf.mxu0
        %v2952 = vadd.f32 %v2679, %v2951
        %v2953 = vpop.f32.mrf.mxu0
        %v2954 = vpop.f32.mrf.mxu0
        %v2955 = vadd.f32 %v2679, %v2954
        %v2956 = vpop.f32.mrf.mxu0
        %2957 = vmatprep.mubr.bf16.mxu0 %v2624
        %2958 = vmatmul.mubr.bf16.gmra.mxu0 %v2623
        %v2959 = vpop.f32.mrf.mxu0
        %v2960 = vadd.f32 %v2679, %v2959
        %v2961 = vpop.f32.mrf.mxu0
        %v2962 = vpop.f32.mrf.mxu0
        %v2963 = vadd.f32 %v2679, %v2962
        %v2964 = vpop.f32.mrf.mxu0
        %2965 = vmatprep.mubr.bf16.mxu0 %v2627
        %2966 = vmatmul.mubr.bf16.gmra.mxu0 %v2626
        %v2967 = vpop.f32.mrf.mxu0
        %v2968 = vadd.f32 %v2679, %v2967
        %v2969 = vpop.f32.mrf.mxu0
        %v2970 = vpop.f32.mrf.mxu0
        %v2971 = vadd.f32 %v2679, %v2970
        %v2972 = vpop.f32.mrf.mxu0
        %2973 = vmatprep.mubr.bf16.mxu0 %v2630
        %2974 = vmatmul.mubr.bf16.gmra.mxu0 %v2629
        %v2975 = vpop.f32.mrf.mxu0
        %v2976 = vadd.f32 %v2679, %v2975
        %v2977 = vpop.f32.mrf.mxu0
        %v2978 = vpop.f32.mrf.mxu0
        %v2979 = vadd.f32 %v2679, %v2978
        %v2980 = vpop.f32.mrf.mxu0
        %2981 = vmatprep.mubr.bf16.mxu0 %v2633
        %2982 = vmatmul.mubr.bf16.gmra.mxu0 %v2632
        %v2983 = vpop.f32.mrf.mxu0
        %v2984 = vadd.f32 %v2679, %v2983
        %v2985 = vpop.f32.mrf.mxu0
        %v2986 = vpop.f32.mrf.mxu0
        %v2987 = vadd.f32 %v2679, %v2986
        %v2988 = vpop.f32.mrf.mxu0
        %2989 = vmatprep.mubr.bf16.mxu0 %v2636
        %2990 = vmatmul.mubr.bf16.gmra.mxu0 %v2635
        %v2991 = vpop.f32.mrf.mxu0
        %v2992 = vadd.f32 %v2679, %v2991
        %v2993 = vpop.f32.mrf.mxu0
        %v2994 = vpop.f32.mrf.mxu0
        %v2995 = vadd.f32 %v2679, %v2994
        %v2996 = vpop.f32.mrf.mxu0
        %2997 = vdwg.mxu0
        %2998 = vmatprep.subr.bf16.mxu0 0
        %2999 = vmatpush1.bf16.msra.mxu0 0
        %3000 = vmatprep.subr.bf16.mxu0 0
        %3001 = vmatpush1.bf16.msra.mxu0 0
        %3002 = vmatprep.subr.bf16.mxu0 0
        %3003 = vmatpush1.bf16.msra.mxu0 0
        %3004 = vmatprep.subr.bf16.mxu0 0
        %3005 = vmatpush1.bf16.msra.mxu0 0
        %3006 = vmatprep.subr.bf16.mxu0 0
        %3007 = vmatpush1.bf16.msra.mxu0 0
        %3008 = vmatprep.subr.bf16.mxu0 0
        %3009 = vmatpush1.bf16.msra.mxu0 0
        %3010 = vmatprep.subr.bf16.mxu0 0
        %3011 = vmatpush1.bf16.msra.mxu0 %v2770
        %3012 = vmatprep.subr.bf16.mxu0 0
        %3013 = vmatpush1.bf16.msra.mxu0 %v2769
        %3014 = vmatprep.subr.bf16.mxu0 0
        %3015 = vmatpush2.bf16.msra.mxu0 0
        %3016 = vmatprep.subr.bf16.mxu0 0
        %3017 = vmatpush2.bf16.msra.mxu0 0
        %3018 = vmatprep.subr.bf16.mxu0 0
        %3019 = vmatpush2.bf16.msra.mxu0 0
        %3020 = vmatprep.subr.bf16.mxu0 0
        %3021 = vmatpush2.bf16.msra.mxu0 0
        %3022 = vmatprep.subr.bf16.mxu0 0
        %3023 = vmatpush2.bf16.msra.mxu0 0
        %3024 = vmatprep.subr.bf16.mxu0 0
        %3025 = vmatpush2.bf16.msra.mxu0 0
        %3026 = vmatprep.subr.bf16.mxu0 0
        %3027 = vmatpush2.bf16.msra.mxu0 0
        %3028 = vmatprep.subr.bf16.mxu0 0
        %3029 = vmatpush2.bf16.msra.mxu0 0
        %3030 = vmatprep.mubr.bf16.mxu0 0
        %3031 = vmatmul.mubr.bf16.gmra.mxu0 %v2790
        %v3032 = vpop.f32.mrf.mxu0
        %v3033 = vadd.f32 %v2872, %v3032
        %v3034 = vpop.f32.mrf.mxu0
        %v3035 = vpop.f32.mrf.mxu0
        %v3036 = vadd.f32 %v2875, %v3035
        %v3037 = vpop.f32.mrf.mxu0
        %3038 = vmatprep.mubr.bf16.mxu0 0
        %3039 = vmatmul.mubr.bf16.gmra.mxu0 %v2793
        %v3040 = vpop.f32.mrf.mxu0
        %v3041 = vadd.f32 %v2880, %v3040
        %v3042 = vpop.f32.mrf.mxu0
        %v3043 = vpop.f32.mrf.mxu0
        %v3044 = vadd.f32 %v2883, %v3043
        %v3045 = vpop.f32.mrf.mxu0
        %3046 = vmatprep.mubr.bf16.mxu0 0
        %3047 = vmatmul.mubr.bf16.gmra.mxu0 %v2796
        %v3048 = vpop.f32.mrf.mxu0
        %v3049 = vadd.f32 %v2888, %v3048
        %v3050 = vpop.f32.mrf.mxu0
        %v3051 = vpop.f32.mrf.mxu0
        %v3052 = vadd.f32 %v2891, %v3051
        %v3053 = vpop.f32.mrf.mxu0
        %3054 = vmatprep.mubr.bf16.mxu0 0
        %3055 = vmatmul.mubr.bf16.gmra.mxu0 %v2799
        %v3056 = vpop.f32.mrf.mxu0
        %v3057 = vadd.f32 %v2896, %v3056
        %v3058 = vpop.f32.mrf.mxu0
        %v3059 = vpop.f32.mrf.mxu0
        %v3060 = vadd.f32 %v2899, %v3059
        %v3061 = vpop.f32.mrf.mxu0
        %3062 = vmatprep.mubr.bf16.mxu0 0
        %3063 = vmatmul.mubr.bf16.gmra.mxu0 %v2802
        %v3064 = vpop.f32.mrf.mxu0
        %v3065 = vadd.f32 %v2904, %v3064
        %v3066 = vpop.f32.mrf.mxu0
        %v3067 = vpop.f32.mrf.mxu0
        %v3068 = vadd.f32 %v2907, %v3067
        %v3069 = vpop.f32.mrf.mxu0
        %3070 = vmatprep.mubr.bf16.mxu0 0
        %3071 = vmatmul.mubr.bf16.gmra.mxu0 %v2805
        %v3072 = vpop.f32.mrf.mxu0
        %v3073 = vadd.f32 %v2912, %v3072
        %v3074 = vpop.f32.mrf.mxu0
        %v3075 = vpop.f32.mrf.mxu0
        %v3076 = vadd.f32 %v2915, %v3075
        %v3077 = vpop.f32.mrf.mxu0
        %3078 = vmatprep.mubr.bf16.mxu0 0
        %3079 = vmatmul.mubr.bf16.gmra.mxu0 %v2808
        %v3080 = vpop.f32.mrf.mxu0
        %v3081 = vadd.f32 %v2920, %v3080
        %v3082 = vpop.f32.mrf.mxu0
        %v3083 = vpop.f32.mrf.mxu0
        %v3084 = vadd.f32 %v2923, %v3083
        %v3085 = vpop.f32.mrf.mxu0
        %3086 = vmatprep.mubr.bf16.mxu0 0
        %3087 = vmatmul.mubr.bf16.gmra.mxu0 %v2811
        %v3088 = vpop.f32.mrf.mxu0
        %v3089 = vadd.f32 %v2928, %v3088
        %v3090 = vpop.f32.mrf.mxu0
        %v3091 = vpop.f32.mrf.mxu0
        %v3092 = vadd.f32 %v2931, %v3091
        %v3093 = vpop.f32.mrf.mxu0
        %3094 = vmatprep.mubr.bf16.mxu0 0
        %3095 = vmatmul.mubr.bf16.gmra.mxu0 %v2814
        %v3096 = vpop.f32.mrf.mxu0
        %v3097 = vadd.f32 %v2936, %v3096
        %v3098 = vpop.f32.mrf.mxu0
        %v3099 = vpop.f32.mrf.mxu0
        %v3100 = vadd.f32 %v2939, %v3099
        %v3101 = vpop.f32.mrf.mxu0
        %3102 = vmatprep.mubr.bf16.mxu0 0
        %3103 = vmatmul.mubr.bf16.gmra.mxu0 %v2817
        %v3104 = vpop.f32.mrf.mxu0
        %v3105 = vadd.f32 %v2944, %v3104
        %v3106 = vpop.f32.mrf.mxu0
        %v3107 = vpop.f32.mrf.mxu0
        %v3108 = vadd.f32 %v2947, %v3107
        %v3109 = vpop.f32.mrf.mxu0
        %3110 = vmatprep.mubr.bf16.mxu0 0
        %3111 = vmatmul.mubr.bf16.gmra.mxu0 %v2820
        %v3112 = vpop.f32.mrf.mxu0
        %v3113 = vadd.f32 %v2952, %v3112
        %v3114 = vpop.f32.mrf.mxu0
        %v3115 = vpop.f32.mrf.mxu0
        %v3116 = vadd.f32 %v2955, %v3115
        %v3117 = vpop.f32.mrf.mxu0
        %3118 = vmatprep.mubr.bf16.mxu0 0
        %3119 = vmatmul.mubr.bf16.gmra.mxu0 %v2823
        %v3120 = vpop.f32.mrf.mxu0
        %v3121 = vadd.f32 %v2960, %v3120
        %v3122 = vpop.f32.mrf.mxu0
        %v3123 = vpop.f32.mrf.mxu0
        %v3124 = vadd.f32 %v2963, %v3123
        %v3125 = vpop.f32.mrf.mxu0
        %3126 = vmatprep.mubr.bf16.mxu0 0
        %3127 = vmatmul.mubr.bf16.gmra.mxu0 %v2826
        %v3128 = vpop.f32.mrf.mxu0
        %v3129 = vadd.f32 %v2968, %v3128
        %v3130 = vpop.f32.mrf.mxu0
        %v3131 = vpop.f32.mrf.mxu0
        %v3132 = vadd.f32 %v2971, %v3131
        %v3133 = vpop.f32.mrf.mxu0
        %3134 = vmatprep.mubr.bf16.mxu0 0
        %3135 = vmatmul.mubr.bf16.gmra.mxu0 %v2829
        %v3136 = vpop.f32.mrf.mxu0
        %v3137 = vadd.f32 %v2976, %v3136
        %v3138 = vpop.f32.mrf.mxu0
        %v3139 = vpop.f32.mrf.mxu0
        %v3140 = vadd.f32 %v2979, %v3139
        %v3141 = vpop.f32.mrf.mxu0
        %3142 = vmatprep.mubr.bf16.mxu0 0
        %3143 = vmatmul.mubr.bf16.gmra.mxu0 %v2832
        %v3144 = vpop.f32.mrf.mxu0
        %v3145 = vadd.f32 %v2984, %v3144
        %v3146 = vpop.f32.mrf.mxu0
        %v3147 = vpop.f32.mrf.mxu0
        %v3148 = vadd.f32 %v2987, %v3147
        %v3149 = vpop.f32.mrf.mxu0
        %3150 = vmatprep.mubr.bf16.mxu0 0
        %3151 = vmatmul.mubr.bf16.gmra.mxu0 %v2835
        %v3152 = vpop.f32.mrf.mxu0
        %v3153 = vadd.f32 %v2992, %v3152
        %v3154 = vpop.f32.mrf.mxu0
        %v3155 = vpop.f32.mrf.mxu0
        %v3156 = vadd.f32 %v2995, %v3155
        %v3157 = vpop.f32.mrf.mxu0
        %3158 = vdwg.mxu0
        %v3159 = vld [vmem:[%s8] sm:$0x1]
        %v3160 = vld [vmem:[%s9] sm:$0x1]
        %v3161 = vadd.f32 %v596, 1.0
        %v3162 = vsel %vm427, %v3033, 0.0
        %v3163 = vsel %vm427, %v3036, 0.0
        %v3164 = vadd.f32 %v3162, %v3163
        %v3165 = vsel %vm427, %v3041, 0.0
        %v3166 = vadd.f32 %v3164, %v3165
        %v3167 = vsel %vm427, %v3044, 0.0
        %v3168 = vadd.f32 %v3166, %v3167
        %v3169 = vsel %vm427, %v3049, 0.0
        %v3170 = vadd.f32 %v3168, %v3169
        %v3171 = vsel %vm427, %v3052, 0.0
        %v3172 = vadd.f32 %v3170, %v3171
        %v3173 = vsel %vm427, %v3057, 0.0
        %v3174 = vadd.f32 %v3172, %v3173
        %v3175 = vsel %vm427, %v3060, 0.0
        %v3176 = vadd.f32 %v3174, %v3175
        %v3177 = vsel %vm427, %v3065, 0.0
        %v3178 = vadd.f32 %v3176, %v3177
        %v3179 = vsel %vm427, %v3068, 0.0
        %v3180 = vadd.f32 %v3178, %v3179
        %v3181 = vsel %vm427, %v3073, 0.0
        %v3182 = vadd.f32 %v3180, %v3181
        %v3183 = vsel %vm427, %v3076, 0.0
        %v3184 = vadd.f32 %v3182, %v3183
        %v3185 = vsel %vm427, %v3081, 0.0
        %v3186 = vadd.f32 %v3184, %v3185
        %v3187 = vsel %vm427, %v3084, 0.0
        %v3188 = vadd.f32 %v3186, %v3187
        %v3189 = vsel %vm427, %v3089, 0.0
        %v3190 = vadd.f32 %v3188, %v3189
        %v3191 = vsel %vm427, %v3092, 0.0
        %v3192 = vadd.f32 %v3190, %v3191
        %v3193 = vsel %vm427, %v3097, 0.0
        %v3194 = vadd.f32 %v3192, %v3193
        %v3195 = vsel %vm427, %v3100, 0.0
        %v3196 = vadd.f32 %v3194, %v3195
        %v3197 = vsel %vm427, %v3105, 0.0
        %v3198 = vadd.f32 %v3196, %v3197
        %v3199 = vsel %vm427, %v3108, 0.0
        %v3200 = vadd.f32 %v3198, %v3199
        %v3201 = vsel %vm427, %v3113, 0.0
        %v3202 = vadd.f32 %v3200, %v3201
        %v3203 = vsel %vm427, %v3116, 0.0
        %v3204 = vadd.f32 %v3202, %v3203
        %v3205 = vsel %vm427, %v3121, 0.0
        %v3206 = vadd.f32 %v3204, %v3205
        %v3207 = vsel %vm427, %v3124, 0.0
        %v3208 = vadd.f32 %v3206, %v3207
        %v3209 = vsel %vm427, %v3129, 0.0
        %v3210 = vadd.f32 %v3208, %v3209
        %v3211 = vsel %vm427, %v3132, 0.0
        %v3212 = vadd.f32 %v3210, %v3211
        %v3213 = vsel %vm427, %v3137, 0.0
        %v3214 = vadd.f32 %v3212, %v3213
        %v3215 = vsel %vm427, %v3140, 0.0
        %v3216 = vadd.f32 %v3214, %v3215
        %v3217 = vsel %vm427, %v3145, 0.0
        %v3218 = vadd.f32 %v3216, %v3217
        %v3219 = vsel %vm427, %v3148, 0.0
        %v3220 = vadd.f32 %v3218, %v3219
        %v3221 = vsel %vm427, %v3153, 0.0
        %v3222 = vadd.f32 %v3220, %v3221
        %v3223 = vsel %vm427, %v3156, 0.0
        %v3224 = vadd.f32 %v3222, %v3223
        %v3225 = vrot.slane %v3224, 4
        %v3226 = vadd.f32 %v3224, %v3225
        %v3227 = vrot.slane %v3226, 2
        %v3228 = vadd.f32 %v3226, %v3227
        %v3229 = vrot.slane %v3228, 1
        %v3230 = vadd.f32 %v3228, %v3229
        %v3231 = vadd.f32 %v3230, 0.0
        %v3232 = vmul.f32 %v3231, %v673
        %v3233 = vsub.f32 %v3033, %v3232
        %v3234 = vsub.f32 %v3036, %v3232
        %v3235 = vsub.f32 %v3041, %v3232
        %v3236 = vsub.f32 %v3044, %v3232
        %v3237 = vsub.f32 %v3049, %v3232
        %v3238 = vsub.f32 %v3052, %v3232
        %v3239 = vsub.f32 %v3057, %v3232
        %v3240 = vsub.f32 %v3060, %v3232
        %v3241 = vsub.f32 %v3065, %v3232
        %v3242 = vsub.f32 %v3068, %v3232
        %v3243 = vsub.f32 %v3073, %v3232
        %v3244 = vsub.f32 %v3076, %v3232
        %v3245 = vsub.f32 %v3081, %v3232
        %v3246 = vsub.f32 %v3084, %v3232
        %v3247 = vsub.f32 %v3089, %v3232
        %v3248 = vsub.f32 %v3092, %v3232
        %v3249 = vsub.f32 %v3097, %v3232
        %v3250 = vsub.f32 %v3100, %v3232
        %v3251 = vsub.f32 %v3105, %v3232
        %v3252 = vsub.f32 %v3108, %v3232
        %v3253 = vsub.f32 %v3113, %v3232
        %v3254 = vsub.f32 %v3116, %v3232
        %v3255 = vsub.f32 %v3121, %v3232
        %v3256 = vsub.f32 %v3124, %v3232
        %v3257 = vsub.f32 %v3129, %v3232
        %v3258 = vsub.f32 %v3132, %v3232
        %v3259 = vsub.f32 %v3137, %v3232
        %v3260 = vsub.f32 %v3140, %v3232
        %v3261 = vsub.f32 %v3145, %v3232
        %v3262 = vsub.f32 %v3148, %v3232
        %v3263 = vsub.f32 %v3153, %v3232
        %v3264 = vsub.f32 %v3156, %v3232
        %v3265 = vmul.f32 %v3233, %v3233
        %v3266 = vmul.f32 %v3234, %v3234
        %v3267 = vmul.f32 %v3235, %v3235
        %v3268 = vmul.f32 %v3236, %v3236
        %v3269 = vmul.f32 %v3237, %v3237
        %v3270 = vmul.f32 %v3238, %v3238
        %v3271 = vmul.f32 %v3239, %v3239
        %v3272 = vmul.f32 %v3240, %v3240
        %v3273 = vmul.f32 %v3241, %v3241
        %v3274 = vmul.f32 %v3242, %v3242
        %v3275 = vmul.f32 %v3243, %v3243
        %v3276 = vmul.f32 %v3244, %v3244
        %v3277 = vmul.f32 %v3245, %v3245
        %v3278 = vmul.f32 %v3246, %v3246
        %v3279 = vmul.f32 %v3247, %v3247
        %v3280 = vmul.f32 %v3248, %v3248
        %v3281 = vmul.f32 %v3249, %v3249
        %v3282 = vmul.f32 %v3250, %v3250
        %v3283 = vmul.f32 %v3251, %v3251
        %v3284 = vmul.f32 %v3252, %v3252
        %v3285 = vmul.f32 %v3253, %v3253
        %v3286 = vmul.f32 %v3254, %v3254
        %v3287 = vmul.f32 %v3255, %v3255
        %v3288 = vmul.f32 %v3256, %v3256
        %v3289 = vmul.f32 %v3257, %v3257
        %v3290 = vmul.f32 %v3258, %v3258
        %v3291 = vmul.f32 %v3259, %v3259
        %v3292 = vmul.f32 %v3260, %v3260
        %v3293 = vmul.f32 %v3261, %v3261
        %v3294 = vmul.f32 %v3262, %v3262
        %v3295 = vmul.f32 %v3263, %v3263
        %v3296 = vmul.f32 %v3264, %v3264
        %v3297 = vsel %vm427, %v3265, 0.0
        %v3298 = vsel %vm427, %v3266, 0.0
        %v3299 = vadd.f32 %v3297, %v3298
        %v3300 = vsel %vm427, %v3267, 0.0
        %v3301 = vadd.f32 %v3299, %v3300
        %v3302 = vsel %vm427, %v3268, 0.0
        %v3303 = vadd.f32 %v3301, %v3302
        %v3304 = vsel %vm427, %v3269, 0.0
        %v3305 = vadd.f32 %v3303, %v3304
        %v3306 = vsel %vm427, %v3270, 0.0
        %v3307 = vadd.f32 %v3305, %v3306
        %v3308 = vsel %vm427, %v3271, 0.0
        %v3309 = vadd.f32 %v3307, %v3308
        %v3310 = vsel %vm427, %v3272, 0.0
        %v3311 = vadd.f32 %v3309, %v3310
        %v3312 = vsel %vm427, %v3273, 0.0
        %v3313 = vadd.f32 %v3311, %v3312
        %v3314 = vsel %vm427, %v3274, 0.0
        %v3315 = vadd.f32 %v3313, %v3314
        %v3316 = vsel %vm427, %v3275, 0.0
        %v3317 = vadd.f32 %v3315, %v3316
        %v3318 = vsel %vm427, %v3276, 0.0
        %v3319 = vadd.f32 %v3317, %v3318
        %v3320 = vsel %vm427, %v3277, 0.0
        %v3321 = vadd.f32 %v3319, %v3320
        %v3322 = vsel %vm427, %v3278, 0.0
        %v3323 = vadd.f32 %v3321, %v3322
        %v3324 = vsel %vm427, %v3279, 0.0
        %v3325 = vadd.f32 %v3323, %v3324
        %v3326 = vsel %vm427, %v3280, 0.0
        %v3327 = vadd.f32 %v3325, %v3326
        %v3328 = vsel %vm427, %v3281, 0.0
        %v3329 = vadd.f32 %v3327, %v3328
        %v3330 = vsel %vm427, %v3282, 0.0
        %v3331 = vadd.f32 %v3329, %v3330
        %v3332 = vsel %vm427, %v3283, 0.0
        %v3333 = vadd.f32 %v3331, %v3332
        %v3334 = vsel %vm427, %v3284, 0.0
        %v3335 = vadd.f32 %v3333, %v3334
        %v3336 = vsel %vm427, %v3285, 0.0
        %v3337 = vadd.f32 %v3335, %v3336
        %v3338 = vsel %vm427, %v3286, 0.0
        %v3339 = vadd.f32 %v3337, %v3338
        %v3340 = vsel %vm427, %v3287, 0.0
        %v3341 = vadd.f32 %v3339, %v3340
        %v3342 = vsel %vm427, %v3288, 0.0
        %v3343 = vadd.f32 %v3341, %v3342
        %v3344 = vsel %vm427, %v3289, 0.0
        %v3345 = vadd.f32 %v3343, %v3344
        %v3346 = vsel %vm427, %v3290, 0.0
        %v3347 = vadd.f32 %v3345, %v3346
        %v3348 = vsel %vm427, %v3291, 0.0
        %v3349 = vadd.f32 %v3347, %v3348
        %v3350 = vsel %vm427, %v3292, 0.0
        %v3351 = vadd.f32 %v3349, %v3350
        %v3352 = vsel %vm427, %v3293, 0.0
        %v3353 = vadd.f32 %v3351, %v3352
        %v3354 = vsel %vm427, %v3294, 0.0
        %v3355 = vadd.f32 %v3353, %v3354
        %v3356 = vsel %vm427, %v3295, 0.0
        %v3357 = vadd.f32 %v3355, %v3356
        %v3358 = vsel %vm427, %v3296, 0.0
        %v3359 = vadd.f32 %v3357, %v3358
        %v3360 = vrot.slane %v3359, 4
        %v3361 = vadd.f32 %v3359, %v3360
        %v3362 = vrot.slane %v3361, 2
        %v3363 = vadd.f32 %v3361, %v3362
        %v3364 = vrot.slane %v3363, 1
        %v3365 = vadd.f32 %v3363, %v3364
        %v3366 = vadd.f32 %v3365, 0.0
        %v3367 = vmul.f32 %v3366, %v673
        %v3368 = vadd.f32 %v3367, 1e-06
        %v3369 = vrsqrt.pop %v3368
        %v3370 = vmul.f32 %v3159, %v3369
        %v3373 = vunpack.c.l.s4 1966171168
        %v3374 = vunpack.c.0.s8 %v3373
        %v3375 = vlaneseq
        %v3376 = vshrl.u32 %v3375, 7
        %v3377 = vsub.s32 %v3374, %v3376
        %v3378 = vrot.slane %v3161, %v3377
        %v3380 = vunpack.c.l.s4 1966171168
        %v3381 = vunpack.c.0.s8 %v3380
        %v3382 = vlaneseq
        %v3383 = vshrl.u32 %v3382, 7
        %v3384 = vsub.s32 %v3381, %v3383
        %v3385 = vrot.slane %v3378, %v3384
        %3386 = vrot.lane.b32.xlu0 %v3385, 96
        %v3387 = vpop.permute.xlu0 %3386
        %v3389 = vmul.f32 %v3370, %v3387
        %v3390 = vmul.f32 %v3160, %v3387
        %v3391 = vadd.f32 %v3390, %v596
        %v3393 = vlaneseq
        %v3394 = vshrl.u32 %v3393, 7
        %v3395 = vsub.s32 0, %v3394
        %v3396 = vrot.slane %v3389, %v3395
        %v3398 = vmul.f32 %v3233, %v3396
        %v3399 = vmul.f32 %v3234, %v3396
        %v3400 = vmul.f32 %v3235, %v3396
        %v3401 = vmul.f32 %v3236, %v3396
        %v3402 = vmul.f32 %v3237, %v3396
        %v3403 = vmul.f32 %v3238, %v3396
        %v3404 = vmul.f32 %v3239, %v3396
        %v3405 = vmul.f32 %v3240, %v3396
        %v3406 = vmul.f32 %v3241, %v3396
        %v3407 = vmul.f32 %v3242, %v3396
        %v3408 = vmul.f32 %v3243, %v3396
        %v3409 = vmul.f32 %v3244, %v3396
        %v3410 = vmul.f32 %v3245, %v3396
        %v3411 = vmul.f32 %v3246, %v3396
        %v3412 = vmul.f32 %v3247, %v3396
        %v3413 = vmul.f32 %v3248, %v3396
        %v3414 = vmul.f32 %v3249, %v3396
        %v3415 = vmul.f32 %v3250, %v3396
        %v3416 = vmul.f32 %v3251, %v3396
        %v3417 = vmul.f32 %v3252, %v3396
        %v3418 = vmul.f32 %v3253, %v3396
        %v3419 = vmul.f32 %v3254, %v3396
        %v3420 = vmul.f32 %v3255, %v3396
        %v3421 = vmul.f32 %v3256, %v3396
        %v3422 = vmul.f32 %v3257, %v3396
        %v3423 = vmul.f32 %v3258, %v3396
        %v3424 = vmul.f32 %v3259, %v3396
        %v3425 = vmul.f32 %v3260, %v3396
        %v3426 = vmul.f32 %v3261, %v3396
        %v3427 = vmul.f32 %v3262, %v3396
        %v3428 = vmul.f32 %v3263, %v3396
        %v3429 = vmul.f32 %v3264, %v3396
        %v3431 = vlaneseq
        %v3432 = vshrl.u32 %v3431, 7
        %v3433 = vsub.s32 0, %v3432
        %v3434 = vrot.slane %v3391, %v3433
        %v3436 = vadd.f32 %v3398, %v3434
        %v3437 = vadd.f32 %v3399, %v3434
        %v3438 = vadd.f32 %v3400, %v3434
        %v3439 = vadd.f32 %v3401, %v3434
        %v3440 = vadd.f32 %v3402, %v3434
        %v3441 = vadd.f32 %v3403, %v3434
        %v3442 = vadd.f32 %v3404, %v3434
        %v3443 = vadd.f32 %v3405, %v3434
        %v3444 = vadd.f32 %v3406, %v3434
        %v3445 = vadd.f32 %v3407, %v3434
        %v3446 = vadd.f32 %v3408, %v3434
        %v3447 = vadd.f32 %v3409, %v3434
        %v3448 = vadd.f32 %v3410, %v3434
        %v3449 = vadd.f32 %v3411, %v3434
        %v3450 = vadd.f32 %v3412, %v3434
        %v3451 = vadd.f32 %v3413, %v3434
        %v3452 = vadd.f32 %v3414, %v3434
        %v3453 = vadd.f32 %v3415, %v3434
        %v3454 = vadd.f32 %v3416, %v3434
        %v3455 = vadd.f32 %v3417, %v3434
        %v3456 = vadd.f32 %v3418, %v3434
        %v3457 = vadd.f32 %v3419, %v3434
        %v3458 = vadd.f32 %v3420, %v3434
        %v3459 = vadd.f32 %v3421, %v3434
        %v3460 = vadd.f32 %v3422, %v3434
        %v3461 = vadd.f32 %v3423, %v3434
        %v3462 = vadd.f32 %v3424, %v3434
        %v3463 = vadd.f32 %v3425, %v3434
        %v3464 = vadd.f32 %v3426, %v3434
        %v3465 = vadd.f32 %v3427, %v3434
        %v3466 = vadd.f32 %v3428, %v3434
        %v3467 = vadd.f32 %v3429, %v3434
        %v3468 = vxor.u32 %v3436, 2147483648
        %v3469 = vxor.u32 %v3437, 2147483648
        %v3470 = vxor.u32 %v3438, 2147483648
        %v3471 = vxor.u32 %v3439, 2147483648
        %v3472 = vxor.u32 %v3440, 2147483648
        %v3473 = vxor.u32 %v3441, 2147483648
        %v3474 = vxor.u32 %v3442, 2147483648
        %v3475 = vxor.u32 %v3443, 2147483648
        %v3476 = vxor.u32 %v3444, 2147483648
        %v3477 = vxor.u32 %v3445, 2147483648
        %v3478 = vxor.u32 %v3446, 2147483648
        %v3479 = vxor.u32 %v3447, 2147483648
        %v3480 = vxor.u32 %v3448, 2147483648
        %v3481 = vxor.u32 %v3449, 2147483648
        %v3482 = vxor.u32 %v3450, 2147483648
        %v3483 = vxor.u32 %v3451, 2147483648
        %v3484 = vxor.u32 %v3452, 2147483648
        %v3485 = vxor.u32 %v3453, 2147483648
        %v3486 = vxor.u32 %v3454, 2147483648
        %v3487 = vxor.u32 %v3455, 2147483648
        %v3488 = vxor.u32 %v3456, 2147483648
        %v3489 = vxor.u32 %v3457, 2147483648
        %v3490 = vxor.u32 %v3458, 2147483648
        %v3491 = vxor.u32 %v3459, 2147483648
        %v3492 = vxor.u32 %v3460, 2147483648
        %v3493 = vxor.u32 %v3461, 2147483648
        %v3494 = vxor.u32 %v3462, 2147483648
        %v3495 = vxor.u32 %v3463, 2147483648
        %v3496 = vxor.u32 %v3464, 2147483648
        %v3497 = vxor.u32 %v3465, 2147483648
        %v3498 = vxor.u32 %v3466, 2147483648
        %v3499 = vxor.u32 %v3467, 2147483648
        %v3500 = vmul.f32 %v3468, 1.442695
        %v3501 = vpow.pop %v3500
        %v3502 = vmul.f32 %v3469, 1.442695
        %v3503 = vpow.pop %v3502
        %v3504 = vmul.f32 %v3470, 1.442695
        %v3505 = vpow.pop %v3504
        %v3506 = vmul.f32 %v3471, 1.442695
        %v3507 = vpow.pop %v3506
        %v3508 = vmul.f32 %v3472, 1.442695
        %v3509 = vpow.pop %v3508
        %v3510 = vmul.f32 %v3473, 1.442695
        %v3511 = vpow.pop %v3510
        %v3512 = vmul.f32 %v3474, 1.442695
        %v3513 = vpow.pop %v3512
        %v3514 = vmul.f32 %v3475, 1.442695
        %v3515 = vpow.pop %v3514
        %v3516 = vmul.f32 %v3476, 1.442695
        %v3517 = vpow.pop %v3516
        %v3518 = vmul.f32 %v3477, 1.442695
        %v3519 = vpow.pop %v3518
        %v3520 = vmul.f32 %v3478, 1.442695
        %v3521 = vpow.pop %v3520
        %v3522 = vmul.f32 %v3479, 1.442695
        %v3523 = vpow.pop %v3522
        %v3524 = vmul.f32 %v3480, 1.442695
        %v3525 = vpow.pop %v3524
        %v3526 = vmul.f32 %v3481, 1.442695
        %v3527 = vpow.pop %v3526
        %v3528 = vmul.f32 %v3482, 1.442695
        %v3529 = vpow.pop %v3528
        %v3530 = vmul.f32 %v3483, 1.442695
        %v3531 = vpow.pop %v3530
        %v3532 = vmul.f32 %v3484, 1.442695
        %v3533 = vpow.pop %v3532
        %v3534 = vmul.f32 %v3485, 1.442695
        %v3535 = vpow.pop %v3534
        %v3536 = vmul.f32 %v3486, 1.442695
        %v3537 = vpow.pop %v3536
        %v3538 = vmul.f32 %v3487, 1.442695
        %v3539 = vpow.pop %v3538
        %v3540 = vmul.f32 %v3488, 1.442695
        %v3541 = vpow.pop %v3540
        %v3542 = vmul.f32 %v3489, 1.442695
        %v3543 = vpow.pop %v3542
        %v3544 = vmul.f32 %v3490, 1.442695
        %v3545 = vpow.pop %v3544
        %v3546 = vmul.f32 %v3491, 1.442695
        %v3547 = vpow.pop %v3546
        %v3548 = vmul.f32 %v3492, 1.442695
        %v3549 = vpow.pop %v3548
        %v3550 = vmul.f32 %v3493, 1.442695
        %v3551 = vpow.pop %v3550
        %v3552 = vmul.f32 %v3494, 1.442695
        %v3553 = vpow.pop %v3552
        %v3554 = vmul.f32 %v3495, 1.442695
        %v3555 = vpow.pop %v3554
        %v3556 = vmul.f32 %v3496, 1.442695
        %v3557 = vpow.pop %v3556
        %v3558 = vmul.f32 %v3497, 1.442695
        %v3559 = vpow.pop %v3558
        %v3560 = vmul.f32 %v3498, 1.442695
        %v3561 = vpow.pop %v3560
        %v3562 = vmul.f32 %v3499, 1.442695
        %v3563 = vpow.pop %v3562
        %v3564 = vadd.f32 %v3501, 1.0
        %v3565 = vadd.f32 %v3503, 1.0
        %v3566 = vadd.f32 %v3505, 1.0
        %v3567 = vadd.f32 %v3507, 1.0
        %v3568 = vadd.f32 %v3509, 1.0
        %v3569 = vadd.f32 %v3511, 1.0
        %v3570 = vadd.f32 %v3513, 1.0
        %v3571 = vadd.f32 %v3515, 1.0
        %v3572 = vadd.f32 %v3517, 1.0
        %v3573 = vadd.f32 %v3519, 1.0
        %v3574 = vadd.f32 %v3521, 1.0
        %v3575 = vadd.f32 %v3523, 1.0
        %v3576 = vadd.f32 %v3525, 1.0
        %v3577 = vadd.f32 %v3527, 1.0
        %v3578 = vadd.f32 %v3529, 1.0
        %v3579 = vadd.f32 %v3531, 1.0
        %v3580 = vadd.f32 %v3533, 1.0
        %v3581 = vadd.f32 %v3535, 1.0
        %v3582 = vadd.f32 %v3537, 1.0
        %v3583 = vadd.f32 %v3539, 1.0
        %v3584 = vadd.f32 %v3541, 1.0
        %v3585 = vadd.f32 %v3543, 1.0
        %v3586 = vadd.f32 %v3545, 1.0
        %v3587 = vadd.f32 %v3547, 1.0
        %v3588 = vadd.f32 %v3549, 1.0
        %v3589 = vadd.f32 %v3551, 1.0
        %v3590 = vadd.f32 %v3553, 1.0
        %v3591 = vadd.f32 %v3555, 1.0
        %v3592 = vadd.f32 %v3557, 1.0
        %v3593 = vadd.f32 %v3559, 1.0
        %v3594 = vadd.f32 %v3561, 1.0
        %v3595 = vadd.f32 %v3563, 1.0
        %v3596 = vrcp.pop %v3564
        %v3597 = vmul.f32 1.0, %v3596
        %v3598 = vrcp.pop %v3565
        %v3599 = vmul.f32 1.0, %v3598
        %v3600 = vrcp.pop %v3566
        %v3601 = vmul.f32 1.0, %v3600
        %v3602 = vrcp.pop %v3567
        %v3603 = vmul.f32 1.0, %v3602
        %v3604 = vrcp.pop %v3568
        %v3605 = vmul.f32 1.0, %v3604
        %v3606 = vrcp.pop %v3569
        %v3607 = vmul.f32 1.0, %v3606
        %v3608 = vrcp.pop %v3570
        %v3609 = vmul.f32 1.0, %v3608
        %v3610 = vrcp.pop %v3571
        %v3611 = vmul.f32 1.0, %v3610
        %v3612 = vrcp.pop %v3572
        %v3613 = vmul.f32 1.0, %v3612
        %v3614 = vrcp.pop %v3573
        %v3615 = vmul.f32 1.0, %v3614
        %v3616 = vrcp.pop %v3574
        %v3617 = vmul.f32 1.0, %v3616
        %v3618 = vrcp.pop %v3575
        %v3619 = vmul.f32 1.0, %v3618
        %v3620 = vrcp.pop %v3576
        %v3621 = vmul.f32 1.0, %v3620
        %v3622 = vrcp.pop %v3577
        %v3623 = vmul.f32 1.0, %v3622
        %v3624 = vrcp.pop %v3578
        %v3625 = vmul.f32 1.0, %v3624
        %v3626 = vrcp.pop %v3579
        %v3627 = vmul.f32 1.0, %v3626
        %v3628 = vrcp.pop %v3580
        %v3629 = vmul.f32 1.0, %v3628
        %v3630 = vrcp.pop %v3581
        %v3631 = vmul.f32 1.0, %v3630
        %v3632 = vrcp.pop %v3582
        %v3633 = vmul.f32 1.0, %v3632
        %v3634 = vrcp.pop %v3583
        %v3635 = vmul.f32 1.0, %v3634
        %v3636 = vrcp.pop %v3584
        %v3637 = vmul.f32 1.0, %v3636
        %v3638 = vrcp.pop %v3585
        %v3639 = vmul.f32 1.0, %v3638
        %v3640 = vrcp.pop %v3586
        %v3641 = vmul.f32 1.0, %v3640
        %v3642 = vrcp.pop %v3587
        %v3643 = vmul.f32 1.0, %v3642
        %v3644 = vrcp.pop %v3588
        %v3645 = vmul.f32 1.0, %v3644
        %v3646 = vrcp.pop %v3589
        %v3647 = vmul.f32 1.0, %v3646
        %v3648 = vrcp.pop %v3590
        %v3649 = vmul.f32 1.0, %v3648
        %v3650 = vrcp.pop %v3591
        %v3651 = vmul.f32 1.0, %v3650
        %v3652 = vrcp.pop %v3592
        %v3653 = vmul.f32 1.0, %v3652
        %v3654 = vrcp.pop %v3593
        %v3655 = vmul.f32 1.0, %v3654
        %v3656 = vrcp.pop %v3594
        %v3657 = vmul.f32 1.0, %v3656
        %v3658 = vrcp.pop %v3595
        %v3659 = vmul.f32 1.0, %v3658
        %v3660 = vmul.f32 %v3436, %v3597
        %v3661 = vmul.f32 %v3437, %v3599
        %v3662 = vmul.f32 %v3438, %v3601
        %v3663 = vmul.f32 %v3439, %v3603
        %v3664 = vmul.f32 %v3440, %v3605
        %v3665 = vmul.f32 %v3441, %v3607
        %v3666 = vmul.f32 %v3442, %v3609
        %v3667 = vmul.f32 %v3443, %v3611
        %v3668 = vmul.f32 %v3444, %v3613
        %v3669 = vmul.f32 %v3445, %v3615
        %v3670 = vmul.f32 %v3446, %v3617
        %v3671 = vmul.f32 %v3447, %v3619
        %v3672 = vmul.f32 %v3448, %v3621
        %v3673 = vmul.f32 %v3449, %v3623
        %v3674 = vmul.f32 %v3450, %v3625
        %v3675 = vmul.f32 %v3451, %v3627
        %v3676 = vmul.f32 %v3452, %v3629
        %v3677 = vmul.f32 %v3453, %v3631
        %v3678 = vmul.f32 %v3454, %v3633
        %v3679 = vmul.f32 %v3455, %v3635
        %v3680 = vmul.f32 %v3456, %v3637
        %v3681 = vmul.f32 %v3457, %v3639
        %v3682 = vmul.f32 %v3458, %v3641
        %v3683 = vmul.f32 %v3459, %v3643
        %v3684 = vmul.f32 %v3460, %v3645
        %v3685 = vmul.f32 %v3461, %v3647
        %v3686 = vmul.f32 %v3462, %v3649
        %v3687 = vmul.f32 %v3463, %v3651
        %v3688 = vmul.f32 %v3464, %v3653
        %v3689 = vmul.f32 %v3465, %v3655
        %v3690 = vmul.f32 %v3466, %v3657
        %v3691 = vmul.f32 %v3467, %v3659
        %3692 = vst.msk [vmem:[%s1113 + $0x1] sm:$0xff] %vm427, %v3660
        %3693 = vst.msk [vmem:[%s1113 + $0x9] sm:$0xff] %vm427, %v3661
        %3694 = vst.msk [vmem:[%s1113 + $0x19] sm:$0xff] %vm427, %v3662
        %3695 = vst.msk [vmem:[%s1113 + $0x21] sm:$0xff] %vm427, %v3663
        %3696 = vst.msk [vmem:[%s1113 + $0x31] sm:$0xff] %vm427, %v3664
        %3697 = vst.msk [vmem:[%s1113 + $0x39] sm:$0xff] %vm427, %v3665
        %3698 = vst.msk [vmem:[%s1113 + $0x49] sm:$0xff] %vm427, %v3666
        %3699 = vst.msk [vmem:[%s1113 + $0x51] sm:$0xff] %vm427, %v3667
        %3700 = vst.msk [vmem:[%s1113 + $0x61] sm:$0xff] %vm427, %v3668
        %3701 = vst.msk [vmem:[%s1113 + $0x69] sm:$0xff] %vm427, %v3669
        %3702 = vst.msk [vmem:[%s1113 + $0x79] sm:$0xff] %vm427, %v3670
        %3703 = vst.msk [vmem:[%s1113 + $0x81] sm:$0xff] %vm427, %v3671
        %3704 = vst.msk [vmem:[%s1113 + $0x91] sm:$0xff] %vm427, %v3672
        %3705 = vst.msk [vmem:[%s1113 + $0x99] sm:$0xff] %vm427, %v3673
        %3706 = vst.msk [vmem:[%s1113 + $0xa9] sm:$0xff] %vm427, %v3674
        %3707 = vst.msk [vmem:[%s1113 + $0xb1] sm:$0xff] %vm427, %v3675
        %3708 = vst.msk [vmem:[%s1113 + $0xc1] sm:$0xff] %vm427, %v3676
        %3709 = vst.msk [vmem:[%s1113 + $0xc9] sm:$0xff] %vm427, %v3677
        %3710 = vst.msk [vmem:[%s1113 + $0xd9] sm:$0xff] %vm427, %v3678
        %3711 = vst.msk [vmem:[%s1113 + $0xe1] sm:$0xff] %vm427, %v3679
        %3712 = vst.msk [vmem:[%s1113 + $0xf1] sm:$0xff] %vm427, %v3680
        %3713 = vst.msk [vmem:[%s1113 + $0xf9] sm:$0xff] %vm427, %v3681
        %3714 = vst.msk [vmem:[%s1113 + $0x109] sm:$0xff] %vm427, %v3682
        %3715 = vst.msk [vmem:[%s1113 + $0x111] sm:$0xff] %vm427, %v3683
        %3716 = vst.msk [vmem:[%s1113 + $0x121] sm:$0xff] %vm427, %v3684
        %3717 = vst.msk [vmem:[%s1113 + $0x129] sm:$0xff] %vm427, %v3685
        %3718 = vst.msk [vmem:[%s1113 + $0x139] sm:$0xff] %vm427, %v3686
        %3719 = vst.msk [vmem:[%s1113 + $0x141] sm:$0xff] %vm427, %v3687
        %3720 = vst.msk [vmem:[%s1113 + $0x151] sm:$0xff] %vm427, %v3688
        %3721 = vst.msk [vmem:[%s1113 + $0x159] sm:$0xff] %vm427, %v3689
        %3722 = vst.msk [vmem:[%s1113 + $0x169] sm:$0xff] %vm427, %v3690
        %3723 = vst.msk [vmem:[%s1113 + $0x171] sm:$0xff] %vm427, %v3691
        %v3724 = vld [vmem:[#allocation2] sm:$0xff]
        %v3725 = vld [vmem:[#allocation2 + $0x8] sm:$0xff]
        %v3726 = vld [vmem:[#allocation2 + $0x18] sm:$0xff]
        %v3727 = vld [vmem:[#allocation2 + $0x20] sm:$0xff]
        %v3728 = vld [vmem:[#allocation2 + $0x30] sm:$0xff]
        %v3729 = vld [vmem:[#allocation2 + $0x38] sm:$0xff]
        %v3730 = vld [vmem:[#allocation2 + $0x48] sm:$0xff]
        %v3731 = vld [vmem:[#allocation2 + $0x50] sm:$0xff]
        %v3732 = vld [vmem:[#allocation2 + $0x60] sm:$0xff]
        %v3733 = vld [vmem:[#allocation2 + $0x68] sm:$0xff]
        %v3734 = vld [vmem:[#allocation2 + $0x78] sm:$0xff]
        %v3735 = vld [vmem:[#allocation2 + $0x80] sm:$0xff]
        %v3736 = vld [vmem:[#allocation2 + $0x90] sm:$0xff]
        %v3737 = vld [vmem:[#allocation2 + $0x98] sm:$0xff]
        %v3738 = vld [vmem:[#allocation2 + $0xa8] sm:$0xff]
        %v3739 = vld [vmem:[#allocation2 + $0xb0] sm:$0xff]
        %v3740 = vld [vmem:[#allocation2 + $0xc0] sm:$0xff]
        %v3741 = vld [vmem:[#allocation2 + $0xc8] sm:$0xff]
        %v3742 = vld [vmem:[#allocation2 + $0xd8] sm:$0xff]
        %v3743 = vld [vmem:[#allocation2 + $0xe0] sm:$0xff]
        %v3744 = vld [vmem:[#allocation2 + $0xf0] sm:$0xff]
        %v3745 = vld [vmem:[#allocation2 + $0xf8] sm:$0xff]
        %v3746 = vld [vmem:[#allocation2 + $0x108] sm:$0xff]
        %v3747 = vld [vmem:[#allocation2 + $0x110] sm:$0xff]
        %v3748 = vld [vmem:[#allocation2 + $0x120] sm:$0xff]
        %v3749 = vld [vmem:[#allocation2 + $0x128] sm:$0xff]
        %v3750 = vld [vmem:[#allocation2 + $0x138] sm:$0xff]
        %v3751 = vld [vmem:[#allocation2 + $0x140] sm:$0xff]
        %v3752 = vld [vmem:[#allocation2 + $0x150] sm:$0xff]
        %v3753 = vld [vmem:[#allocation2 + $0x158] sm:$0xff]
        %v3754 = vld [vmem:[#allocation2 + $0x168] sm:$0xff]
        %v3755 = vld [vmem:[#allocation2 + $0x170] sm:$0xff]
        %3756 = vst.msk [vmem:[#allocation3] sm:$0xff] %vm427, %v3724
        %3757 = vst.msk [vmem:[#allocation3 + $0x18] sm:$0xff] %vm427, %v3725
        %3758 = vst.msk [vmem:[#allocation3 + $0x30] sm:$0xff] %vm427, %v3726
        %3759 = vst.msk [vmem:[#allocation3 + $0x48] sm:$0xff] %vm427, %v3727
        %3760 = vst.msk [vmem:[#allocation3 + $0x60] sm:$0xff] %vm427, %v3728
        %3761 = vst.msk [vmem:[#allocation3 + $0x78] sm:$0xff] %vm427, %v3729
        %3762 = vst.msk [vmem:[#allocation3 + $0x90] sm:$0xff] %vm427, %v3730
        %3763 = vst.msk [vmem:[#allocation3 + $0xa8] sm:$0xff] %vm427, %v3731
        %3764 = vst.msk [vmem:[#allocation3 + $0xc0] sm:$0xff] %vm427, %v3732
        %3765 = vst.msk [vmem:[#allocation3 + $0xd8] sm:$0xff] %vm427, %v3733
        %3766 = vst.msk [vmem:[#allocation3 + $0xf0] sm:$0xff] %vm427, %v3734
        %3767 = vst.msk [vmem:[#allocation3 + $0x108] sm:$0xff] %vm427, %v3735
        %3768 = vst.msk [vmem:[#allocation3 + $0x120] sm:$0xff] %vm427, %v3736
        %3769 = vst.msk [vmem:[#allocation3 + $0x138] sm:$0xff] %vm427, %v3737
        %3770 = vst.msk [vmem:[#allocation3 + $0x150] sm:$0xff] %vm427, %v3738
        %3771 = vst.msk [vmem:[#allocation3 + $0x168] sm:$0xff] %vm427, %v3739
        %3772 = vst.msk [vmem:[#allocation3 + $0x180] sm:$0xff] %vm427, %v3740
        %3773 = vst.msk [vmem:[#allocation3 + $0x198] sm:$0xff] %vm427, %v3741
        %3774 = vst.msk [vmem:[#allocation3 + $0x1b0] sm:$0xff] %vm427, %v3742
        %3775 = vst.msk [vmem:[#allocation3 + $0x1c8] sm:$0xff] %vm427, %v3743
        %3776 = vst.msk [vmem:[#allocation3 + $0x1e0] sm:$0xff] %vm427, %v3744
        %3777 = vst.msk [vmem:[#allocation3 + $0x1f8] sm:$0xff] %vm427, %v3745
        %3778 = vst.msk [vmem:[#allocation3 + $0x210] sm:$0xff] %vm427, %v3746
        %3779 = vst.msk [vmem:[#allocation3 + $0x228] sm:$0xff] %vm427, %v3747
        %3780 = vst.msk [vmem:[#allocation3 + $0x240] sm:$0xff] %vm427, %v3748
        %3781 = vst.msk [vmem:[#allocation3 + $0x258] sm:$0xff] %vm427, %v3749
        %3782 = vst.msk [vmem:[#allocation3 + $0x270] sm:$0xff] %vm427, %v3750
        %3783 = vst.msk [vmem:[#allocation3 + $0x288] sm:$0xff] %vm427, %v3751
        %3784 = vst.msk [vmem:[#allocation3 + $0x2a0] sm:$0xff] %vm427, %v3752
        %3785 = vst.msk [vmem:[#allocation3 + $0x2b8] sm:$0xff] %vm427, %v3753
        %3786 = vst.msk [vmem:[#allocation3 + $0x2d0] sm:$0xff] %vm427, %v3754
        %3787 = vst.msk [vmem:[#allocation3 + $0x2e8] sm:$0xff] %vm427, %v3755
        %v3788 = vld [vmem:[#allocation2 + $0x1] sm:$0xff]
        %v3789 = vld [vmem:[#allocation2 + $0x9] sm:$0xff]
        %v3790 = vld [vmem:[#allocation2 + $0x19] sm:$0xff]
        %v3791 = vld [vmem:[#allocation2 + $0x21] sm:$0xff]
        %v3792 = vld [vmem:[#allocation2 + $0x31] sm:$0xff]
        %v3793 = vld [vmem:[#allocation2 + $0x39] sm:$0xff]
        %v3794 = vld [vmem:[#allocation2 + $0x49] sm:$0xff]
        %v3795 = vld [vmem:[#allocation2 + $0x51] sm:$0xff]
        %v3796 = vld [vmem:[#allocation2 + $0x61] sm:$0xff]
        %v3797 = vld [vmem:[#allocation2 + $0x69] sm:$0xff]
        %v3798 = vld [vmem:[#allocation2 + $0x79] sm:$0xff]
        %v3799 = vld [vmem:[#allocation2 + $0x81] sm:$0xff]
        %v3800 = vld [vmem:[#allocation2 + $0x91] sm:$0xff]
        %v3801 = vld [vmem:[#allocation2 + $0x99] sm:$0xff]
        %v3802 = vld [vmem:[#allocation2 + $0xa9] sm:$0xff]
        %v3803 = vld [vmem:[#allocation2 + $0xb1] sm:$0xff]
        %v3804 = vld [vmem:[#allocation2 + $0xc1] sm:$0xff]
        %v3805 = vld [vmem:[#allocation2 + $0xc9] sm:$0xff]
        %v3806 = vld [vmem:[#allocation2 + $0xd9] sm:$0xff]
        %v3807 = vld [vmem:[#allocation2 + $0xe1] sm:$0xff]
        %v3808 = vld [vmem:[#allocation2 + $0xf1] sm:$0xff]
        %v3809 = vld [vmem:[#allocation2 + $0xf9] sm:$0xff]
        %v3810 = vld [vmem:[#allocation2 + $0x109] sm:$0xff]
        %v3811 = vld [vmem:[#allocation2 + $0x111] sm:$0xff]
        %v3812 = vld [vmem:[#allocation2 + $0x121] sm:$0xff]
        %v3813 = vld [vmem:[#allocation2 + $0x129] sm:$0xff]
        %v3814 = vld [vmem:[#allocation2 + $0x139] sm:$0xff]
        %v3815 = vld [vmem:[#allocation2 + $0x141] sm:$0xff]
        %v3816 = vld [vmem:[#allocation2 + $0x151] sm:$0xff]
        %v3817 = vld [vmem:[#allocation2 + $0x159] sm:$0xff]
        %v3818 = vld [vmem:[#allocation2 + $0x169] sm:$0xff]
        %v3819 = vld [vmem:[#allocation2 + $0x171] sm:$0xff]
        %3852 = vrot.lane.b32.xlu0 %v3788, 32
        %v3853 = vpop.permute.xlu0 %3852
        %3854 = vrot.lane.b32.xlu0 %v3789, 32
        %v3855 = vpop.permute.xlu0 %3854
        %3856 = vrot.lane.b32.xlu0 %v3790, 32
        %v3857 = vpop.permute.xlu0 %3856
        %3858 = vrot.lane.b32.xlu0 %v3791, 32
        %v3859 = vpop.permute.xlu0 %3858
        %3860 = vrot.lane.b32.xlu0 %v3792, 32
        %v3861 = vpop.permute.xlu0 %3860
        %3862 = vrot.lane.b32.xlu0 %v3793, 32
        %v3863 = vpop.permute.xlu0 %3862
        %3864 = vrot.lane.b32.xlu0 %v3794, 32
        %v3865 = vpop.permute.xlu0 %3864
        %3866 = vrot.lane.b32.xlu0 %v3795, 32
        %v3867 = vpop.permute.xlu0 %3866
        %3868 = vrot.lane.b32.xlu0 %v3796, 32
        %v3869 = vpop.permute.xlu0 %3868
        %3870 = vrot.lane.b32.xlu0 %v3797, 32
        %v3871 = vpop.permute.xlu0 %3870
        %3872 = vrot.lane.b32.xlu0 %v3798, 32
        %v3873 = vpop.permute.xlu0 %3872
        %3874 = vrot.lane.b32.xlu0 %v3799, 32
        %v3875 = vpop.permute.xlu0 %3874
        %3876 = vrot.lane.b32.xlu0 %v3800, 32
        %v3877 = vpop.permute.xlu0 %3876
        %3878 = vrot.lane.b32.xlu0 %v3801, 32
        %v3879 = vpop.permute.xlu0 %3878
        %3880 = vrot.lane.b32.xlu0 %v3802, 32
        %v3881 = vpop.permute.xlu0 %3880
        %3882 = vrot.lane.b32.xlu0 %v3803, 32
        %v3883 = vpop.permute.xlu0 %3882
        %3884 = vrot.lane.b32.xlu0 %v3804, 32
        %v3885 = vpop.permute.xlu0 %3884
        %3886 = vrot.lane.b32.xlu0 %v3805, 32
        %v3887 = vpop.permute.xlu0 %3886
        %3888 = vrot.lane.b32.xlu0 %v3806, 32
        %v3889 = vpop.permute.xlu0 %3888
        %3890 = vrot.lane.b32.xlu0 %v3807, 32
        %v3891 = vpop.permute.xlu0 %3890
        %3892 = vrot.lane.b32.xlu0 %v3808, 32
        %v3893 = vpop.permute.xlu0 %3892
        %3894 = vrot.lane.b32.xlu0 %v3809, 32
        %v3895 = vpop.permute.xlu0 %3894
        %3896 = vrot.lane.b32.xlu0 %v3810, 32
        %v3897 = vpop.permute.xlu0 %3896
        %3898 = vrot.lane.b32.xlu0 %v3811, 32
        %v3899 = vpop.permute.xlu0 %3898
        %3900 = vrot.lane.b32.xlu0 %v3812, 32
        %v3901 = vpop.permute.xlu0 %3900
        %3902 = vrot.lane.b32.xlu0 %v3813, 32
        %v3903 = vpop.permute.xlu0 %3902
        %3904 = vrot.lane.b32.xlu0 %v3814, 32
        %v3905 = vpop.permute.xlu0 %3904
        %3906 = vrot.lane.b32.xlu0 %v3815, 32
        %v3907 = vpop.permute.xlu0 %3906
        %3908 = vrot.lane.b32.xlu0 %v3816, 32
        %v3909 = vpop.permute.xlu0 %3908
        %3910 = vrot.lane.b32.xlu0 %v3817, 32
        %v3911 = vpop.permute.xlu0 %3910
        %3912 = vrot.lane.b32.xlu0 %v3818, 32
        %v3913 = vpop.permute.xlu0 %3912
        %3914 = vrot.lane.b32.xlu0 %v3819, 32
        %v3915 = vpop.permute.xlu0 %3914
        %3948 = vst.msk [vmem:[#allocation3] sm:$0xff] %vm1370, %v3853
        %3949 = vst.msk [vmem:[#allocation3 + $0x18] sm:$0xff] %vm1370, %v3855
        %3950 = vst.msk [vmem:[#allocation3 + $0x30] sm:$0xff] %vm1370, %v3857
        %3951 = vst.msk [vmem:[#allocation3 + $0x48] sm:$0xff] %vm1370, %v3859
        %3952 = vst.msk [vmem:[#allocation3 + $0x60] sm:$0xff] %vm1370, %v3861
        %3953 = vst.msk [vmem:[#allocation3 + $0x78] sm:$0xff] %vm1370, %v3863
        %3954 = vst.msk [vmem:[#allocation3 + $0x90] sm:$0xff] %vm1370, %v3865
        %3955 = vst.msk [vmem:[#allocation3 + $0xa8] sm:$0xff] %vm1370, %v3867
        %3956 = vst.msk [vmem:[#allocation3 + $0xc0] sm:$0xff] %vm1370, %v3869
        %3957 = vst.msk [vmem:[#allocation3 + $0xd8] sm:$0xff] %vm1370, %v3871
        %3958 = vst.msk [vmem:[#allocation3 + $0xf0] sm:$0xff] %vm1370, %v3873
        %3959 = vst.msk [vmem:[#allocation3 + $0x108] sm:$0xff] %vm1370, %v3875
        %3960 = vst.msk [vmem:[#allocation3 + $0x120] sm:$0xff] %vm1370, %v3877
        %3961 = vst.msk [vmem:[#allocation3 + $0x138] sm:$0xff] %vm1370, %v3879
        %3962 = vst.msk [vmem:[#allocation3 + $0x150] sm:$0xff] %vm1370, %v3881
        %3963 = vst.msk [vmem:[#allocation3 + $0x168] sm:$0xff] %vm1370, %v3883
        %3964 = vst.msk [vmem:[#allocation3 + $0x180] sm:$0xff] %vm1370, %v3885
        %3965 = vst.msk [vmem:[#allocation3 + $0x198] sm:$0xff] %vm1370, %v3887
        %3966 = vst.msk [vmem:[#allocation3 + $0x1b0] sm:$0xff] %vm1370, %v3889
        %3967 = vst.msk [vmem:[#allocation3 + $0x1c8] sm:$0xff] %vm1370, %v3891
        %3968 = vst.msk [vmem:[#allocation3 + $0x1e0] sm:$0xff] %vm1370, %v3893
        %3969 = vst.msk [vmem:[#allocation3 + $0x1f8] sm:$0xff] %vm1370, %v3895
        %3970 = vst.msk [vmem:[#allocation3 + $0x210] sm:$0xff] %vm1370, %v3897
        %3971 = vst.msk [vmem:[#allocation3 + $0x228] sm:$0xff] %vm1370, %v3899
        %3972 = vst.msk [vmem:[#allocation3 + $0x240] sm:$0xff] %vm1370, %v3901
        %3973 = vst.msk [vmem:[#allocation3 + $0x258] sm:$0xff] %vm1370, %v3903
        %3974 = vst.msk [vmem:[#allocation3 + $0x270] sm:$0xff] %vm1370, %v3905
        %3975 = vst.msk [vmem:[#allocation3 + $0x288] sm:$0xff] %vm1370, %v3907
        %3976 = vst.msk [vmem:[#allocation3 + $0x2a0] sm:$0xff] %vm1370, %v3909
        %3977 = vst.msk [vmem:[#allocation3 + $0x2b8] sm:$0xff] %vm1370, %v3911
        %3978 = vst.msk [vmem:[#allocation3 + $0x2d0] sm:$0xff] %vm1370, %v3913
        %3979 = vst.msk [vmem:[#allocation3 + $0x2e8] sm:$0xff] %vm1370, %v3915
        %v3980 = vld [vmem:[#allocation2 + $0x2] sm:$0xff]
        %v3981 = vld [vmem:[#allocation2 + $0xa] sm:$0xff]
        %v3982 = vld [vmem:[#allocation2 + $0x1a] sm:$0xff]
        %v3983 = vld [vmem:[#allocation2 + $0x22] sm:$0xff]
        %v3984 = vld [vmem:[#allocation2 + $0x32] sm:$0xff]
        %v3985 = vld [vmem:[#allocation2 + $0x3a] sm:$0xff]
        %v3986 = vld [vmem:[#allocation2 + $0x4a] sm:$0xff]
        %v3987 = vld [vmem:[#allocation2 + $0x52] sm:$0xff]
        %v3988 = vld [vmem:[#allocation2 + $0x62] sm:$0xff]
        %v3989 = vld [vmem:[#allocation2 + $0x6a] sm:$0xff]
        %v3990 = vld [vmem:[#allocation2 + $0x7a] sm:$0xff]
        %v3991 = vld [vmem:[#allocation2 + $0x82] sm:$0xff]
        %v3992 = vld [vmem:[#allocation2 + $0x92] sm:$0xff]
        %v3993 = vld [vmem:[#allocation2 + $0x9a] sm:$0xff]
        %v3994 = vld [vmem:[#allocation2 + $0xaa] sm:$0xff]
        %v3995 = vld [vmem:[#allocation2 + $0xb2] sm:$0xff]
        %v3996 = vld [vmem:[#allocation2 + $0xc2] sm:$0xff]
        %v3997 = vld [vmem:[#allocation2 + $0xca] sm:$0xff]
        %v3998 = vld [vmem:[#allocation2 + $0xda] sm:$0xff]
        %v3999 = vld [vmem:[#allocation2 + $0xe2] sm:$0xff]
        %v4000 = vld [vmem:[#allocation2 + $0xf2] sm:$0xff]
        %v4001 = vld [vmem:[#allocation2 + $0xfa] sm:$0xff]
        %v4002 = vld [vmem:[#allocation2 + $0x10a] sm:$0xff]
        %v4003 = vld [vmem:[#allocation2 + $0x112] sm:$0xff]
        %v4004 = vld [vmem:[#allocation2 + $0x122] sm:$0xff]
        %v4005 = vld [vmem:[#allocation2 + $0x12a] sm:$0xff]
        %v4006 = vld [vmem:[#allocation2 + $0x13a] sm:$0xff]
        %v4007 = vld [vmem:[#allocation2 + $0x142] sm:$0xff]
        %v4008 = vld [vmem:[#allocation2 + $0x152] sm:$0xff]
        %v4009 = vld [vmem:[#allocation2 + $0x15a] sm:$0xff]
        %v4010 = vld [vmem:[#allocation2 + $0x16a] sm:$0xff]
        %v4011 = vld [vmem:[#allocation2 + $0x172] sm:$0xff]
        %4044 = vrot.lane.b32.xlu0 %v3980, 64
        %v4045 = vpop.permute.xlu0 %4044
        %4046 = vrot.lane.b32.xlu0 %v3981, 64
        %v4047 = vpop.permute.xlu0 %4046
        %4048 = vrot.lane.b32.xlu0 %v3982, 64
        %v4049 = vpop.permute.xlu0 %4048
        %4050 = vrot.lane.b32.xlu0 %v3983, 64
        %v4051 = vpop.permute.xlu0 %4050
        %4052 = vrot.lane.b32.xlu0 %v3984, 64
        %v4053 = vpop.permute.xlu0 %4052
        %4054 = vrot.lane.b32.xlu0 %v3985, 64
        %v4055 = vpop.permute.xlu0 %4054
        %4056 = vrot.lane.b32.xlu0 %v3986, 64
        %v4057 = vpop.permute.xlu0 %4056
        %4058 = vrot.lane.b32.xlu0 %v3987, 64
        %v4059 = vpop.permute.xlu0 %4058
        %4060 = vrot.lane.b32.xlu0 %v3988, 64
        %v4061 = vpop.permute.xlu0 %4060
        %4062 = vrot.lane.b32.xlu0 %v3989, 64
        %v4063 = vpop.permute.xlu0 %4062
        %4064 = vrot.lane.b32.xlu0 %v3990, 64
        %v4065 = vpop.permute.xlu0 %4064
        %4066 = vrot.lane.b32.xlu0 %v3991, 64
        %v4067 = vpop.permute.xlu0 %4066
        %4068 = vrot.lane.b32.xlu0 %v3992, 64
        %v4069 = vpop.permute.xlu0 %4068
        %4070 = vrot.lane.b32.xlu0 %v3993, 64
        %v4071 = vpop.permute.xlu0 %4070
        %4072 = vrot.lane.b32.xlu0 %v3994, 64
        %v4073 = vpop.permute.xlu0 %4072
        %4074 = vrot.lane.b32.xlu0 %v3995, 64
        %v4075 = vpop.permute.xlu0 %4074
        %4076 = vrot.lane.b32.xlu0 %v3996, 64
        %v4077 = vpop.permute.xlu0 %4076
        %4078 = vrot.lane.b32.xlu0 %v3997, 64
        %v4079 = vpop.permute.xlu0 %4078
        %4080 = vrot.lane.b32.xlu0 %v3998, 64
        %v4081 = vpop.permute.xlu0 %4080
        %4082 = vrot.lane.b32.xlu0 %v3999, 64
        %v4083 = vpop.permute.xlu0 %4082
        %4084 = vrot.lane.b32.xlu0 %v4000, 64
        %v4085 = vpop.permute.xlu0 %4084
        %4086 = vrot.lane.b32.xlu0 %v4001, 64
        %v4087 = vpop.permute.xlu0 %4086
        %4088 = vrot.lane.b32.xlu0 %v4002, 64
        %v4089 = vpop.permute.xlu0 %4088
        %4090 = vrot.lane.b32.xlu0 %v4003, 64
        %v4091 = vpop.permute.xlu0 %4090
        %4092 = vrot.lane.b32.xlu0 %v4004, 64
        %v4093 = vpop.permute.xlu0 %4092
        %4094 = vrot.lane.b32.xlu0 %v4005, 64
        %v4095 = vpop.permute.xlu0 %4094
        %4096 = vrot.lane.b32.xlu0 %v4006, 64
        %v4097 = vpop.permute.xlu0 %4096
        %4098 = vrot.lane.b32.xlu0 %v4007, 64
        %v4099 = vpop.permute.xlu0 %4098
        %4100 = vrot.lane.b32.xlu0 %v4008, 64
        %v4101 = vpop.permute.xlu0 %4100
        %4102 = vrot.lane.b32.xlu0 %v4009, 64
        %v4103 = vpop.permute.xlu0 %4102
        %4104 = vrot.lane.b32.xlu0 %v4010, 64
        %v4105 = vpop.permute.xlu0 %4104
        %4106 = vrot.lane.b32.xlu0 %v4011, 64
        %v4107 = vpop.permute.xlu0 %4106
        %4140 = vst.msk [vmem:[#allocation3] sm:$0xff] %vm1563, %v4045
        %4141 = vst.msk [vmem:[#allocation3 + $0x18] sm:$0xff] %vm1563, %v4047
        %4142 = vst.msk [vmem:[#allocation3 + $0x30] sm:$0xff] %vm1563, %v4049
        %4143 = vst.msk [vmem:[#allocation3 + $0x48] sm:$0xff] %vm1563, %v4051
        %4144 = vst.msk [vmem:[#allocation3 + $0x60] sm:$0xff] %vm1563, %v4053
        %4145 = vst.msk [vmem:[#allocation3 + $0x78] sm:$0xff] %vm1563, %v4055
        %4146 = vst.msk [vmem:[#allocation3 + $0x90] sm:$0xff] %vm1563, %v4057
        %4147 = vst.msk [vmem:[#allocation3 + $0xa8] sm:$0xff] %vm1563, %v4059
        %4148 = vst.msk [vmem:[#allocation3 + $0xc0] sm:$0xff] %vm1563, %v4061
        %4149 = vst.msk [vmem:[#allocation3 + $0xd8] sm:$0xff] %vm1563, %v4063
        %4150 = vst.msk [vmem:[#allocation3 + $0xf0] sm:$0xff] %vm1563, %v4065
        %4151 = vst.msk [vmem:[#allocation3 + $0x108] sm:$0xff] %vm1563, %v4067
        %4152 = vst.msk [vmem:[#allocation3 + $0x120] sm:$0xff] %vm1563, %v4069
        %4153 = vst.msk [vmem:[#allocation3 + $0x138] sm:$0xff] %vm1563, %v4071
        %4154 = vst.msk [vmem:[#allocation3 + $0x150] sm:$0xff] %vm1563, %v4073
        %4155 = vst.msk [vmem:[#allocation3 + $0x168] sm:$0xff] %vm1563, %v4075
        %4156 = vst.msk [vmem:[#allocation3 + $0x180] sm:$0xff] %vm1563, %v4077
        %4157 = vst.msk [vmem:[#allocation3 + $0x198] sm:$0xff] %vm1563, %v4079
        %4158 = vst.msk [vmem:[#allocation3 + $0x1b0] sm:$0xff] %vm1563, %v4081
        %4159 = vst.msk [vmem:[#allocation3 + $0x1c8] sm:$0xff] %vm1563, %v4083
        %4160 = vst.msk [vmem:[#allocation3 + $0x1e0] sm:$0xff] %vm1563, %v4085
        %4161 = vst.msk [vmem:[#allocation3 + $0x1f8] sm:$0xff] %vm1563, %v4087
        %4162 = vst.msk [vmem:[#allocation3 + $0x210] sm:$0xff] %vm1563, %v4089
        %4163 = vst.msk [vmem:[#allocation3 + $0x228] sm:$0xff] %vm1563, %v4091
        %4164 = vst.msk [vmem:[#allocation3 + $0x240] sm:$0xff] %vm1563, %v4093
        %4165 = vst.msk [vmem:[#allocation3 + $0x258] sm:$0xff] %vm1563, %v4095
        %4166 = vst.msk [vmem:[#allocation3 + $0x270] sm:$0xff] %vm1563, %v4097
        %4167 = vst.msk [vmem:[#allocation3 + $0x288] sm:$0xff] %vm1563, %v4099
        %4168 = vst.msk [vmem:[#allocation3 + $0x2a0] sm:$0xff] %vm1563, %v4101
        %4169 = vst.msk [vmem:[#allocation3 + $0x2b8] sm:$0xff] %vm1563, %v4103
        %4170 = vst.msk [vmem:[#allocation3 + $0x2d0] sm:$0xff] %vm1563, %v4105
        %4171 = vst.msk [vmem:[#allocation3 + $0x2e8] sm:$0xff] %vm1563, %v4107
        %v4172 = vld [vmem:[%s1113] sm:$0xff]
        %v4173 = vld [vmem:[%s1113 + $0x8] sm:$0xff]
        %v4174 = vld [vmem:[%s1113 + $0x18] sm:$0xff]
        %v4175 = vld [vmem:[%s1113 + $0x20] sm:$0xff]
        %v4176 = vld [vmem:[%s1113 + $0x30] sm:$0xff]
        %v4177 = vld [vmem:[%s1113 + $0x38] sm:$0xff]
        %v4178 = vld [vmem:[%s1113 + $0x48] sm:$0xff]
        %v4179 = vld [vmem:[%s1113 + $0x50] sm:$0xff]
        %v4180 = vld [vmem:[%s1113 + $0x60] sm:$0xff]
        %v4181 = vld [vmem:[%s1113 + $0x68] sm:$0xff]
        %v4182 = vld [vmem:[%s1113 + $0x78] sm:$0xff]
        %v4183 = vld [vmem:[%s1113 + $0x80] sm:$0xff]
        %v4184 = vld [vmem:[%s1113 + $0x90] sm:$0xff]
        %v4185 = vld [vmem:[%s1113 + $0x98] sm:$0xff]
        %v4186 = vld [vmem:[%s1113 + $0xa8] sm:$0xff]
        %v4187 = vld [vmem:[%s1113 + $0xb0] sm:$0xff]
        %v4188 = vld [vmem:[%s1113 + $0xc0] sm:$0xff]
        %v4189 = vld [vmem:[%s1113 + $0xc8] sm:$0xff]
        %v4190 = vld [vmem:[%s1113 + $0xd8] sm:$0xff]
        %v4191 = vld [vmem:[%s1113 + $0xe0] sm:$0xff]
        %v4192 = vld [vmem:[%s1113 + $0xf0] sm:$0xff]
        %v4193 = vld [vmem:[%s1113 + $0xf8] sm:$0xff]
        %v4194 = vld [vmem:[%s1113 + $0x108] sm:$0xff]
        %v4195 = vld [vmem:[%s1113 + $0x110] sm:$0xff]
        %v4196 = vld [vmem:[%s1113 + $0x120] sm:$0xff]
        %v4197 = vld [vmem:[%s1113 + $0x128] sm:$0xff]
        %v4198 = vld [vmem:[%s1113 + $0x138] sm:$0xff]
        %v4199 = vld [vmem:[%s1113 + $0x140] sm:$0xff]
        %v4200 = vld [vmem:[%s1113 + $0x150] sm:$0xff]
        %v4201 = vld [vmem:[%s1113 + $0x158] sm:$0xff]
        %v4202 = vld [vmem:[%s1113 + $0x168] sm:$0xff]
        %v4203 = vld [vmem:[%s1113 + $0x170] sm:$0xff]
        %4236 = vrot.lane.b32.xlu0 %v4172, 96
        %v4237 = vpop.permute.xlu0 %4236
        %4238 = vrot.lane.b32.xlu0 %v4173, 96
        %v4239 = vpop.permute.xlu0 %4238
        %4240 = vrot.lane.b32.xlu0 %v4174, 96
        %v4241 = vpop.permute.xlu0 %4240
        %4242 = vrot.lane.b32.xlu0 %v4175, 96
        %v4243 = vpop.permute.xlu0 %4242
        %4244 = vrot.lane.b32.xlu0 %v4176, 96
        %v4245 = vpop.permute.xlu0 %4244
        %4246 = vrot.lane.b32.xlu0 %v4177, 96
        %v4247 = vpop.permute.xlu0 %4246
        %4248 = vrot.lane.b32.xlu0 %v4178, 96
        %v4249 = vpop.permute.xlu0 %4248
        %4250 = vrot.lane.b32.xlu0 %v4179, 96
        %v4251 = vpop.permute.xlu0 %4250
        %4252 = vrot.lane.b32.xlu0 %v4180, 96
        %v4253 = vpop.permute.xlu0 %4252
        %4254 = vrot.lane.b32.xlu0 %v4181, 96
        %v4255 = vpop.permute.xlu0 %4254
        %4256 = vrot.lane.b32.xlu0 %v4182, 96
        %v4257 = vpop.permute.xlu0 %4256
        %4258 = vrot.lane.b32.xlu0 %v4183, 96
        %v4259 = vpop.permute.xlu0 %4258
        %4260 = vrot.lane.b32.xlu0 %v4184, 96
        %v4261 = vpop.permute.xlu0 %4260
        %4262 = vrot.lane.b32.xlu0 %v4185, 96
        %v4263 = vpop.permute.xlu0 %4262
        %4264 = vrot.lane.b32.xlu0 %v4186, 96
        %v4265 = vpop.permute.xlu0 %4264
        %4266 = vrot.lane.b32.xlu0 %v4187, 96
        %v4267 = vpop.permute.xlu0 %4266
        %4268 = vrot.lane.b32.xlu0 %v4188, 96
        %v4269 = vpop.permute.xlu0 %4268
        %4270 = vrot.lane.b32.xlu0 %v4189, 96
        %v4271 = vpop.permute.xlu0 %4270
        %4272 = vrot.lane.b32.xlu0 %v4190, 96
        %v4273 = vpop.permute.xlu0 %4272
        %4274 = vrot.lane.b32.xlu0 %v4191, 96
        %v4275 = vpop.permute.xlu0 %4274
        %4276 = vrot.lane.b32.xlu0 %v4192, 96
        %v4277 = vpop.permute.xlu0 %4276
        %4278 = vrot.lane.b32.xlu0 %v4193, 96
        %v4279 = vpop.permute.xlu0 %4278
        %4280 = vrot.lane.b32.xlu0 %v4194, 96
        %v4281 = vpop.permute.xlu0 %4280
        %4282 = vrot.lane.b32.xlu0 %v4195, 96
        %v4283 = vpop.permute.xlu0 %4282
        %4284 = vrot.lane.b32.xlu0 %v4196, 96
        %v4285 = vpop.permute.xlu0 %4284
        %4286 = vrot.lane.b32.xlu0 %v4197, 96
        %v4287 = vpop.permute.xlu0 %4286
        %4288 = vrot.lane.b32.xlu0 %v4198, 96
        %v4289 = vpop.permute.xlu0 %4288
        %4290 = vrot.lane.b32.xlu0 %v4199, 96
        %v4291 = vpop.permute.xlu0 %4290
        %4292 = vrot.lane.b32.xlu0 %v4200, 96
        %v4293 = vpop.permute.xlu0 %4292
        %4294 = vrot.lane.b32.xlu0 %v4201, 96
        %v4295 = vpop.permute.xlu0 %4294
        %4296 = vrot.lane.b32.xlu0 %v4202, 96
        %v4297 = vpop.permute.xlu0 %4296
        %4298 = vrot.lane.b32.xlu0 %v4203, 96
        %v4299 = vpop.permute.xlu0 %4298
        %4332 = vst.msk [vmem:[#allocation3] sm:$0xff] %vm1756, %v4237
        %4333 = vst.msk [vmem:[#allocation3 + $0x18] sm:$0xff] %vm1756, %v4239
        %4334 = vst.msk [vmem:[#allocation3 + $0x30] sm:$0xff] %vm1756, %v4241
        %4335 = vst.msk [vmem:[#allocation3 + $0x48] sm:$0xff] %vm1756, %v4243
        %4336 = vst.msk [vmem:[#allocation3 + $0x60] sm:$0xff] %vm1756, %v4245
        %4337 = vst.msk [vmem:[#allocation3 + $0x78] sm:$0xff] %vm1756, %v4247
        %4338 = vst.msk [vmem:[#allocation3 + $0x90] sm:$0xff] %vm1756, %v4249
        %4339 = vst.msk [vmem:[#allocation3 + $0xa8] sm:$0xff] %vm1756, %v4251
        %4340 = vst.msk [vmem:[#allocation3 + $0xc0] sm:$0xff] %vm1756, %v4253
        %4341 = vst.msk [vmem:[#allocation3 + $0xd8] sm:$0xff] %vm1756, %v4255
        %4342 = vst.msk [vmem:[#allocation3 + $0xf0] sm:$0xff] %vm1756, %v4257
        %4343 = vst.msk [vmem:[#allocation3 + $0x108] sm:$0xff] %vm1756, %v4259
        %4344 = vst.msk [vmem:[#allocation3 + $0x120] sm:$0xff] %vm1756, %v4261
        %4345 = vst.msk [vmem:[#allocation3 + $0x138] sm:$0xff] %vm1756, %v4263
        %4346 = vst.msk [vmem:[#allocation3 + $0x150] sm:$0xff] %vm1756, %v4265
        %4347 = vst.msk [vmem:[#allocation3 + $0x168] sm:$0xff] %vm1756, %v4267
        %4348 = vst.msk [vmem:[#allocation3 + $0x180] sm:$0xff] %vm1756, %v4269
        %4349 = vst.msk [vmem:[#allocation3 + $0x198] sm:$0xff] %vm1756, %v4271
        %4350 = vst.msk [vmem:[#allocation3 + $0x1b0] sm:$0xff] %vm1756, %v4273
        %4351 = vst.msk [vmem:[#allocation3 + $0x1c8] sm:$0xff] %vm1756, %v4275
        %4352 = vst.msk [vmem:[#allocation3 + $0x1e0] sm:$0xff] %vm1756, %v4277
        %4353 = vst.msk [vmem:[#allocation3 + $0x1f8] sm:$0xff] %vm1756, %v4279
        %4354 = vst.msk [vmem:[#allocation3 + $0x210] sm:$0xff] %vm1756, %v4281
        %4355 = vst.msk [vmem:[#allocation3 + $0x228] sm:$0xff] %vm1756, %v4283
        %4356 = vst.msk [vmem:[#allocation3 + $0x240] sm:$0xff] %vm1756, %v4285
        %4357 = vst.msk [vmem:[#allocation3 + $0x258] sm:$0xff] %vm1756, %v4287
        %4358 = vst.msk [vmem:[#allocation3 + $0x270] sm:$0xff] %vm1756, %v4289
        %4359 = vst.msk [vmem:[#allocation3 + $0x288] sm:$0xff] %vm1756, %v4291
        %4360 = vst.msk [vmem:[#allocation3 + $0x2a0] sm:$0xff] %vm1756, %v4293
        %4361 = vst.msk [vmem:[#allocation3 + $0x2b8] sm:$0xff] %vm1756, %v4295
        %4362 = vst.msk [vmem:[#allocation3 + $0x2d0] sm:$0xff] %vm1756, %v4297
        %4363 = vst.msk [vmem:[#allocation3 + $0x2e8] sm:$0xff] %vm1756, %v4299
        %v4364 = vld [vmem:[%s1113 + $0x1] sm:$0xff]
        %v4365 = vld [vmem:[%s1113 + $0x9] sm:$0xff]
        %v4366 = vld [vmem:[%s1113 + $0x19] sm:$0xff]
        %v4367 = vld [vmem:[%s1113 + $0x21] sm:$0xff]
        %v4368 = vld [vmem:[%s1113 + $0x31] sm:$0xff]
        %v4369 = vld [vmem:[%s1113 + $0x39] sm:$0xff]
        %v4370 = vld [vmem:[%s1113 + $0x49] sm:$0xff]
        %v4371 = vld [vmem:[%s1113 + $0x51] sm:$0xff]
        %v4372 = vld [vmem:[%s1113 + $0x61] sm:$0xff]
        %v4373 = vld [vmem:[%s1113 + $0x69] sm:$0xff]
        %v4374 = vld [vmem:[%s1113 + $0x79] sm:$0xff]
        %v4375 = vld [vmem:[%s1113 + $0x81] sm:$0xff]
        %v4376 = vld [vmem:[%s1113 + $0x91] sm:$0xff]
        %v4377 = vld [vmem:[%s1113 + $0x99] sm:$0xff]
        %v4378 = vld [vmem:[%s1113 + $0xa9] sm:$0xff]
        %v4379 = vld [vmem:[%s1113 + $0xb1] sm:$0xff]
        %v4380 = vld [vmem:[%s1113 + $0xc1] sm:$0xff]
        %v4381 = vld [vmem:[%s1113 + $0xc9] sm:$0xff]
        %v4382 = vld [vmem:[%s1113 + $0xd9] sm:$0xff]
        %v4383 = vld [vmem:[%s1113 + $0xe1] sm:$0xff]
        %v4384 = vld [vmem:[%s1113 + $0xf1] sm:$0xff]
        %v4385 = vld [vmem:[%s1113 + $0xf9] sm:$0xff]
        %v4386 = vld [vmem:[%s1113 + $0x109] sm:$0xff]
        %v4387 = vld [vmem:[%s1113 + $0x111] sm:$0xff]
        %v4388 = vld [vmem:[%s1113 + $0x121] sm:$0xff]
        %v4389 = vld [vmem:[%s1113 + $0x129] sm:$0xff]
        %v4390 = vld [vmem:[%s1113 + $0x139] sm:$0xff]
        %v4391 = vld [vmem:[%s1113 + $0x141] sm:$0xff]
        %v4392 = vld [vmem:[%s1113 + $0x151] sm:$0xff]
        %v4393 = vld [vmem:[%s1113 + $0x159] sm:$0xff]
        %v4394 = vld [vmem:[%s1113 + $0x169] sm:$0xff]
        %v4395 = vld [vmem:[%s1113 + $0x171] sm:$0xff]
        %4396 = vst.msk [vmem:[#allocation3 + $0x8] sm:$0xff] %vm427, %v4364
        %4397 = vst.msk [vmem:[#allocation3 + $0x20] sm:$0xff] %vm427, %v4365
        %4398 = vst.msk [vmem:[#allocation3 + $0x38] sm:$0xff] %vm427, %v4366
        %4399 = vst.msk [vmem:[#allocation3 + $0x50] sm:$0xff] %vm427, %v4367
        %4400 = vst.msk [vmem:[#allocation3 + $0x68] sm:$0xff] %vm427, %v4368
        %4401 = vst.msk [vmem:[#allocation3 + $0x80] sm:$0xff] %vm427, %v4369
        %4402 = vst.msk [vmem:[#allocation3 + $0x98] sm:$0xff] %vm427, %v4370
        %4403 = vst.msk [vmem:[#allocation3 + $0xb0] sm:$0xff] %vm427, %v4371
        %4404 = vst.msk [vmem:[#allocation3 + $0xc8] sm:$0xff] %vm427, %v4372
        %4405 = vst.msk [vmem:[#allocation3 + $0xe0] sm:$0xff] %vm427, %v4373
        %4406 = vst.msk [vmem:[#allocation3 + $0xf8] sm:$0xff] %vm427, %v4374
        %4407 = vst.msk [vmem:[#allocation3 + $0x110] sm:$0xff] %vm427, %v4375
        %4408 = vst.msk [vmem:[#allocation3 + $0x128] sm:$0xff] %vm427, %v4376
        %4409 = vst.msk [vmem:[#allocation3 + $0x140] sm:$0xff] %vm427, %v4377
        %4410 = vst.msk [vmem:[#allocation3 + $0x158] sm:$0xff] %vm427, %v4378
        %4411 = vst.msk [vmem:[#allocation3 + $0x170] sm:$0xff] %vm427, %v4379
        %4412 = vst.msk [vmem:[#allocation3 + $0x188] sm:$0xff] %vm427, %v4380
        %4413 = vst.msk [vmem:[#allocation3 + $0x1a0] sm:$0xff] %vm427, %v4381
        %4414 = vst.msk [vmem:[#allocation3 + $0x1b8] sm:$0xff] %vm427, %v4382
        %4415 = vst.msk [vmem:[#allocation3 + $0x1d0] sm:$0xff] %vm427, %v4383
        %4416 = vst.msk [vmem:[#allocation3 + $0x1e8] sm:$0xff] %vm427, %v4384
        %4417 = vst.msk [vmem:[#allocation3 + $0x200] sm:$0xff] %vm427, %v4385
        %4418 = vst.msk [vmem:[#allocation3 + $0x218] sm:$0xff] %vm427, %v4386
        %4419 = vst.msk [vmem:[#allocation3 + $0x230] sm:$0xff] %vm427, %v4387
        %4420 = vst.msk [vmem:[#allocation3 + $0x248] sm:$0xff] %vm427, %v4388
        %4421 = vst.msk [vmem:[#allocation3 + $0x260] sm:$0xff] %vm427, %v4389
        %4422 = vst.msk [vmem:[#allocation3 + $0x278] sm:$0xff] %vm427, %v4390
        %4423 = vst.msk [vmem:[#allocation3 + $0x290] sm:$0xff] %vm427, %v4391
        %4424 = vst.msk [vmem:[#allocation3 + $0x2a8] sm:$0xff] %vm427, %v4392
        %4425 = vst.msk [vmem:[#allocation3 + $0x2c0] sm:$0xff] %vm427, %v4393
        %4426 = vst.msk [vmem:[#allocation3 + $0x2d8] sm:$0xff] %vm427, %v4394
        %4427 = vst.msk [vmem:[#allocation3 + $0x2f0] sm:$0xff] %vm427, %v4395
        %v4428 = vld [vmem:[%s1113 + $0x2] sm:$0xff]
        %v4429 = vld [vmem:[%s1113 + $0xa] sm:$0xff]
        %v4430 = vld [vmem:[%s1113 + $0x1a] sm:$0xff]
        %v4431 = vld [vmem:[%s1113 + $0x22] sm:$0xff]
        %v4432 = vld [vmem:[%s1113 + $0x32] sm:$0xff]
        %v4433 = vld [vmem:[%s1113 + $0x3a] sm:$0xff]
        %v4434 = vld [vmem:[%s1113 + $0x4a] sm:$0xff]
        %v4435 = vld [vmem:[%s1113 + $0x52] sm:$0xff]
        %v4436 = vld [vmem:[%s1113 + $0x62] sm:$0xff]
        %v4437 = vld [vmem:[%s1113 + $0x6a] sm:$0xff]
        %v4438 = vld [vmem:[%s1113 + $0x7a] sm:$0xff]
        %v4439 = vld [vmem:[%s1113 + $0x82] sm:$0xff]
        %v4440 = vld [vmem:[%s1113 + $0x92] sm:$0xff]
        %v4441 = vld [vmem:[%s1113 + $0x9a] sm:$0xff]
        %v4442 = vld [vmem:[%s1113 + $0xaa] sm:$0xff]
        %v4443 = vld [vmem:[%s1113 + $0xb2] sm:$0xff]
        %v4444 = vld [vmem:[%s1113 + $0xc2] sm:$0xff]
        %v4445 = vld [vmem:[%s1113 + $0xca] sm:$0xff]
        %v4446 = vld [vmem:[%s1113 + $0xda] sm:$0xff]
        %v4447 = vld [vmem:[%s1113 + $0xe2] sm:$0xff]
        %v4448 = vld [vmem:[%s1113 + $0xf2] sm:$0xff]
        %v4449 = vld [vmem:[%s1113 + $0xfa] sm:$0xff]
        %v4450 = vld [vmem:[%s1113 + $0x10a] sm:$0xff]
        %v4451 = vld [vmem:[%s1113 + $0x112] sm:$0xff]
        %v4452 = vld [vmem:[%s1113 + $0x122] sm:$0xff]
        %v4453 = vld [vmem:[%s1113 + $0x12a] sm:$0xff]
        %v4454 = vld [vmem:[%s1113 + $0x13a] sm:$0xff]
        %v4455 = vld [vmem:[%s1113 + $0x142] sm:$0xff]
        %v4456 = vld [vmem:[%s1113 + $0x152] sm:$0xff]
        %v4457 = vld [vmem:[%s1113 + $0x15a] sm:$0xff]
        %v4458 = vld [vmem:[%s1113 + $0x16a] sm:$0xff]
        %v4459 = vld [vmem:[%s1113 + $0x172] sm:$0xff]
        %4492 = vrot.lane.b32.xlu0 %v4428, 32
        %v4493 = vpop.permute.xlu0 %4492
        %4494 = vrot.lane.b32.xlu0 %v4429, 32
        %v4495 = vpop.permute.xlu0 %4494
        %4496 = vrot.lane.b32.xlu0 %v4430, 32
        %v4497 = vpop.permute.xlu0 %4496
        %4498 = vrot.lane.b32.xlu0 %v4431, 32
        %v4499 = vpop.permute.xlu0 %4498
        %4500 = vrot.lane.b32.xlu0 %v4432, 32
        %v4501 = vpop.permute.xlu0 %4500
        %4502 = vrot.lane.b32.xlu0 %v4433, 32
        %v4503 = vpop.permute.xlu0 %4502
        %4504 = vrot.lane.b32.xlu0 %v4434, 32
        %v4505 = vpop.permute.xlu0 %4504
        %4506 = vrot.lane.b32.xlu0 %v4435, 32
        %v4507 = vpop.permute.xlu0 %4506
        %4508 = vrot.lane.b32.xlu0 %v4436, 32
        %v4509 = vpop.permute.xlu0 %4508
        %4510 = vrot.lane.b32.xlu0 %v4437, 32
        %v4511 = vpop.permute.xlu0 %4510
        %4512 = vrot.lane.b32.xlu0 %v4438, 32
        %v4513 = vpop.permute.xlu0 %4512
        %4514 = vrot.lane.b32.xlu0 %v4439, 32
        %v4515 = vpop.permute.xlu0 %4514
        %4516 = vrot.lane.b32.xlu0 %v4440, 32
        %v4517 = vpop.permute.xlu0 %4516
        %4518 = vrot.lane.b32.xlu0 %v4441, 32
        %v4519 = vpop.permute.xlu0 %4518
        %4520 = vrot.lane.b32.xlu0 %v4442, 32
        %v4521 = vpop.permute.xlu0 %4520
        %4522 = vrot.lane.b32.xlu0 %v4443, 32
        %v4523 = vpop.permute.xlu0 %4522
        %4524 = vrot.lane.b32.xlu0 %v4444, 32
        %v4525 = vpop.permute.xlu0 %4524
        %4526 = vrot.lane.b32.xlu0 %v4445, 32
        %v4527 = vpop.permute.xlu0 %4526
        %4528 = vrot.lane.b32.xlu0 %v4446, 32
        %v4529 = vpop.permute.xlu0 %4528
        %4530 = vrot.lane.b32.xlu0 %v4447, 32
        %v4531 = vpop.permute.xlu0 %4530
        %4532 = vrot.lane.b32.xlu0 %v4448, 32
        %v4533 = vpop.permute.xlu0 %4532
        %4534 = vrot.lane.b32.xlu0 %v4449, 32
        %v4535 = vpop.permute.xlu0 %4534
        %4536 = vrot.lane.b32.xlu0 %v4450, 32
        %v4537 = vpop.permute.xlu0 %4536
        %4538 = vrot.lane.b32.xlu0 %v4451, 32
        %v4539 = vpop.permute.xlu0 %4538
        %4540 = vrot.lane.b32.xlu0 %v4452, 32
        %v4541 = vpop.permute.xlu0 %4540
        %4542 = vrot.lane.b32.xlu0 %v4453, 32
        %v4543 = vpop.permute.xlu0 %4542
        %4544 = vrot.lane.b32.xlu0 %v4454, 32
        %v4545 = vpop.permute.xlu0 %4544
        %4546 = vrot.lane.b32.xlu0 %v4455, 32
        %v4547 = vpop.permute.xlu0 %4546
        %4548 = vrot.lane.b32.xlu0 %v4456, 32
        %v4549 = vpop.permute.xlu0 %4548
        %4550 = vrot.lane.b32.xlu0 %v4457, 32
        %v4551 = vpop.permute.xlu0 %4550
        %4552 = vrot.lane.b32.xlu0 %v4458, 32
        %v4553 = vpop.permute.xlu0 %4552
        %4554 = vrot.lane.b32.xlu0 %v4459, 32
        %v4555 = vpop.permute.xlu0 %4554
        %4588 = vst.msk [vmem:[#allocation3 + $0x8] sm:$0xff] %vm1370, %v4493
        %4589 = vst.msk [vmem:[#allocation3 + $0x20] sm:$0xff] %vm1370, %v4495
        %4590 = vst.msk [vmem:[#allocation3 + $0x38] sm:$0xff] %vm1370, %v4497
        %4591 = vst.msk [vmem:[#allocation3 + $0x50] sm:$0xff] %vm1370, %v4499
        %4592 = vst.msk [vmem:[#allocation3 + $0x68] sm:$0xff] %vm1370, %v4501
        %4593 = vst.msk [vmem:[#allocation3 + $0x80] sm:$0xff] %vm1370, %v4503
        %4594 = vst.msk [vmem:[#allocation3 + $0x98] sm:$0xff] %vm1370, %v4505
        %4595 = vst.msk [vmem:[#allocation3 + $0xb0] sm:$0xff] %vm1370, %v4507
        %4596 = vst.msk [vmem:[#allocation3 + $0xc8] sm:$0xff] %vm1370, %v4509
        %4597 = vst.msk [vmem:[#allocation3 + $0xe0] sm:$0xff] %vm1370, %v4511
        %4598 = vst.msk [vmem:[#allocation3 + $0xf8] sm:$0xff] %vm1370, %v4513
        %4599 = vst.msk [vmem:[#allocation3 + $0x110] sm:$0xff] %vm1370, %v4515
        %4600 = vst.msk [vmem:[#allocation3 + $0x128] sm:$0xff] %vm1370, %v4517
        %4601 = vst.msk [vmem:[#allocation3 + $0x140] sm:$0xff] %vm1370, %v4519
        %4602 = vst.msk [vmem:[#allocation3 + $0x158] sm:$0xff] %vm1370, %v4521
        %4603 = vst.msk [vmem:[#allocation3 + $0x170] sm:$0xff] %vm1370, %v4523
        %4604 = vst.msk [vmem:[#allocation3 + $0x188] sm:$0xff] %vm1370, %v4525
        %4605 = vst.msk [vmem:[#allocation3 + $0x1a0] sm:$0xff] %vm1370, %v4527
        %4606 = vst.msk [vmem:[#allocation3 + $0x1b8] sm:$0xff] %vm1370, %v4529
        %4607 = vst.msk [vmem:[#allocation3 + $0x1d0] sm:$0xff] %vm1370, %v4531
        %4608 = vst.msk [vmem:[#allocation3 + $0x1e8] sm:$0xff] %vm1370, %v4533
        %4609 = vst.msk [vmem:[#allocation3 + $0x200] sm:$0xff] %vm1370, %v4535
        %4610 = vst.msk [vmem:[#allocation3 + $0x218] sm:$0xff] %vm1370, %v4537
        %4611 = vst.msk [vmem:[#allocation3 + $0x230] sm:$0xff] %vm1370, %v4539
        %4612 = vst.msk [vmem:[#allocation3 + $0x248] sm:$0xff] %vm1370, %v4541
        %4613 = vst.msk [vmem:[#allocation3 + $0x260] sm:$0xff] %vm1370, %v4543
        %4614 = vst.msk [vmem:[#allocation3 + $0x278] sm:$0xff] %vm1370, %v4545
        %4615 = vst.msk [vmem:[#allocation3 + $0x290] sm:$0xff] %vm1370, %v4547
        %4616 = vst.msk [vmem:[#allocation3 + $0x2a8] sm:$0xff] %vm1370, %v4549
        %4617 = vst.msk [vmem:[#allocation3 + $0x2c0] sm:$0xff] %vm1370, %v4551
        %4618 = vst.msk [vmem:[#allocation3 + $0x2d8] sm:$0xff] %vm1370, %v4553
        %4619 = vst.msk [vmem:[#allocation3 + $0x2f0] sm:$0xff] %vm1370, %v4555
        %v4620 = vld [vmem:[%s2045] sm:$0xff]
        %v4621 = vld [vmem:[%s2045 + $0x8] sm:$0xff]
        %v4622 = vld [vmem:[%s2045 + $0x18] sm:$0xff]
        %v4623 = vld [vmem:[%s2045 + $0x20] sm:$0xff]
        %v4624 = vld [vmem:[%s2045 + $0x30] sm:$0xff]
        %v4625 = vld [vmem:[%s2045 + $0x38] sm:$0xff]
        %v4626 = vld [vmem:[%s2045 + $0x48] sm:$0xff]
        %v4627 = vld [vmem:[%s2045 + $0x50] sm:$0xff]
        %v4628 = vld [vmem:[%s2045 + $0x60] sm:$0xff]
        %v4629 = vld [vmem:[%s2045 + $0x68] sm:$0xff]
        %v4630 = vld [vmem:[%s2045 + $0x78] sm:$0xff]
        %v4631 = vld [vmem:[%s2045 + $0x80] sm:$0xff]
        %v4632 = vld [vmem:[%s2045 + $0x90] sm:$0xff]
        %v4633 = vld [vmem:[%s2045 + $0x98] sm:$0xff]
        %v4634 = vld [vmem:[%s2045 + $0xa8] sm:$0xff]
        %v4635 = vld [vmem:[%s2045 + $0xb0] sm:$0xff]
        %v4636 = vld [vmem:[%s2045 + $0xc0] sm:$0xff]
        %v4637 = vld [vmem:[%s2045 + $0xc8] sm:$0xff]
        %v4638 = vld [vmem:[%s2045 + $0xd8] sm:$0xff]
        %v4639 = vld [vmem:[%s2045 + $0xe0] sm:$0xff]
        %v4640 = vld [vmem:[%s2045 + $0xf0] sm:$0xff]
        %v4641 = vld [vmem:[%s2045 + $0xf8] sm:$0xff]
        %v4642 = vld [vmem:[%s2045 + $0x108] sm:$0xff]
        %v4643 = vld [vmem:[%s2045 + $0x110] sm:$0xff]
        %v4644 = vld [vmem:[%s2045 + $0x120] sm:$0xff]
        %v4645 = vld [vmem:[%s2045 + $0x128] sm:$0xff]
        %v4646 = vld [vmem:[%s2045 + $0x138] sm:$0xff]
        %v4647 = vld [vmem:[%s2045 + $0x140] sm:$0xff]
        %v4648 = vld [vmem:[%s2045 + $0x150] sm:$0xff]
        %v4649 = vld [vmem:[%s2045 + $0x158] sm:$0xff]
        %v4650 = vld [vmem:[%s2045 + $0x168] sm:$0xff]
        %v4651 = vld [vmem:[%s2045 + $0x170] sm:$0xff]
        %4684 = vrot.lane.b32.xlu0 %v4620, 64
        %v4685 = vpop.permute.xlu0 %4684
        %4686 = vrot.lane.b32.xlu0 %v4621, 64
        %v4687 = vpop.permute.xlu0 %4686
        %4688 = vrot.lane.b32.xlu0 %v4622, 64
        %v4689 = vpop.permute.xlu0 %4688
        %4690 = vrot.lane.b32.xlu0 %v4623, 64
        %v4691 = vpop.permute.xlu0 %4690
        %4692 = vrot.lane.b32.xlu0 %v4624, 64
        %v4693 = vpop.permute.xlu0 %4692
        %4694 = vrot.lane.b32.xlu0 %v4625, 64
        %v4695 = vpop.permute.xlu0 %4694
        %4696 = vrot.lane.b32.xlu0 %v4626, 64
        %v4697 = vpop.permute.xlu0 %4696
        %4698 = vrot.lane.b32.xlu0 %v4627, 64
        %v4699 = vpop.permute.xlu0 %4698
        %4700 = vrot.lane.b32.xlu0 %v4628, 64
        %v4701 = vpop.permute.xlu0 %4700
        %4702 = vrot.lane.b32.xlu0 %v4629, 64
        %v4703 = vpop.permute.xlu0 %4702
        %4704 = vrot.lane.b32.xlu0 %v4630, 64
        %v4705 = vpop.permute.xlu0 %4704
        %4706 = vrot.lane.b32.xlu0 %v4631, 64
        %v4707 = vpop.permute.xlu0 %4706
        %4708 = vrot.lane.b32.xlu0 %v4632, 64
        %v4709 = vpop.permute.xlu0 %4708
        %4710 = vrot.lane.b32.xlu0 %v4633, 64
        %v4711 = vpop.permute.xlu0 %4710
        %4712 = vrot.lane.b32.xlu0 %v4634, 64
        %v4713 = vpop.permute.xlu0 %4712
        %4714 = vrot.lane.b32.xlu0 %v4635, 64
        %v4715 = vpop.permute.xlu0 %4714
        %4716 = vrot.lane.b32.xlu0 %v4636, 64
        %v4717 = vpop.permute.xlu0 %4716
        %4718 = vrot.lane.b32.xlu0 %v4637, 64
        %v4719 = vpop.permute.xlu0 %4718
        %4720 = vrot.lane.b32.xlu0 %v4638, 64
        %v4721 = vpop.permute.xlu0 %4720
        %4722 = vrot.lane.b32.xlu0 %v4639, 64
        %v4723 = vpop.permute.xlu0 %4722
        %4724 = vrot.lane.b32.xlu0 %v4640, 64
        %v4725 = vpop.permute.xlu0 %4724
        %4726 = vrot.lane.b32.xlu0 %v4641, 64
        %v4727 = vpop.permute.xlu0 %4726
        %4728 = vrot.lane.b32.xlu0 %v4642, 64
        %v4729 = vpop.permute.xlu0 %4728
        %4730 = vrot.lane.b32.xlu0 %v4643, 64
        %v4731 = vpop.permute.xlu0 %4730
        %4732 = vrot.lane.b32.xlu0 %v4644, 64
        %v4733 = vpop.permute.xlu0 %4732
        %4734 = vrot.lane.b32.xlu0 %v4645, 64
        %v4735 = vpop.permute.xlu0 %4734
        %4736 = vrot.lane.b32.xlu0 %v4646, 64
        %v4737 = vpop.permute.xlu0 %4736
        %4738 = vrot.lane.b32.xlu0 %v4647, 64
        %v4739 = vpop.permute.xlu0 %4738
        %4740 = vrot.lane.b32.xlu0 %v4648, 64
        %v4741 = vpop.permute.xlu0 %4740
        %4742 = vrot.lane.b32.xlu0 %v4649, 64
        %v4743 = vpop.permute.xlu0 %4742
        %4744 = vrot.lane.b32.xlu0 %v4650, 64
        %v4745 = vpop.permute.xlu0 %4744
        %4746 = vrot.lane.b32.xlu0 %v4651, 64
        %v4747 = vpop.permute.xlu0 %4746
        %4780 = vst.msk [vmem:[#allocation3 + $0x8] sm:$0xff] %vm1563, %v4685
        %4781 = vst.msk [vmem:[#allocation3 + $0x20] sm:$0xff] %vm1563, %v4687
        %4782 = vst.msk [vmem:[#allocation3 + $0x38] sm:$0xff] %vm1563, %v4689
        %4783 = vst.msk [vmem:[#allocation3 + $0x50] sm:$0xff] %vm1563, %v4691
        %4784 = vst.msk [vmem:[#allocation3 + $0x68] sm:$0xff] %vm1563, %v4693
        %4785 = vst.msk [vmem:[#allocation3 + $0x80] sm:$0xff] %vm1563, %v4695
        %4786 = vst.msk [vmem:[#allocation3 + $0x98] sm:$0xff] %vm1563, %v4697
        %4787 = vst.msk [vmem:[#allocation3 + $0xb0] sm:$0xff] %vm1563, %v4699
        %4788 = vst.msk [vmem:[#allocation3 + $0xc8] sm:$0xff] %vm1563, %v4701
        %4789 = vst.msk [vmem:[#allocation3 + $0xe0] sm:$0xff] %vm1563, %v4703
        %4790 = vst.msk [vmem:[#allocation3 + $0xf8] sm:$0xff] %vm1563, %v4705
        %4791 = vst.msk [vmem:[#allocation3 + $0x110] sm:$0xff] %vm1563, %v4707
        %4792 = vst.msk [vmem:[#allocation3 + $0x128] sm:$0xff] %vm1563, %v4709
        %4793 = vst.msk [vmem:[#allocation3 + $0x140] sm:$0xff] %vm1563, %v4711
        %4794 = vst.msk [vmem:[#allocation3 + $0x158] sm:$0xff] %vm1563, %v4713
        %4795 = vst.msk [vmem:[#allocation3 + $0x170] sm:$0xff] %vm1563, %v4715
        %4796 = vst.msk [vmem:[#allocation3 + $0x188] sm:$0xff] %vm1563, %v4717
        %4797 = vst.msk [vmem:[#allocation3 + $0x1a0] sm:$0xff] %vm1563, %v4719
        %4798 = vst.msk [vmem:[#allocation3 + $0x1b8] sm:$0xff] %vm1563, %v4721
        %4799 = vst.msk [vmem:[#allocation3 + $0x1d0] sm:$0xff] %vm1563, %v4723
        %4800 = vst.msk [vmem:[#allocation3 + $0x1e8] sm:$0xff] %vm1563, %v4725
        %4801 = vst.msk [vmem:[#allocation3 + $0x200] sm:$0xff] %vm1563, %v4727
        %4802 = vst.msk [vmem:[#allocation3 + $0x218] sm:$0xff] %vm1563, %v4729
        %4803 = vst.msk [vmem:[#allocation3 + $0x230] sm:$0xff] %vm1563, %v4731
        %4804 = vst.msk [vmem:[#allocation3 + $0x248] sm:$0xff] %vm1563, %v4733
        %4805 = vst.msk [vmem:[#allocation3 + $0x260] sm:$0xff] %vm1563, %v4735
        %4806 = vst.msk [vmem:[#allocation3 + $0x278] sm:$0xff] %vm1563, %v4737
        %4807 = vst.msk [vmem:[#allocation3 + $0x290] sm:$0xff] %vm1563, %v4739
        %4808 = vst.msk [vmem:[#allocation3 + $0x2a8] sm:$0xff] %vm1563, %v4741
        %4809 = vst.msk [vmem:[#allocation3 + $0x2c0] sm:$0xff] %vm1563, %v4743
        %4810 = vst.msk [vmem:[#allocation3 + $0x2d8] sm:$0xff] %vm1563, %v4745
        %4811 = vst.msk [vmem:[#allocation3 + $0x2f0] sm:$0xff] %vm1563, %v4747
        %v4812 = vld [vmem:[%s2045 + $0x1] sm:$0xff]
        %v4813 = vld [vmem:[%s2045 + $0x9] sm:$0xff]
        %v4814 = vld [vmem:[%s2045 + $0x19] sm:$0xff]
        %v4815 = vld [vmem:[%s2045 + $0x21] sm:$0xff]
        %v4816 = vld [vmem:[%s2045 + $0x31] sm:$0xff]
        %v4817 = vld [vmem:[%s2045 + $0x39] sm:$0xff]
        %v4818 = vld [vmem:[%s2045 + $0x49] sm:$0xff]
        %v4819 = vld [vmem:[%s2045 + $0x51] sm:$0xff]
        %v4820 = vld [vmem:[%s2045 + $0x61] sm:$0xff]
        %v4821 = vld [vmem:[%s2045 + $0x69] sm:$0xff]
        %v4822 = vld [vmem:[%s2045 + $0x79] sm:$0xff]
        %v4823 = vld [vmem:[%s2045 + $0x81] sm:$0xff]
        %v4824 = vld [vmem:[%s2045 + $0x91] sm:$0xff]
        %v4825 = vld [vmem:[%s2045 + $0x99] sm:$0xff]
        %v4826 = vld [vmem:[%s2045 + $0xa9] sm:$0xff]
        %v4827 = vld [vmem:[%s2045 + $0xb1] sm:$0xff]
        %v4828 = vld [vmem:[%s2045 + $0xc1] sm:$0xff]
        %v4829 = vld [vmem:[%s2045 + $0xc9] sm:$0xff]
        %v4830 = vld [vmem:[%s2045 + $0xd9] sm:$0xff]
        %v4831 = vld [vmem:[%s2045 + $0xe1] sm:$0xff]
        %v4832 = vld [vmem:[%s2045 + $0xf1] sm:$0xff]
        %v4833 = vld [vmem:[%s2045 + $0xf9] sm:$0xff]
        %v4834 = vld [vmem:[%s2045 + $0x109] sm:$0xff]
        %v4835 = vld [vmem:[%s2045 + $0x111] sm:$0xff]
        %v4836 = vld [vmem:[%s2045 + $0x121] sm:$0xff]
        %v4837 = vld [vmem:[%s2045 + $0x129] sm:$0xff]
        %v4838 = vld [vmem:[%s2045 + $0x139] sm:$0xff]
        %v4839 = vld [vmem:[%s2045 + $0x141] sm:$0xff]
        %v4840 = vld [vmem:[%s2045 + $0x151] sm:$0xff]
        %v4841 = vld [vmem:[%s2045 + $0x159] sm:$0xff]
        %v4842 = vld [vmem:[%s2045 + $0x169] sm:$0xff]
        %v4843 = vld [vmem:[%s2045 + $0x171] sm:$0xff]
        %4876 = vrot.lane.b32.xlu0 %v4812, 96
        %v4877 = vpop.permute.xlu0 %4876
        %4878 = vrot.lane.b32.xlu0 %v4813, 96
        %v4879 = vpop.permute.xlu0 %4878
        %4880 = vrot.lane.b32.xlu0 %v4814, 96
        %v4881 = vpop.permute.xlu0 %4880
        %4882 = vrot.lane.b32.xlu0 %v4815, 96
        %v4883 = vpop.permute.xlu0 %4882
        %4884 = vrot.lane.b32.xlu0 %v4816, 96
        %v4885 = vpop.permute.xlu0 %4884
        %4886 = vrot.lane.b32.xlu0 %v4817, 96
        %v4887 = vpop.permute.xlu0 %4886
        %4888 = vrot.lane.b32.xlu0 %v4818, 96
        %v4889 = vpop.permute.xlu0 %4888
        %4890 = vrot.lane.b32.xlu0 %v4819, 96
        %v4891 = vpop.permute.xlu0 %4890
        %4892 = vrot.lane.b32.xlu0 %v4820, 96
        %v4893 = vpop.permute.xlu0 %4892
        %4894 = vrot.lane.b32.xlu0 %v4821, 96
        %v4895 = vpop.permute.xlu0 %4894
        %4896 = vrot.lane.b32.xlu0 %v4822, 96
        %v4897 = vpop.permute.xlu0 %4896
        %4898 = vrot.lane.b32.xlu0 %v4823, 96
        %v4899 = vpop.permute.xlu0 %4898
        %4900 = vrot.lane.b32.xlu0 %v4824, 96
        %v4901 = vpop.permute.xlu0 %4900
        %4902 = vrot.lane.b32.xlu0 %v4825, 96
        %v4903 = vpop.permute.xlu0 %4902
        %4904 = vrot.lane.b32.xlu0 %v4826, 96
        %v4905 = vpop.permute.xlu0 %4904
        %4906 = vrot.lane.b32.xlu0 %v4827, 96
        %v4907 = vpop.permute.xlu0 %4906
        %4908 = vrot.lane.b32.xlu0 %v4828, 96
        %v4909 = vpop.permute.xlu0 %4908
        %4910 = vrot.lane.b32.xlu0 %v4829, 96
        %v4911 = vpop.permute.xlu0 %4910
        %4912 = vrot.lane.b32.xlu0 %v4830, 96
        %v4913 = vpop.permute.xlu0 %4912
        %4914 = vrot.lane.b32.xlu0 %v4831, 96
        %v4915 = vpop.permute.xlu0 %4914
        %4916 = vrot.lane.b32.xlu0 %v4832, 96
        %v4917 = vpop.permute.xlu0 %4916
        %4918 = vrot.lane.b32.xlu0 %v4833, 96
        %v4919 = vpop.permute.xlu0 %4918
        %4920 = vrot.lane.b32.xlu0 %v4834, 96
        %v4921 = vpop.permute.xlu0 %4920
        %4922 = vrot.lane.b32.xlu0 %v4835, 96
        %v4923 = vpop.permute.xlu0 %4922
        %4924 = vrot.lane.b32.xlu0 %v4836, 96
        %v4925 = vpop.permute.xlu0 %4924
        %4926 = vrot.lane.b32.xlu0 %v4837, 96
        %v4927 = vpop.permute.xlu0 %4926
        %4928 = vrot.lane.b32.xlu0 %v4838, 96
        %v4929 = vpop.permute.xlu0 %4928
        %4930 = vrot.lane.b32.xlu0 %v4839, 96
        %v4931 = vpop.permute.xlu0 %4930
        %4932 = vrot.lane.b32.xlu0 %v4840, 96
        %v4933 = vpop.permute.xlu0 %4932
        %4934 = vrot.lane.b32.xlu0 %v4841, 96
        %v4935 = vpop.permute.xlu0 %4934
        %4936 = vrot.lane.b32.xlu0 %v4842, 96
        %v4937 = vpop.permute.xlu0 %4936
        %4938 = vrot.lane.b32.xlu0 %v4843, 96
        %v4939 = vpop.permute.xlu0 %4938
        %4972 = vst.msk [vmem:[#allocation3 + $0x8] sm:$0xff] %vm1756, %v4877
        %4973 = vst.msk [vmem:[#allocation3 + $0x20] sm:$0xff] %vm1756, %v4879
        %4974 = vst.msk [vmem:[#allocation3 + $0x38] sm:$0xff] %vm1756, %v4881
        %4975 = vst.msk [vmem:[#allocation3 + $0x50] sm:$0xff] %vm1756, %v4883
        %4976 = vst.msk [vmem:[#allocation3 + $0x68] sm:$0xff] %vm1756, %v4885
        %4977 = vst.msk [vmem:[#allocation3 + $0x80] sm:$0xff] %vm1756, %v4887
        %4978 = vst.msk [vmem:[#allocation3 + $0x98] sm:$0xff] %vm1756, %v4889
        %4979 = vst.msk [vmem:[#allocation3 + $0xb0] sm:$0xff] %vm1756, %v4891
        %4980 = vst.msk [vmem:[#allocation3 + $0xc8] sm:$0xff] %vm1756, %v4893
        %4981 = vst.msk [vmem:[#allocation3 + $0xe0] sm:$0xff] %vm1756, %v4895
        %4982 = vst.msk [vmem:[#allocation3 + $0xf8] sm:$0xff] %vm1756, %v4897
        %4983 = vst.msk [vmem:[#allocation3 + $0x110] sm:$0xff] %vm1756, %v4899
        %4984 = vst.msk [vmem:[#allocation3 + $0x128] sm:$0xff] %vm1756, %v4901
        %4985 = vst.msk [vmem:[#allocation3 + $0x140] sm:$0xff] %vm1756, %v4903
        %4986 = vst.msk [vmem:[#allocation3 + $0x158] sm:$0xff] %vm1756, %v4905
        %4987 = vst.msk [vmem:[#allocation3 + $0x170] sm:$0xff] %vm1756, %v4907
        %4988 = vst.msk [vmem:[#allocation3 + $0x188] sm:$0xff] %vm1756, %v4909
        %4989 = vst.msk [vmem:[#allocation3 + $0x1a0] sm:$0xff] %vm1756, %v4911
        %4990 = vst.msk [vmem:[#allocation3 + $0x1b8] sm:$0xff] %vm1756, %v4913
        %4991 = vst.msk [vmem:[#allocation3 + $0x1d0] sm:$0xff] %vm1756, %v4915
        %4992 = vst.msk [vmem:[#allocation3 + $0x1e8] sm:$0xff] %vm1756, %v4917
        %4993 = vst.msk [vmem:[#allocation3 + $0x200] sm:$0xff] %vm1756, %v4919
        %4994 = vst.msk [vmem:[#allocation3 + $0x218] sm:$0xff] %vm1756, %v4921
        %4995 = vst.msk [vmem:[#allocation3 + $0x230] sm:$0xff] %vm1756, %v4923
        %4996 = vst.msk [vmem:[#allocation3 + $0x248] sm:$0xff] %vm1756, %v4925
        %4997 = vst.msk [vmem:[#allocation3 + $0x260] sm:$0xff] %vm1756, %v4927
        %4998 = vst.msk [vmem:[#allocation3 + $0x278] sm:$0xff] %vm1756, %v4929
        %4999 = vst.msk [vmem:[#allocation3 + $0x290] sm:$0xff] %vm1756, %v4931
        %5000 = vst.msk [vmem:[#allocation3 + $0x2a8] sm:$0xff] %vm1756, %v4933
        %5001 = vst.msk [vmem:[#allocation3 + $0x2c0] sm:$0xff] %vm1756, %v4935
        %5002 = vst.msk [vmem:[#allocation3 + $0x2d8] sm:$0xff] %vm1756, %v4937
        %5003 = vst.msk [vmem:[#allocation3 + $0x2f0] sm:$0xff] %vm1756, %v4939
        %v5004 = vld [vmem:[%s2045 + $0x2] sm:$0xff]
        %v5005 = vld [vmem:[%s2045 + $0xa] sm:$0xff]
        %v5006 = vld [vmem:[%s2045 + $0x1a] sm:$0xff]
        %v5007 = vld [vmem:[%s2045 + $0x22] sm:$0xff]
        %v5008 = vld [vmem:[%s2045 + $0x32] sm:$0xff]
        %v5009 = vld [vmem:[%s2045 + $0x3a] sm:$0xff]
        %v5010 = vld [vmem:[%s2045 + $0x4a] sm:$0xff]
        %v5011 = vld [vmem:[%s2045 + $0x52] sm:$0xff]
        %v5012 = vld [vmem:[%s2045 + $0x62] sm:$0xff]
        %v5013 = vld [vmem:[%s2045 + $0x6a] sm:$0xff]
        %v5014 = vld [vmem:[%s2045 + $0x7a] sm:$0xff]
        %v5015 = vld [vmem:[%s2045 + $0x82] sm:$0xff]
        %v5016 = vld [vmem:[%s2045 + $0x92] sm:$0xff]
        %v5017 = vld [vmem:[%s2045 + $0x9a] sm:$0xff]
        %v5018 = vld [vmem:[%s2045 + $0xaa] sm:$0xff]
        %v5019 = vld [vmem:[%s2045 + $0xb2] sm:$0xff]
        %v5020 = vld [vmem:[%s2045 + $0xc2] sm:$0xff]
        %v5021 = vld [vmem:[%s2045 + $0xca] sm:$0xff]
        %v5022 = vld [vmem:[%s2045 + $0xda] sm:$0xff]
        %v5023 = vld [vmem:[%s2045 + $0xe2] sm:$0xff]
        %v5024 = vld [vmem:[%s2045 + $0xf2] sm:$0xff]
        %v5025 = vld [vmem:[%s2045 + $0xfa] sm:$0xff]
        %v5026 = vld [vmem:[%s2045 + $0x10a] sm:$0xff]
        %v5027 = vld [vmem:[%s2045 + $0x112] sm:$0xff]
        %v5028 = vld [vmem:[%s2045 + $0x122] sm:$0xff]
        %v5029 = vld [vmem:[%s2045 + $0x12a] sm:$0xff]
        %v5030 = vld [vmem:[%s2045 + $0x13a] sm:$0xff]
        %v5031 = vld [vmem:[%s2045 + $0x142] sm:$0xff]
        %v5032 = vld [vmem:[%s2045 + $0x152] sm:$0xff]
        %v5033 = vld [vmem:[%s2045 + $0x15a] sm:$0xff]
        %v5034 = vld [vmem:[%s2045 + $0x16a] sm:$0xff]
        %v5035 = vld [vmem:[%s2045 + $0x172] sm:$0xff]
        %5036 = vst.msk [vmem:[#allocation3 + $0x10] sm:$0xff] %vm427, %v5004
        %5037 = vst.msk [vmem:[#allocation3 + $0x28] sm:$0xff] %vm427, %v5005
        %5038 = vst.msk [vmem:[#allocation3 + $0x40] sm:$0xff] %vm427, %v5006
        %5039 = vst.msk [vmem:[#allocation3 + $0x58] sm:$0xff] %vm427, %v5007
        %5040 = vst.msk [vmem:[#allocation3 + $0x70] sm:$0xff] %vm427, %v5008
        %5041 = vst.msk [vmem:[#allocation3 + $0x88] sm:$0xff] %vm427, %v5009
        %5042 = vst.msk [vmem:[#allocation3 + $0xa0] sm:$0xff] %vm427, %v5010
        %5043 = vst.msk [vmem:[#allocation3 + $0xb8] sm:$0xff] %vm427, %v5011
        %5044 = vst.msk [vmem:[#allocation3 + $0xd0] sm:$0xff] %vm427, %v5012
        %5045 = vst.msk [vmem:[#allocation3 + $0xe8] sm:$0xff] %vm427, %v5013
        %5046 = vst.msk [vmem:[#allocation3 + $0x100] sm:$0xff] %vm427, %v5014
        %5047 = vst.msk [vmem:[#allocation3 + $0x118] sm:$0xff] %vm427, %v5015
        %5048 = vst.msk [vmem:[#allocation3 + $0x130] sm:$0xff] %vm427, %v5016
        %5049 = vst.msk [vmem:[#allocation3 + $0x148] sm:$0xff] %vm427, %v5017
        %5050 = vst.msk [vmem:[#allocation3 + $0x160] sm:$0xff] %vm427, %v5018
        %5051 = vst.msk [vmem:[#allocation3 + $0x178] sm:$0xff] %vm427, %v5019
        %5052 = vst.msk [vmem:[#allocation3 + $0x190] sm:$0xff] %vm427, %v5020
        %5053 = vst.msk [vmem:[#allocation3 + $0x1a8] sm:$0xff] %vm427, %v5021
        %5054 = vst.msk [vmem:[#allocation3 + $0x1c0] sm:$0xff] %vm427, %v5022
        %5055 = vst.msk [vmem:[#allocation3 + $0x1d8] sm:$0xff] %vm427, %v5023
        %5056 = vst.msk [vmem:[#allocation3 + $0x1f0] sm:$0xff] %vm427, %v5024
        %5057 = vst.msk [vmem:[#allocation3 + $0x208] sm:$0xff] %vm427, %v5025
        %5058 = vst.msk [vmem:[#allocation3 + $0x220] sm:$0xff] %vm427, %v5026
        %5059 = vst.msk [vmem:[#allocation3 + $0x238] sm:$0xff] %vm427, %v5027
        %5060 = vst.msk [vmem:[#allocation3 + $0x250] sm:$0xff] %vm427, %v5028
        %5061 = vst.msk [vmem:[#allocation3 + $0x268] sm:$0xff] %vm427, %v5029
        %5062 = vst.msk [vmem:[#allocation3 + $0x280] sm:$0xff] %vm427, %v5030
        %5063 = vst.msk [vmem:[#allocation3 + $0x298] sm:$0xff] %vm427, %v5031
        %5064 = vst.msk [vmem:[#allocation3 + $0x2b0] sm:$0xff] %vm427, %v5032
        %5065 = vst.msk [vmem:[#allocation3 + $0x2c8] sm:$0xff] %vm427, %v5033
        %5066 = vst.msk [vmem:[#allocation3 + $0x2e0] sm:$0xff] %vm427, %v5034
        %5067 = vst.msk [vmem:[#allocation3 + $0x2f8] sm:$0xff] %vm427, %v5035
        %v5068 = vld [vmem:[#allocation3] sm:$0xff]
        %v5069 = vld [vmem:[#allocation3 + $0x8] sm:$0xff]
        %v5070 = vld [vmem:[#allocation3 + $0x10] sm:$0xff]
        %v5071 = vld [vmem:[#allocation3 + $0x18] sm:$0xff]
        %v5072 = vld [vmem:[#allocation3 + $0x20] sm:$0xff]
        %v5073 = vld [vmem:[#allocation3 + $0x28] sm:$0xff]
        %v5074 = vld [vmem:[#allocation3 + $0x30] sm:$0xff]
        %v5075 = vld [vmem:[#allocation3 + $0x38] sm:$0xff]
        %v5076 = vld [vmem:[#allocation3 + $0x40] sm:$0xff]
        %v5077 = vld [vmem:[#allocation3 + $0x48] sm:$0xff]
        %v5078 = vld [vmem:[#allocation3 + $0x50] sm:$0xff]
        %v5079 = vld [vmem:[#allocation3 + $0x58] sm:$0xff]
        %v5080 = vld [vmem:[#allocation3 + $0x60] sm:$0xff]
        %v5081 = vld [vmem:[#allocation3 + $0x68] sm:$0xff]
        %v5082 = vld [vmem:[#allocation3 + $0x70] sm:$0xff]
        %v5083 = vld [vmem:[#allocation3 + $0x78] sm:$0xff]
        %v5084 = vld [vmem:[#allocation3 + $0x80] sm:$0xff]
        %v5085 = vld [vmem:[#allocation3 + $0x88] sm:$0xff]
        %v5086 = vld [vmem:[#allocation3 + $0x90] sm:$0xff]
        %v5087 = vld [vmem:[#allocation3 + $0x98] sm:$0xff]
        %v5088 = vld [vmem:[#allocation3 + $0xa0] sm:$0xff]
        %v5089 = vld [vmem:[#allocation3 + $0xa8] sm:$0xff]
        %v5090 = vld [vmem:[#allocation3 + $0xb0] sm:$0xff]
        %v5091 = vld [vmem:[#allocation3 + $0xb8] sm:$0xff]
        %v5092 = vld [vmem:[#allocation3 + $0xc0] sm:$0xff]
        %v5093 = vld [vmem:[#allocation3 + $0xc8] sm:$0xff]
        %v5094 = vld [vmem:[#allocation3 + $0xd0] sm:$0xff]
        %v5095 = vld [vmem:[#allocation3 + $0xd8] sm:$0xff]
        %v5096 = vld [vmem:[#allocation3 + $0xe0] sm:$0xff]
        %v5097 = vld [vmem:[#allocation3 + $0xe8] sm:$0xff]
        %v5098 = vld [vmem:[#allocation3 + $0xf0] sm:$0xff]
        %v5099 = vld [vmem:[#allocation3 + $0xf8] sm:$0xff]
        %v5100 = vld [vmem:[#allocation3 + $0x100] sm:$0xff]
        %v5101 = vld [vmem:[#allocation3 + $0x108] sm:$0xff]
        %v5102 = vld [vmem:[#allocation3 + $0x110] sm:$0xff]
        %v5103 = vld [vmem:[#allocation3 + $0x118] sm:$0xff]
        %v5104 = vld [vmem:[#allocation3 + $0x120] sm:$0xff]
        %v5105 = vld [vmem:[#allocation3 + $0x128] sm:$0xff]
        %v5106 = vld [vmem:[#allocation3 + $0x130] sm:$0xff]
        %v5107 = vld [vmem:[#allocation3 + $0x138] sm:$0xff]
        %v5108 = vld [vmem:[#allocation3 + $0x140] sm:$0xff]
        %v5109 = vld [vmem:[#allocation3 + $0x148] sm:$0xff]
        %v5110 = vld [vmem:[#allocation3 + $0x150] sm:$0xff]
        %v5111 = vld [vmem:[#allocation3 + $0x158] sm:$0xff]
        %v5112 = vld [vmem:[#allocation3 + $0x160] sm:$0xff]
        %v5113 = vld [vmem:[#allocation3 + $0x168] sm:$0xff]
        %v5114 = vld [vmem:[#allocation3 + $0x170] sm:$0xff]
        %v5115 = vld [vmem:[#allocation3 + $0x178] sm:$0xff]
        %v5116 = vld [vmem:[#allocation3 + $0x180] sm:$0xff]
        %v5117 = vld [vmem:[#allocation3 + $0x188] sm:$0xff]
        %v5118 = vld [vmem:[#allocation3 + $0x190] sm:$0xff]
        %v5119 = vld [vmem:[#allocation3 + $0x198] sm:$0xff]
        %v5120 = vld [vmem:[#allocation3 + $0x1a0] sm:$0xff]
        %v5121 = vld [vmem:[#allocation3 + $0x1a8] sm:$0xff]
        %v5122 = vld [vmem:[#allocation3 + $0x1b0] sm:$0xff]
        %v5123 = vld [vmem:[#allocation3 + $0x1b8] sm:$0xff]
        %v5124 = vld [vmem:[#allocation3 + $0x1c0] sm:$0xff]
        %v5125 = vld [vmem:[#allocation3 + $0x1c8] sm:$0xff]
        %v5126 = vld [vmem:[#allocation3 + $0x1d0] sm:$0xff]
        %v5127 = vld [vmem:[#allocation3 + $0x1d8] sm:$0xff]
        %v5128 = vld [vmem:[#allocation3 + $0x1e0] sm:$0xff]
        %v5129 = vld [vmem:[#allocation3 + $0x1e8] sm:$0xff]
        %v5130 = vld [vmem:[#allocation3 + $0x1f0] sm:$0xff]
        %v5131 = vld [vmem:[#allocation3 + $0x1f8] sm:$0xff]
        %v5132 = vld [vmem:[#allocation3 + $0x200] sm:$0xff]
        %v5133 = vld [vmem:[#allocation3 + $0x208] sm:$0xff]
        %v5134 = vld [vmem:[#allocation3 + $0x210] sm:$0xff]
        %v5135 = vld [vmem:[#allocation3 + $0x218] sm:$0xff]
        %v5136 = vld [vmem:[#allocation3 + $0x220] sm:$0xff]
        %v5137 = vld [vmem:[#allocation3 + $0x228] sm:$0xff]
        %v5138 = vld [vmem:[#allocation3 + $0x230] sm:$0xff]
        %v5139 = vld [vmem:[#allocation3 + $0x238] sm:$0xff]
        %v5140 = vld [vmem:[#allocation3 + $0x240] sm:$0xff]
        %v5141 = vld [vmem:[#allocation3 + $0x248] sm:$0xff]
        %v5142 = vld [vmem:[#allocation3 + $0x250] sm:$0xff]
        %v5143 = vld [vmem:[#allocation3 + $0x258] sm:$0xff]
        %v5144 = vld [vmem:[#allocation3 + $0x260] sm:$0xff]
        %v5145 = vld [vmem:[#allocation3 + $0x268] sm:$0xff]
        %v5146 = vld [vmem:[#allocation3 + $0x270] sm:$0xff]
        %v5147 = vld [vmem:[#allocation3 + $0x278] sm:$0xff]
        %v5148 = vld [vmem:[#allocation3 + $0x280] sm:$0xff]
        %v5149 = vld [vmem:[#allocation3 + $0x288] sm:$0xff]
        %v5150 = vld [vmem:[#allocation3 + $0x290] sm:$0xff]
        %v5151 = vld [vmem:[#allocation3 + $0x298] sm:$0xff]
        %v5152 = vld [vmem:[#allocation3 + $0x2a0] sm:$0xff]
        %v5153 = vld [vmem:[#allocation3 + $0x2a8] sm:$0xff]
        %v5154 = vld [vmem:[#allocation3 + $0x2b0] sm:$0xff]
        %v5155 = vld [vmem:[#allocation3 + $0x2b8] sm:$0xff]
        %v5156 = vld [vmem:[#allocation3 + $0x2c0] sm:$0xff]
        %v5157 = vld [vmem:[#allocation3 + $0x2c8] sm:$0xff]
        %v5158 = vld [vmem:[#allocation3 + $0x2d0] sm:$0xff]
        %v5159 = vld [vmem:[#allocation3 + $0x2d8] sm:$0xff]
        %v5160 = vld [vmem:[#allocation3 + $0x2e0] sm:$0xff]
        %v5161 = vld [vmem:[#allocation3 + $0x2e8] sm:$0xff]
        %v5162 = vld [vmem:[#allocation3 + $0x2f0] sm:$0xff]
        %v5163 = vld [vmem:[#allocation3 + $0x2f8] sm:$0xff]
        %v5164 = vpack.c.bf16 %v5071, %v5068
        %v5165 = vpack.c.bf16 %v5072, %v5069
        %v5166 = vpack.c.bf16 %v5073, %v5070
        %v5167 = vpack.c.bf16 %v5077, %v5074
        %v5168 = vpack.c.bf16 %v5078, %v5075
        %v5169 = vpack.c.bf16 %v5079, %v5076
        %v5170 = vpack.c.bf16 %v5083, %v5080
        %v5171 = vpack.c.bf16 %v5084, %v5081
        %v5172 = vpack.c.bf16 %v5085, %v5082
        %v5173 = vpack.c.bf16 %v5089, %v5086
        %v5174 = vpack.c.bf16 %v5090, %v5087
        %v5175 = vpack.c.bf16 %v5091, %v5088
        %v5176 = vpack.c.bf16 %v5095, %v5092
        %v5177 = vpack.c.bf16 %v5096, %v5093
        %v5178 = vpack.c.bf16 %v5097, %v5094
        %v5179 = vpack.c.bf16 %v5101, %v5098
        %v5180 = vpack.c.bf16 %v5102, %v5099
        %v5181 = vpack.c.bf16 %v5103, %v5100
        %v5182 = vpack.c.bf16 %v5107, %v5104
        %v5183 = vpack.c.bf16 %v5108, %v5105
        %v5184 = vpack.c.bf16 %v5109, %v5106
        %v5185 = vpack.c.bf16 %v5113, %v5110
        %v5186 = vpack.c.bf16 %v5114, %v5111
        %v5187 = vpack.c.bf16 %v5115, %v5112
        %v5188 = vpack.c.bf16 %v5119, %v5116
        %v5189 = vpack.c.bf16 %v5120, %v5117
        %v5190 = vpack.c.bf16 %v5121, %v5118
        %v5191 = vpack.c.bf16 %v5125, %v5122
        %v5192 = vpack.c.bf16 %v5126, %v5123
        %v5193 = vpack.c.bf16 %v5127, %v5124
        %v5194 = vpack.c.bf16 %v5131, %v5128
        %v5195 = vpack.c.bf16 %v5132, %v5129
        %v5196 = vpack.c.bf16 %v5133, %v5130
        %v5197 = vpack.c.bf16 %v5137, %v5134
        %v5198 = vpack.c.bf16 %v5138, %v5135
        %v5199 = vpack.c.bf16 %v5139, %v5136
        %v5200 = vpack.c.bf16 %v5143, %v5140
        %v5201 = vpack.c.bf16 %v5144, %v5141
        %v5202 = vpack.c.bf16 %v5145, %v5142
        %v5203 = vpack.c.bf16 %v5149, %v5146
        %v5204 = vpack.c.bf16 %v5150, %v5147
        %v5205 = vpack.c.bf16 %v5151, %v5148
        %v5206 = vpack.c.bf16 %v5155, %v5152
        %v5207 = vpack.c.bf16 %v5156, %v5153
        %v5208 = vpack.c.bf16 %v5157, %v5154
        %v5209 = vpack.c.bf16 %v5161, %v5158
        %v5210 = vpack.c.bf16 %v5162, %v5159
        %v5211 = vpack.c.bf16 %v5163, %v5160
        %v5212 = vld [vmem:[%s10] sm:$0xf]
        %v5213 = vld [vmem:[%s10 + $0x4] sm:$0xf]
        %v5214 = vld [vmem:[%s10 + $0x8] sm:$0xf]
        %v5215 = vld [vmem:[%s10 + $0xc] sm:$0xf]
        %v5216 = vld [vmem:[%s10 + $0x10] sm:$0xf]
        %v5217 = vld [vmem:[%s10 + $0x14] sm:$0xf]
        %v5218 = vld [vmem:[%s10 + $0x18] sm:$0xf]
        %v5219 = vld [vmem:[%s10 + $0x1c] sm:$0xf]
        %v5220 = vld [vmem:[%s10 + $0x20] sm:$0xf]
        %v5221 = vld [vmem:[%s10 + $0x24] sm:$0xf]
        %v5222 = vld [vmem:[%s10 + $0x28] sm:$0xf]
        %v5223 = vld [vmem:[%s10 + $0x2c] sm:$0xf]
        %v5224 = vld [vmem:[%s10 + $0x30] sm:$0xf]
        %v5225 = vld [vmem:[%s10 + $0x34] sm:$0xf]
        %v5226 = vld [vmem:[%s10 + $0x38] sm:$0xf]
        %v5227 = vld [vmem:[%s10 + $0x3c] sm:$0xf]
        %v5228 = vld [vmem:[%s10 + $0x40] sm:$0xf]
        %v5229 = vld [vmem:[%s10 + $0x44] sm:$0xf]
        %v5230 = vld [vmem:[%s10 + $0x48] sm:$0xf]
        %v5231 = vld [vmem:[%s10 + $0x4c] sm:$0xf]
        %v5232 = vld [vmem:[%s10 + $0x50] sm:$0xf]
        %v5233 = vld [vmem:[%s10 + $0x54] sm:$0xf]
        %v5234 = vld [vmem:[%s10 + $0x58] sm:$0xf]
        %v5235 = vld [vmem:[%s10 + $0x5c] sm:$0xf]
        %v5236 = vld [vmem:[%s10 + $0x60] sm:$0xf]
        %v5237 = vld [vmem:[%s10 + $0x64] sm:$0xf]
        %v5238 = vld [vmem:[%s10 + $0x68] sm:$0xf]
        %v5239 = vld [vmem:[%s10 + $0x6c] sm:$0xf]
        %v5240 = vld [vmem:[%s10 + $0x70] sm:$0xf]
        %v5241 = vld [vmem:[%s10 + $0x74] sm:$0xf]
        %v5242 = vld [vmem:[%s10 + $0x78] sm:$0xf]
        %v5243 = vld [vmem:[%s10 + $0x7c] sm:$0xf]
        %v5244 = vld [vmem:[%s10 + $0x80] sm:$0xf]
        %v5245 = vld [vmem:[%s10 + $0x84] sm:$0xf]
        %v5246 = vld [vmem:[%s10 + $0x88] sm:$0xf]
        %v5247 = vld [vmem:[%s10 + $0x8c] sm:$0xf]
        %v5248 = vld [vmem:[%s11] sm:$0x1]
        %v5250 = vlaneseq
        %v5251 = vshrl.u32 %v5250, 7
        %v5252 = vsub.s32 0, %v5251
        %v5253 = vrot.slane %v5248, %v5252
        %v5291 = vunpack.c.l.b16 %v5212
        %v5292 = vunpack.c.l.b16 %v5213
        %v5293 = vunpack.c.l.b16 %v5214
        %v5294 = vunpack.c.l.b16 %v5215
        %v5295 = vunpack.c.l.b16 %v5216
        %v5296 = vunpack.c.l.b16 %v5217
        %v5297 = vunpack.c.l.b16 %v5218
        %v5298 = vunpack.c.l.b16 %v5219
        %v5299 = vunpack.c.l.b16 %v5220
        %v5300 = vunpack.c.l.b16 %v5221
        %v5301 = vunpack.c.l.b16 %v5222
        %v5302 = vunpack.c.l.b16 %v5223
        %v5303 = vunpack.c.l.b16 %v5224
        %v5304 = vunpack.c.l.b16 %v5225
        %v5305 = vunpack.c.l.b16 %v5226
        %v5306 = vunpack.c.l.b16 %v5227
        %v5307 = vunpack.c.l.b16 %v5228
        %v5308 = vunpack.c.l.b16 %v5229
        %v5309 = vunpack.c.l.b16 %v5230
        %v5310 = vunpack.c.l.b16 %v5231
        %v5311 = vunpack.c.l.b16 %v5232
        %v5312 = vunpack.c.l.b16 %v5233
        %v5313 = vunpack.c.l.b16 %v5234
        %v5314 = vunpack.c.l.b16 %v5235
        %v5315 = vunpack.c.l.b16 %v5236
        %v5316 = vunpack.c.l.b16 %v5237
        %v5317 = vunpack.c.l.b16 %v5238
        %v5318 = vunpack.c.l.b16 %v5239
        %v5319 = vunpack.c.l.b16 %v5240
        %v5320 = vunpack.c.l.b16 %v5241
        %v5321 = vunpack.c.l.b16 %v5242
        %v5322 = vunpack.c.l.b16 %v5243
        %v5323 = vunpack.c.l.b16 %v5244
        %v5324 = vunpack.c.l.b16 %v5245
        %v5325 = vunpack.c.l.b16 %v5246
        %v5326 = vunpack.c.l.b16 %v5247
        %v5327 = vpack.c.b16 %v5292, %v5291
        %v5328 = vpack.c.b16 %v5294, %v5293
        %v5329 = vpack.c.b16 %v5296, %v5295
        %v5330 = vpack.c.b16 %v5298, %v5297
        %v5331 = vpack.c.b16 %v5300, %v5299
        %v5332 = vpack.c.b16 %v5302, %v5301
        %v5333 = vpack.c.b16 %v5304, %v5303
        %v5334 = vpack.c.b16 %v5306, %v5305
        %v5335 = vpack.c.b16 %v5308, %v5307
        %v5336 = vpack.c.b16 %v5310, %v5309
        %v5337 = vpack.c.b16 %v5312, %v5311
        %v5338 = vpack.c.b16 %v5314, %v5313
        %v5339 = vpack.c.b16 %v5316, %v5315
        %v5340 = vpack.c.b16 %v5318, %v5317
        %v5341 = vpack.c.b16 %v5320, %v5319
        %v5342 = vpack.c.b16 %v5322, %v5321
        %v5343 = vpack.c.b16 %v5324, %v5323
        %v5344 = vpack.c.b16 %v5326, %v5325
        %v5364 = vsel %vm427, %v5166, 0
        %v5367 = vsel %vm427, %v5169, 0
        %v5370 = vsel %vm427, %v5172, 0
        %v5373 = vsel %vm427, %v5175, 0
        %v5376 = vsel %vm427, %v5178, 0
        %v5379 = vsel %vm427, %v5181, 0
        %v5382 = vsel %vm427, %v5184, 0
        %v5385 = vsel %vm427, %v5187, 0
        %v5388 = vsel %vm427, %v5190, 0
        %v5391 = vsel %vm427, %v5193, 0
        %v5394 = vsel %vm427, %v5196, 0
        %v5397 = vsel %vm427, %v5199, 0
        %v5400 = vsel %vm427, %v5202, 0
        %v5403 = vsel %vm427, %v5205, 0
        %v5406 = vsel %vm427, %v5208, 0
        %v5409 = vsel %vm427, %v5211, 0
        %5411 = vmatprep.subr.bf16.mxu0 0
        %5412 = vmatpush1.bf16.msra.mxu0 %v5334
        %5413 = vmatprep.subr.bf16.mxu0 0
        %5414 = vmatpush1.bf16.msra.mxu0 %v5333
        %5415 = vmatprep.subr.bf16.mxu0 0
        %5416 = vmatpush1.bf16.msra.mxu0 %v5332
        %5417 = vmatprep.subr.bf16.mxu0 0
        %5418 = vmatpush1.bf16.msra.mxu0 %v5331
        %5419 = vmatprep.subr.bf16.mxu0 0
        %5420 = vmatpush1.bf16.msra.mxu0 %v5330
        %5421 = vmatprep.subr.bf16.mxu0 0
        %5422 = vmatpush1.bf16.msra.mxu0 %v5329
        %5423 = vmatprep.subr.bf16.mxu0 0
        %5424 = vmatpush1.bf16.msra.mxu0 %v5328
        %5425 = vmatprep.subr.bf16.mxu0 0
        %5426 = vmatpush1.bf16.msra.mxu0 %v5327
        %5427 = vmatprep.subr.bf16.mxu0 0
        %5428 = vmatpush2.bf16.msra.mxu0 %v5342
        %5429 = vmatprep.subr.bf16.mxu0 0
        %5430 = vmatpush2.bf16.msra.mxu0 %v5341
        %5431 = vmatprep.subr.bf16.mxu0 0
        %5432 = vmatpush2.bf16.msra.mxu0 %v5340
        %5433 = vmatprep.subr.bf16.mxu0 0
        %5434 = vmatpush2.bf16.msra.mxu0 %v5339
        %5435 = vmatprep.subr.bf16.mxu0 0
        %5436 = vmatpush2.bf16.msra.mxu0 %v5338
        %5437 = vmatprep.subr.bf16.mxu0 0
        %5438 = vmatpush2.bf16.msra.mxu0 %v5337
        %5439 = vmatprep.subr.bf16.mxu0 0
        %5440 = vmatpush2.bf16.msra.mxu0 %v5336
        %5441 = vmatprep.subr.bf16.mxu0 0
        %5442 = vmatpush2.bf16.msra.mxu0 %v5335
        %5443 = vmatprep.mubr.bf16.mxu0 %v5165
        %5444 = vmatmul.mubr.bf16.gmra.mxu0 %v5164
        %v5445 = vpop.f32.mrf.mxu0
        %v5446 = vadd.f32 %v5253, %v5445
        %v5447 = vpop.f32.mrf.mxu0
        %v5448 = vpop.f32.mrf.mxu0
        %v5449 = vadd.f32 %v5253, %v5448
        %v5450 = vpop.f32.mrf.mxu0
        %5451 = vmatprep.mubr.bf16.mxu0 %v5168
        %5452 = vmatmul.mubr.bf16.gmra.mxu0 %v5167
        %v5453 = vpop.f32.mrf.mxu0
        %v5454 = vadd.f32 %v5253, %v5453
        %v5455 = vpop.f32.mrf.mxu0
        %v5456 = vpop.f32.mrf.mxu0
        %v5457 = vadd.f32 %v5253, %v5456
        %v5458 = vpop.f32.mrf.mxu0
        %5459 = vmatprep.mubr.bf16.mxu0 %v5171
        %5460 = vmatmul.mubr.bf16.gmra.mxu0 %v5170
        %v5461 = vpop.f32.mrf.mxu0
        %v5462 = vadd.f32 %v5253, %v5461
        %v5463 = vpop.f32.mrf.mxu0
        %v5464 = vpop.f32.mrf.mxu0
        %v5465 = vadd.f32 %v5253, %v5464
        %v5466 = vpop.f32.mrf.mxu0
        %5467 = vmatprep.mubr.bf16.mxu0 %v5174
        %5468 = vmatmul.mubr.bf16.gmra.mxu0 %v5173
        %v5469 = vpop.f32.mrf.mxu0
        %v5470 = vadd.f32 %v5253, %v5469
        %v5471 = vpop.f32.mrf.mxu0
        %v5472 = vpop.f32.mrf.mxu0
        %v5473 = vadd.f32 %v5253, %v5472
        %v5474 = vpop.f32.mrf.mxu0
        %5475 = vmatprep.mubr.bf16.mxu0 %v5177
        %5476 = vmatmul.mubr.bf16.gmra.mxu0 %v5176
        %v5477 = vpop.f32.mrf.mxu0
        %v5478 = vadd.f32 %v5253, %v5477
        %v5479 = vpop.f32.mrf.mxu0
        %v5480 = vpop.f32.mrf.mxu0
        %v5481 = vadd.f32 %v5253, %v5480
        %v5482 = vpop.f32.mrf.mxu0
        %5483 = vmatprep.mubr.bf16.mxu0 %v5180
        %5484 = vmatmul.mubr.bf16.gmra.mxu0 %v5179
        %v5485 = vpop.f32.mrf.mxu0
        %v5486 = vadd.f32 %v5253, %v5485
        %v5487 = vpop.f32.mrf.mxu0
        %v5488 = vpop.f32.mrf.mxu0
        %v5489 = vadd.f32 %v5253, %v5488
        %v5490 = vpop.f32.mrf.mxu0
        %5491 = vmatprep.mubr.bf16.mxu0 %v5183
        %5492 = vmatmul.mubr.bf16.gmra.mxu0 %v5182
        %v5493 = vpop.f32.mrf.mxu0
        %v5494 = vadd.f32 %v5253, %v5493
        %v5495 = vpop.f32.mrf.mxu0
        %v5496 = vpop.f32.mrf.mxu0
        %v5497 = vadd.f32 %v5253, %v5496
        %v5498 = vpop.f32.mrf.mxu0
        %5499 = vmatprep.mubr.bf16.mxu0 %v5186
        %5500 = vmatmul.mubr.bf16.gmra.mxu0 %v5185
        %v5501 = vpop.f32.mrf.mxu0
        %v5502 = vadd.f32 %v5253, %v5501
        %v5503 = vpop.f32.mrf.mxu0
        %v5504 = vpop.f32.mrf.mxu0
        %v5505 = vadd.f32 %v5253, %v5504
        %v5506 = vpop.f32.mrf.mxu0
        %5507 = vmatprep.mubr.bf16.mxu0 %v5189
        %5508 = vmatmul.mubr.bf16.gmra.mxu0 %v5188
        %v5509 = vpop.f32.mrf.mxu0
        %v5510 = vadd.f32 %v5253, %v5509
        %v5511 = vpop.f32.mrf.mxu0
        %v5512 = vpop.f32.mrf.mxu0
        %v5513 = vadd.f32 %v5253, %v5512
        %v5514 = vpop.f32.mrf.mxu0
        %5515 = vmatprep.mubr.bf16.mxu0 %v5192
        %5516 = vmatmul.mubr.bf16.gmra.mxu0 %v5191
        %v5517 = vpop.f32.mrf.mxu0
        %v5518 = vadd.f32 %v5253, %v5517
        %v5519 = vpop.f32.mrf.mxu0
        %v5520 = vpop.f32.mrf.mxu0
        %v5521 = vadd.f32 %v5253, %v5520
        %v5522 = vpop.f32.mrf.mxu0
        %5523 = vmatprep.mubr.bf16.mxu0 %v5195
        %5524 = vmatmul.mubr.bf16.gmra.mxu0 %v5194
        %v5525 = vpop.f32.mrf.mxu0
        %v5526 = vadd.f32 %v5253, %v5525
        %v5527 = vpop.f32.mrf.mxu0
        %v5528 = vpop.f32.mrf.mxu0
        %v5529 = vadd.f32 %v5253, %v5528
        %v5530 = vpop.f32.mrf.mxu0
        %5531 = vmatprep.mubr.bf16.mxu0 %v5198
        %5532 = vmatmul.mubr.bf16.gmra.mxu0 %v5197
        %v5533 = vpop.f32.mrf.mxu0
        %v5534 = vadd.f32 %v5253, %v5533
        %v5535 = vpop.f32.mrf.mxu0
        %v5536 = vpop.f32.mrf.mxu0
        %v5537 = vadd.f32 %v5253, %v5536
        %v5538 = vpop.f32.mrf.mxu0
        %5539 = vmatprep.mubr.bf16.mxu0 %v5201
        %5540 = vmatmul.mubr.bf16.gmra.mxu0 %v5200
        %v5541 = vpop.f32.mrf.mxu0
        %v5542 = vadd.f32 %v5253, %v5541
        %v5543 = vpop.f32.mrf.mxu0
        %v5544 = vpop.f32.mrf.mxu0
        %v5545 = vadd.f32 %v5253, %v5544
        %v5546 = vpop.f32.mrf.mxu0
        %5547 = vmatprep.mubr.bf16.mxu0 %v5204
        %5548 = vmatmul.mubr.bf16.gmra.mxu0 %v5203
        %v5549 = vpop.f32.mrf.mxu0
        %v5550 = vadd.f32 %v5253, %v5549
        %v5551 = vpop.f32.mrf.mxu0
        %v5552 = vpop.f32.mrf.mxu0
        %v5553 = vadd.f32 %v5253, %v5552
        %v5554 = vpop.f32.mrf.mxu0
        %5555 = vmatprep.mubr.bf16.mxu0 %v5207
        %5556 = vmatmul.mubr.bf16.gmra.mxu0 %v5206
        %v5557 = vpop.f32.mrf.mxu0
        %v5558 = vadd.f32 %v5253, %v5557
        %v5559 = vpop.f32.mrf.mxu0
        %v5560 = vpop.f32.mrf.mxu0
        %v5561 = vadd.f32 %v5253, %v5560
        %v5562 = vpop.f32.mrf.mxu0
        %5563 = vmatprep.mubr.bf16.mxu0 %v5210
        %5564 = vmatmul.mubr.bf16.gmra.mxu0 %v5209
        %v5565 = vpop.f32.mrf.mxu0
        %v5566 = vadd.f32 %v5253, %v5565
        %v5567 = vpop.f32.mrf.mxu0
        %v5568 = vpop.f32.mrf.mxu0
        %v5569 = vadd.f32 %v5253, %v5568
        %v5570 = vpop.f32.mrf.mxu0
        %5571 = vdwg.mxu0
        %5572 = vmatprep.subr.bf16.mxu0 0
        %5573 = vmatpush1.bf16.msra.mxu0 0
        %5574 = vmatprep.subr.bf16.mxu0 0
        %5575 = vmatpush1.bf16.msra.mxu0 0
        %5576 = vmatprep.subr.bf16.mxu0 0
        %5577 = vmatpush1.bf16.msra.mxu0 0
        %5578 = vmatprep.subr.bf16.mxu0 0
        %5579 = vmatpush1.bf16.msra.mxu0 0
        %5580 = vmatprep.subr.bf16.mxu0 0
        %5581 = vmatpush1.bf16.msra.mxu0 0
        %5582 = vmatprep.subr.bf16.mxu0 0
        %5583 = vmatpush1.bf16.msra.mxu0 0
        %5584 = vmatprep.subr.bf16.mxu0 0
        %5585 = vmatpush1.bf16.msra.mxu0 %v5344
        %5586 = vmatprep.subr.bf16.mxu0 0
        %5587 = vmatpush1.bf16.msra.mxu0 %v5343
        %5588 = vmatprep.subr.bf16.mxu0 0
        %5589 = vmatpush2.bf16.msra.mxu0 0
        %5590 = vmatprep.subr.bf16.mxu0 0
        %5591 = vmatpush2.bf16.msra.mxu0 0
        %5592 = vmatprep.subr.bf16.mxu0 0
        %5593 = vmatpush2.bf16.msra.mxu0 0
        %5594 = vmatprep.subr.bf16.mxu0 0
        %5595 = vmatpush2.bf16.msra.mxu0 0
        %5596 = vmatprep.subr.bf16.mxu0 0
        %5597 = vmatpush2.bf16.msra.mxu0 0
        %5598 = vmatprep.subr.bf16.mxu0 0
        %5599 = vmatpush2.bf16.msra.mxu0 0
        %5600 = vmatprep.subr.bf16.mxu0 0
        %5601 = vmatpush2.bf16.msra.mxu0 0
        %5602 = vmatprep.subr.bf16.mxu0 0
        %5603 = vmatpush2.bf16.msra.mxu0 0
        %5604 = vmatprep.mubr.bf16.mxu0 0
        %5605 = vmatmul.mubr.bf16.gmra.mxu0 %v5364
        %v5606 = vpop.f32.mrf.mxu0
        %v5607 = vadd.f32 %v5446, %v5606
        %v5608 = vpop.f32.mrf.mxu0
        %v5609 = vpop.f32.mrf.mxu0
        %v5610 = vadd.f32 %v5449, %v5609
        %v5611 = vpop.f32.mrf.mxu0
        %5612 = vmatprep.mubr.bf16.mxu0 0
        %5613 = vmatmul.mubr.bf16.gmra.mxu0 %v5367
        %v5614 = vpop.f32.mrf.mxu0
        %v5615 = vadd.f32 %v5454, %v5614
        %v5616 = vpop.f32.mrf.mxu0
        %v5617 = vpop.f32.mrf.mxu0
        %v5618 = vadd.f32 %v5457, %v5617
        %v5619 = vpop.f32.mrf.mxu0
        %5620 = vmatprep.mubr.bf16.mxu0 0
        %5621 = vmatmul.mubr.bf16.gmra.mxu0 %v5370
        %v5622 = vpop.f32.mrf.mxu0
        %v5623 = vadd.f32 %v5462, %v5622
        %v5624 = vpop.f32.mrf.mxu0
        %v5625 = vpop.f32.mrf.mxu0
        %v5626 = vadd.f32 %v5465, %v5625
        %v5627 = vpop.f32.mrf.mxu0
        %5628 = vmatprep.mubr.bf16.mxu0 0
        %5629 = vmatmul.mubr.bf16.gmra.mxu0 %v5373
        %v5630 = vpop.f32.mrf.mxu0
        %v5631 = vadd.f32 %v5470, %v5630
        %v5632 = vpop.f32.mrf.mxu0
        %v5633 = vpop.f32.mrf.mxu0
        %v5634 = vadd.f32 %v5473, %v5633
        %v5635 = vpop.f32.mrf.mxu0
        %5636 = vmatprep.mubr.bf16.mxu0 0
        %5637 = vmatmul.mubr.bf16.gmra.mxu0 %v5376
        %v5638 = vpop.f32.mrf.mxu0
        %v5639 = vadd.f32 %v5478, %v5638
        %v5640 = vpop.f32.mrf.mxu0
        %v5641 = vpop.f32.mrf.mxu0
        %v5642 = vadd.f32 %v5481, %v5641
        %v5643 = vpop.f32.mrf.mxu0
        %5644 = vmatprep.mubr.bf16.mxu0 0
        %5645 = vmatmul.mubr.bf16.gmra.mxu0 %v5379
        %v5646 = vpop.f32.mrf.mxu0
        %v5647 = vadd.f32 %v5486, %v5646
        %v5648 = vpop.f32.mrf.mxu0
        %v5649 = vpop.f32.mrf.mxu0
        %v5650 = vadd.f32 %v5489, %v5649
        %v5651 = vpop.f32.mrf.mxu0
        %5652 = vmatprep.mubr.bf16.mxu0 0
        %5653 = vmatmul.mubr.bf16.gmra.mxu0 %v5382
        %v5654 = vpop.f32.mrf.mxu0
        %v5655 = vadd.f32 %v5494, %v5654
        %v5656 = vpop.f32.mrf.mxu0
        %v5657 = vpop.f32.mrf.mxu0
        %v5658 = vadd.f32 %v5497, %v5657
        %v5659 = vpop.f32.mrf.mxu0
        %5660 = vmatprep.mubr.bf16.mxu0 0
        %5661 = vmatmul.mubr.bf16.gmra.mxu0 %v5385
        %v5662 = vpop.f32.mrf.mxu0
        %v5663 = vadd.f32 %v5502, %v5662
        %v5664 = vpop.f32.mrf.mxu0
        %v5665 = vpop.f32.mrf.mxu0
        %v5666 = vadd.f32 %v5505, %v5665
        %v5667 = vpop.f32.mrf.mxu0
        %5668 = vmatprep.mubr.bf16.mxu0 0
        %5669 = vmatmul.mubr.bf16.gmra.mxu0 %v5388
        %v5670 = vpop.f32.mrf.mxu0
        %v5671 = vadd.f32 %v5510, %v5670
        %v5672 = vpop.f32.mrf.mxu0
        %v5673 = vpop.f32.mrf.mxu0
        %v5674 = vadd.f32 %v5513, %v5673
        %v5675 = vpop.f32.mrf.mxu0
        %5676 = vmatprep.mubr.bf16.mxu0 0
        %5677 = vmatmul.mubr.bf16.gmra.mxu0 %v5391
        %v5678 = vpop.f32.mrf.mxu0
        %v5679 = vadd.f32 %v5518, %v5678
        %v5680 = vpop.f32.mrf.mxu0
        %v5681 = vpop.f32.mrf.mxu0
        %v5682 = vadd.f32 %v5521, %v5681
        %v5683 = vpop.f32.mrf.mxu0
        %5684 = vmatprep.mubr.bf16.mxu0 0
        %5685 = vmatmul.mubr.bf16.gmra.mxu0 %v5394
        %v5686 = vpop.f32.mrf.mxu0
        %v5687 = vadd.f32 %v5526, %v5686
        %v5688 = vpop.f32.mrf.mxu0
        %v5689 = vpop.f32.mrf.mxu0
        %v5690 = vadd.f32 %v5529, %v5689
        %v5691 = vpop.f32.mrf.mxu0
        %5692 = vmatprep.mubr.bf16.mxu0 0
        %5693 = vmatmul.mubr.bf16.gmra.mxu0 %v5397
        %v5694 = vpop.f32.mrf.mxu0
        %v5695 = vadd.f32 %v5534, %v5694
        %v5696 = vpop.f32.mrf.mxu0
        %v5697 = vpop.f32.mrf.mxu0
        %v5698 = vadd.f32 %v5537, %v5697
        %v5699 = vpop.f32.mrf.mxu0
        %5700 = vmatprep.mubr.bf16.mxu0 0
        %5701 = vmatmul.mubr.bf16.gmra.mxu0 %v5400
        %v5702 = vpop.f32.mrf.mxu0
        %v5703 = vadd.f32 %v5542, %v5702
        %v5704 = vpop.f32.mrf.mxu0
        %v5705 = vpop.f32.mrf.mxu0
        %v5706 = vadd.f32 %v5545, %v5705
        %v5707 = vpop.f32.mrf.mxu0
        %5708 = vmatprep.mubr.bf16.mxu0 0
        %5709 = vmatmul.mubr.bf16.gmra.mxu0 %v5403
        %v5710 = vpop.f32.mrf.mxu0
        %v5711 = vadd.f32 %v5550, %v5710
        %v5712 = vpop.f32.mrf.mxu0
        %v5713 = vpop.f32.mrf.mxu0
        %v5714 = vadd.f32 %v5553, %v5713
        %v5715 = vpop.f32.mrf.mxu0
        %5716 = vmatprep.mubr.bf16.mxu0 0
        %5717 = vmatmul.mubr.bf16.gmra.mxu0 %v5406
        %v5718 = vpop.f32.mrf.mxu0
        %v5719 = vadd.f32 %v5558, %v5718
        %v5720 = vpop.f32.mrf.mxu0
        %v5721 = vpop.f32.mrf.mxu0
        %v5722 = vadd.f32 %v5561, %v5721
        %v5723 = vpop.f32.mrf.mxu0
        %5724 = vmatprep.mubr.bf16.mxu0 0
        %5725 = vmatmul.mubr.bf16.gmra.mxu0 %v5409
        %v5726 = vpop.f32.mrf.mxu0
        %v5727 = vadd.f32 %v5566, %v5726
        %v5728 = vpop.f32.mrf.mxu0
        %v5729 = vpop.f32.mrf.mxu0
        %v5730 = vadd.f32 %v5569, %v5729
        %v5731 = vpop.f32.mrf.mxu0
        %5732 = vdwg.mxu0
        %v5733 = vld [vmem:[%s422] sm:$0xff]
        %v5734 = vld [vmem:[%s422 + $0x8] sm:$0xff]
        %v5735 = vld [vmem:[%s422 + $0x10] sm:$0xff]
        %v5736 = vld [vmem:[%s422 + $0x18] sm:$0xff]
        %v5737 = vld [vmem:[%s422 + $0x20] sm:$0xff]
        %v5738 = vld [vmem:[%s422 + $0x28] sm:$0xff]
        %v5739 = vld [vmem:[%s422 + $0x30] sm:$0xff]
        %v5740 = vld [vmem:[%s422 + $0x38] sm:$0xff]
        %v5741 = vld [vmem:[%s422 + $0x40] sm:$0xff]
        %v5742 = vld [vmem:[%s422 + $0x48] sm:$0xff]
        %v5743 = vld [vmem:[%s422 + $0x50] sm:$0xff]
        %v5744 = vld [vmem:[%s422 + $0x58] sm:$0xff]
        %v5745 = vld [vmem:[%s422 + $0x60] sm:$0xff]
        %v5746 = vld [vmem:[%s422 + $0x68] sm:$0xff]
        %v5747 = vld [vmem:[%s422 + $0x70] sm:$0xff]
        %v5748 = vld [vmem:[%s422 + $0x78] sm:$0xff]
        %v5749 = vld [vmem:[%s422 + $0x80] sm:$0xff]
        %v5750 = vld [vmem:[%s422 + $0x88] sm:$0xff]
        %v5751 = vld [vmem:[%s422 + $0x90] sm:$0xff]
        %v5752 = vld [vmem:[%s422 + $0x98] sm:$0xff]
        %v5753 = vld [vmem:[%s422 + $0xa0] sm:$0xff]
        %v5754 = vld [vmem:[%s422 + $0xa8] sm:$0xff]
        %v5755 = vld [vmem:[%s422 + $0xb0] sm:$0xff]
        %v5756 = vld [vmem:[%s422 + $0xb8] sm:$0xff]
        %v5757 = vld [vmem:[%s422 + $0xc0] sm:$0xff]
        %v5758 = vld [vmem:[%s422 + $0xc8] sm:$0xff]
        %v5759 = vld [vmem:[%s422 + $0xd0] sm:$0xff]
        %v5760 = vld [vmem:[%s422 + $0xd8] sm:$0xff]
        %v5761 = vld [vmem:[%s422 + $0xe0] sm:$0xff]
        %v5762 = vld [vmem:[%s422 + $0xe8] sm:$0xff]
        %v5763 = vld [vmem:[%s422 + $0xf0] sm:$0xff]
        %v5764 = vld [vmem:[%s422 + $0xf8] sm:$0xff]
        %v5765 = vadd.f32 %v5607, %v5733
        %v5766 = vadd.f32 %v5610, %v5734
        %v5767 = vadd.f32 %v5615, %v5735
        %v5768 = vadd.f32 %v5618, %v5736
        %v5769 = vadd.f32 %v5623, %v5737
        %v5770 = vadd.f32 %v5626, %v5738
        %v5771 = vadd.f32 %v5631, %v5739
        %v5772 = vadd.f32 %v5634, %v5740
        %v5773 = vadd.f32 %v5639, %v5741
        %v5774 = vadd.f32 %v5642, %v5742
        %v5775 = vadd.f32 %v5647, %v5743
        %v5776 = vadd.f32 %v5650, %v5744
        %v5777 = vadd.f32 %v5655, %v5745
        %v5778 = vadd.f32 %v5658, %v5746
        %v5779 = vadd.f32 %v5663, %v5747
        %v5780 = vadd.f32 %v5666, %v5748
        %v5781 = vadd.f32 %v5671, %v5749
        %v5782 = vadd.f32 %v5674, %v5750
        %v5783 = vadd.f32 %v5679, %v5751
        %v5784 = vadd.f32 %v5682, %v5752
        %v5785 = vadd.f32 %v5687, %v5753
        %v5786 = vadd.f32 %v5690, %v5754
        %v5787 = vadd.f32 %v5695, %v5755
        %v5788 = vadd.f32 %v5698, %v5756
        %v5789 = vadd.f32 %v5703, %v5757
        %v5790 = vadd.f32 %v5706, %v5758
        %v5791 = vadd.f32 %v5711, %v5759
        %v5792 = vadd.f32 %v5714, %v5760
        %v5793 = vadd.f32 %v5719, %v5761
        %v5794 = vadd.f32 %v5722, %v5762
        %v5795 = vadd.f32 %v5727, %v5763
        %v5796 = vadd.f32 %v5730, %v5764
        %5797 = vst.msk [vmem:[%s417] sm:$0xff] %vm427, %v5765
        %5798 = vst.msk [vmem:[%s417 + $0x8] sm:$0xff] %vm427, %v5766
        %5799 = vst.msk [vmem:[%s417 + $0x10] sm:$0xff] %vm427, %v5767
        %5800 = vst.msk [vmem:[%s417 + $0x18] sm:$0xff] %vm427, %v5768
        %5801 = vst.msk [vmem:[%s417 + $0x20] sm:$0xff] %vm427, %v5769
        %5802 = vst.msk [vmem:[%s417 + $0x28] sm:$0xff] %vm427, %v5770
        %5803 = vst.msk [vmem:[%s417 + $0x30] sm:$0xff] %vm427, %v5771
        %5804 = vst.msk [vmem:[%s417 + $0x38] sm:$0xff] %vm427, %v5772
        %5805 = vst.msk [vmem:[%s417 + $0x40] sm:$0xff] %vm427, %v5773
        %5806 = vst.msk [vmem:[%s417 + $0x48] sm:$0xff] %vm427, %v5774
        %5807 = vst.msk [vmem:[%s417 + $0x50] sm:$0xff] %vm427, %v5775
        %5808 = vst.msk [vmem:[%s417 + $0x58] sm:$0xff] %vm427, %v5776
        %5809 = vst.msk [vmem:[%s417 + $0x60] sm:$0xff] %vm427, %v5777
        %5810 = vst.msk [vmem:[%s417 + $0x68] sm:$0xff] %vm427, %v5778
        %5811 = vst.msk [vmem:[%s417 + $0x70] sm:$0xff] %vm427, %v5779
        %5812 = vst.msk [vmem:[%s417 + $0x78] sm:$0xff] %vm427, %v5780
        %5813 = vst.msk [vmem:[%s417 + $0x80] sm:$0xff] %vm427, %v5781
        %5814 = vst.msk [vmem:[%s417 + $0x88] sm:$0xff] %vm427, %v5782
        %5815 = vst.msk [vmem:[%s417 + $0x90] sm:$0xff] %vm427, %v5783
        %5816 = vst.msk [vmem:[%s417 + $0x98] sm:$0xff] %vm427, %v5784
        %5817 = vst.msk [vmem:[%s417 + $0xa0] sm:$0xff] %vm427, %v5785
        %5818 = vst.msk [vmem:[%s417 + $0xa8] sm:$0xff] %vm427, %v5786
        %5819 = vst.msk [vmem:[%s417 + $0xb0] sm:$0xff] %vm427, %v5787
        %5820 = vst.msk [vmem:[%s417 + $0xb8] sm:$0xff] %vm427, %v5788
        %5821 = vst.msk [vmem:[%s417 + $0xc0] sm:$0xff] %vm427, %v5789
        %5822 = vst.msk [vmem:[%s417 + $0xc8] sm:$0xff] %vm427, %v5790
        %5823 = vst.msk [vmem:[%s417 + $0xd0] sm:$0xff] %vm427, %v5791
        %5824 = vst.msk [vmem:[%s417 + $0xd8] sm:$0xff] %vm427, %v5792
        %5825 = vst.msk [vmem:[%s417 + $0xe0] sm:$0xff] %vm427, %v5793
        %5826 = vst.msk [vmem:[%s417 + $0xe8] sm:$0xff] %vm427, %v5794
        %5827 = vst.msk [vmem:[%s417 + $0xf0] sm:$0xff] %vm427, %v5795
        %5828 = vst.msk [vmem:[%s417 + $0xf8] sm:$0xff] %vm427, %v5796
        %s5829 = sand.u32 %s296, 1
        %s5830 = scalar_lea.sflag [#allocation5], %s5829
        %s5831 = sand.u32 %s296, 1
        %s5832 = smul.addr %s5831, 256
        %s5833 = scalar_lea.vmem [#allocation4], %s5832
        // Predicated region
        $region69: #{residual_block_forward.1} parent=67 // pred_check
          %p5834 = pneg %p306
        $region70: #{residual_block_forward.1} parent=67 // pred_check_branch
          %5836 = sbr.rel (%p5834) target = $region72
        $region71: #{residual_block_forward.1} parent=67 // pred_region
          %s5838 = ssub.s32 4096, 4096
          %5839 = vsyncadd %s5830, %s5838
          %s5840 = smul.addr %s26, 32
          %s5841 = smul.addr %s5840, 128
          %s5842 = scalar_lea.hbm %s12, %s5841
          %s5843 = sshll.u32 %s5833, 4
          %s5844 = int_to_ptr.vmem [resolvable:$true] %s5843
          %5849 = dma.vmem_to_hbm [thread:$0]  %s5844, 4096, %s5842, %s5830, 128, 128, 8
        $region72: #{residual_block_forward.1} parent=67 // pred_fallthru
          _
      $region68: #{residual_block_forward.1} parent=5 // pred_fallthru
        _
      %p5850 = scmp.le.s32.totalorder 2, %s21
      // Predicated region
      $region73: #{residual_block_forward.1} parent=5 // pred_check
        %p5851 = pneg %p5850
      $region74: #{residual_block_forward.1} parent=5 // pred_check_branch
        %5853 = sbr.rel (%p5851) target = $region76
      $region75: #{residual_block_forward.1} parent=5 // pred_region
        %s5854 = ssub.s32 %s21, 2
        // Predicated region
        $region77: #{residual_block_forward.1} parent=75 // pred_check
          %p5855 = pneg %p312
        $region78: #{residual_block_forward.1} parent=75 // pred_check_branch
          %5857 = sbr.rel (%p5855) target = $region80
        $region79: #{residual_block_forward.1} parent=75 // pred_region
          %s5858 = sand.u32 %s297, 1
          %s5859 = scalar_lea.sflag [#allocation5], %s5858
          %s5860 = sand.u32 %s297, 1
          %s5861 = smul.addr %s5860, 256
          %s5862 = scalar_lea.vmem [#allocation4], %s5861
          %5863 = dma.done %s5859, 4096
        $region80: #{residual_block_forward.1} parent=75 // pred_fallthru
          _
      $region76: #{residual_block_forward.1} parent=5 // pred_fallthru
        _
    $region6: #{residual_block_forward.1} parent=1 // loop_footer
      %s25 = sadd.s32 1, %s21
    $region7: #{residual_block_forward.1} parent=1 // loop_footer_branch
      %20 = sbr.rel target = $region3
    $region8: #{residual_block_forward.1} parent=1 // loop_exit
      _
    %5864 = vsyncpa [#allocation5], 1
    %s5865 = scalar_lea.sflag [#allocation5], 1
    %5866 = vsyncpa %s5865, 1

</llo_original>
